<compile_context>
chip_gen: v5e
topology: v5e:2x2
jax: 0.10.0
libtpu: 0.0.40
codegen_flags: <defaults>
</compile_context>

<pallas_src>
import numpy as np
import jax
import jax.numpy as jnp
from jax.experimental import pallas as pl
from jax.experimental.pallas import tpu as pltpu


# --------------------------------------------------------------------------
# Fused kernel: one grid step = one batch element x one tile of output rows.
# --------------------------------------------------------------------------
def _fused_up2x_kernel(x_ref, r_ref, u_ref, w1_ref, b1_ref, w3_ref, b3_ref, o_ref):
    """
    x_ref : (1, Cin, H+2, W)   VMEM  full (row-zero-padded) input image of batch n
    r_ref : (TOH+2, TIH+2)     VMEM  0/1 row upsample+pad selection matrix
    u_ref : (W, OW+2)          VMEM  0/1 col upsample+pad selection matrix
    w1_ref: (Cout, Cin)        SMEM  1x1 conv weights
    b1_ref: (Cout,)            SMEM  1x1 conv bias
    w3_ref: (Cout*Cout, 9)     SMEM  3x3 conv weights, row = co*Cout+ci, col = kh*3+kw
    b3_ref: (Cout,)            SMEM  3x3 conv bias
    o_ref : (1, Cout, TOH, OW) VMEM  output tile (NCHW)
    """
    t = pl.program_id(1)

    Cin = x_ref.shape[1]
    H = x_ref.shape[2] - 2
    W = x_ref.shape[3]
    Cout = o_ref.shape[1]
    TOH = o_ref.shape[2]
    OW = o_ref.shape[3]
    TIN = r_ref.shape[1]          # TIH + 2 (1-row halo on each side)
    TIH = TIN - 2

    start = t * TIH               # first padded-input row this tile needs
    if TIH % 8 == 0:
        start = pl.multiple_of(start, 8)

    # Which of the TIN loaded rows are real image rows (vs. the global top/bottom
    # zero padding of the 3x3 conv)?  The 1x1 conv of a zero row is `bias`, not 0,
    # so the mask is applied *after* the squeeze.
    row_g = jax.lax.broadcasted_iota(jnp.int32, (TIN, 1), 0) + (t * TIH - 1)
    row_valid = jnp.logical_and(row_g >= 0, row_g < H)

    r_mat = r_ref[...]
    u_mat = u_ref[...]

    # ---- squeeze (1x1 conv, unrolled VPU FMAs) + nearest upsample + zero pad ----
    # The two jnp.dot calls with constant 0/1 matrices realize nearest-neighbor
    # upsampling plus the 3x3 conv's zero border on the MXU.
    up = []
    for co in range(Cout):
        plane = jnp.zeros((TIN, W), jnp.float32)
        for ci in range(Cin):
            plane = plane + w1_ref[co, ci] * x_ref[0, ci, pl.ds(start, TIN), :]
        plane = plane + b1_ref[co]
        plane = jnp.where(row_valid, plane, 0.0)
        rows = jnp.dot(r_mat, plane, preferred_element_type=jnp.float32)      # (TOH+2, W)
        up.append(jnp.dot(rows, u_mat, preferred_element_type=jnp.float32))   # (TOH+2, OW+2)

    # ---- smooth (3x3 conv; padding already materialized in `up`), VPU FMAs ----
    acc = [jnp.zeros((TOH, OW), jnp.float32) for _ in range(Cout)]
    for ci in range(Cout):
        u_pad = up[ci]
        for kh in range(3):
            for kw in range(3):
                win = u_pad[kh:kh + TOH, kw:kw + OW]     # one window shared by all co
                for co in range(Cout):
                    acc[co] = acc[co] + w3_ref[co * Cout + ci, kh * 3 + kw] * win
    for co in range(Cout):
        o_ref[0, co, :, :] = (acc[co] + b3_ref[co]).astype(o_ref.dtype)


# --------------------------------------------------------------------------
# Wrapper helpers
# --------------------------------------------------------------------------
def _pick_row_tile(OH, OW, Cout, budget_bytes=8 * 1024 * 1024):
    """Largest output-row tile that divides OH, is a multiple of 8 (sublane rule),
    keeps per-step f32 intermediates well under a conservative VMEM budget (sized
    for v7x's 64 MiB VMEM with double-buffered I/O on top), and leaves >1 grid step
    per image for pipelining / megacore."""
    for cand in (128, 64, 32, 16, 8):
        if cand >= OH or OH % cand != 0:
            continue
        interm = 4 * Cout * ((cand + 2) * (OW + 2) + cand * OW)
        if interm <= budget_bytes:
            return cand
    return OH


def _build_row_matrix(TOH, TIH, H, OH):
    """0/1 matrix mapping the TIH+2 loaded input rows of a tile to the TOH+2
    zero-padded upsampled rows the 3x3 conv needs (nearest: src = floor(dst*H/OH))."""
    R = np.zeros((TOH + 2, TIH + 2), dtype=np.float32)
    two_x = (OH == 2 * H)
    for r in range(TOH + 2):
        if two_x:
            z = (r - 1) // 2 + 1           # tile-independent for exact 2x
        elif r == 0:
            z = 0                           # conv zero-pad row (zeroed in-kernel)
        elif r == TOH + 1:
            z = TIH + 1                     # conv zero-pad row (zeroed in-kernel)
        else:
            z = ((r - 1) * H) // OH + 1
        R[r, z] = 1.0
    return R


def _build_col_matrix(W, OW):
    """0/1 matrix: columns -> nearest-upsampled columns, with one zero conv-pad
    column on each side (cols 0 and OW+1 stay all-zero)."""
    U = np.zeros((W, OW + 2), dtype=np.float32)
    for c in range(1, OW + 1):
        U[((c - 1) * W) // OW, c] = 1.0
    return U


def output_up2x_forward(x_nchw, params, intr_sz):
    """x_nchw: (N, Cin, H, W) f32 -> (N, Cout, OH, OW) f32 (NCHW in and out)."""
    w1, b1, w3f, b3 = params       # (Cout,Cin), (Cout,), (Cout*Cout,9), (Cout,)
    N, Cin, H, W = x_nchw.shape
    Cout = w1.shape[0]
    OH, OW = intr_sz

    if OH == 2 * H:
        TOH = _pick_row_tile(OH, OW, Cout)
    else:
        # TODO(synk): for non-2x vertical scales the row-selection matrix becomes
        # tile-dependent; fall back to a single row tile per image (still fully fused).
        TOH = OH
    T = OH // TOH
    assert OH % TOH == 0 and H % T == 0
    TIH = H // T

    R = jnp.asarray(_build_row_matrix(TOH, TIH, H, OH))
    U = jnp.asarray(_build_col_matrix(W, OW))

    # One zero halo row top/bottom so every tile's row window stays in range.
    x_pad = jnp.pad(x_nchw, ((0, 0), (0, 0), (1, 1), (0, 0)))

    return pl.pallas_call(
        _fused_up2x_kernel,
        out_shape=jax.ShapeDtypeStruct((N, Cout, OH, OW), jnp.float32),
        grid=(N, T),
        in_specs=[
            # Full image of batch n; block index depends only on n, so it is not
            # re-fetched across the row tiles of the same image.
            pl.BlockSpec((1, Cin, H + 2, W), lambda n, t: (n, 0, 0, 0)),
            pl.BlockSpec((TOH + 2, TIH + 2), lambda n, t: (0, 0)),
            pl.BlockSpec((W, OW + 2), lambda n, t: (0, 0)),
            pl.BlockSpec(memory_space=pltpu.MemorySpace.SMEM),   # w1
            pl.BlockSpec(memory_space=pltpu.MemorySpace.SMEM),   # b1
            pl.BlockSpec(memory_space=pltpu.MemorySpace.SMEM),   # w3
            pl.BlockSpec(memory_space=pltpu.MemorySpace.SMEM),   # b3
        ],
        out_specs=pl.BlockSpec((1, Cout, TOH, OW), lambda n, t: (n, 0, t, 0)),
        compiler_params=pltpu.CompilerParams(
            dimension_semantics=("parallel", "parallel")),
    )(x_pad, R, U, w1, b1, w3f, b3)


# --------------------------------------------------------------------------
# Parameters (PyTorch layouts converted to kernel layouts) + pure-JAX reference
# --------------------------------------------------------------------------
def init_params(key, input_ch, output_ch):
    k1, k2, k3, k4 = jax.random.split(key, 4)
    w_sq = jax.random.normal(k1, (output_ch, input_ch, 1, 1), jnp.float32) * 0.1
    b_sq = jax.random.normal(k2, (output_ch,), jnp.float32) * 0.1
    w_sm = jax.random.normal(k3, (output_ch, output_ch, 3, 3), jnp.float32) * 0.1
    b_sm = jax.random.normal(k4, (output_ch,), jnp.float32) * 0.1
    w1 = w_sq[:, :, 0, 0]                               # (Cout, Cin)
    w3f = w_sm.reshape(output_ch * output_ch, 9)        # row=co*Cout+ci, col=kh*3+kw
    return (w1, b_sq, w3f, b_sm)


def _reference(x, params, intr_sz):
    w1, b1, w3f, b3 = params
    _, _, H, W = x.shape
    Cout = w1.shape[0]
    OH, OW = intr_sz
    y = jnp.einsum('oc,nchw->nohw', w1, x,
                   precision=jax.lax.Precision.HIGHEST) + b1[None, :, None, None]
    ih = (jnp.arange(OH) * H) // OH                     # PyTorch 'nearest'
    iw = (jnp.arange(OW) * W) // OW
    y = jnp.take(y, ih, axis=2)
    y = jnp.take(y, iw, axis=3)
    w3 = w3f.reshape(Cout, Cout, 3, 3)
    out = jax.lax.conv_general_dilated(
        y, w3, window_strides=(1, 1), padding=((1, 1), (1, 1)),
        dimension_numbers=('NCHW', 'OIHW', 'NCHW'),
        precision=jax.lax.Precision.HIGHEST)
    return out + b3[None, :, None, None]


if __name__ == "__main__":
    key = jax.random.PRNGKey(0)
    N, Cin, H, W = 2, 4, 16, 16
    Cout = 4
    intr_sz = (32, 32)   # "up2x"

    kx, kp = jax.random.split(key)
    x = jax.random.normal(kx, (N, Cin, H, W), jnp.float32)
    params = init_params(kp, Cin, Cout)

    out = jax.block_until_ready(output_up2x_forward(x, params, intr_sz))
    assert out.shape == (N, Cout, intr_sz[0], intr_sz[1]), out.shape

    ref = jax.block_until_ready(_reference(x, params, intr_sz))
    # Loose-ish tolerance only as insurance against MXU rounding of the 0/1
    # selection matmuls; structural errors would be O(0.1-1).
    if not jnp.allclose(out, ref, atol=2e-2, rtol=2e-2):
        max_err = float(jnp.max(jnp.abs(out - ref)))
        raise AssertionError(f"kernel does not match reference, max_abs_err={max_err}")

    print("KERNEL_OK")
</pallas_src>

<mosaic_0001>
module attributes {stable_mosaic.version = 11 : i64} {
  func.func @_fused_up2x_kernel(%arg0: i32, %arg1: i32, %arg2: memref<1x4x18x16xf32, #tpu.memory_space<vmem>>, %arg3: memref<18x10xf32, #tpu.memory_space<vmem>>, %arg4: memref<16x34xf32, #tpu.memory_space<vmem>>, %arg5: memref<4x4xf32, #tpu.memory_space<smem>>, %arg6: memref<4xf32, #tpu.memory_space<smem>>, %arg7: memref<16x9xf32, #tpu.memory_space<smem>>, %arg8: memref<4xf32, #tpu.memory_space<smem>>, %arg9: memref<1x4x16x32xf32, #tpu.memory_space<vmem>>) attributes {dimension_semantics = [#tpu.dimension_semantics<parallel>, #tpu.dimension_semantics<parallel>], iteration_bounds = array<i64: 2, 2>, scalar_prefetch = 0 : i64, scratch_operands = 0 : i64, tpu.core_type = #tpu.core_type<tc>, window_params = [{transform_indices = @transform_0, window_bounds = array<i64: 1, 4, 18, 16>}, {pipeline_mode = #tpu.pipeline_mode<synchronous>, transform_indices = @transform_1, window_bounds = array<i64: 18, 10>}, {pipeline_mode = #tpu.pipeline_mode<synchronous>, transform_indices = @transform_2, window_bounds = array<i64: 16, 34>}, {transform_indices = @transform_3, window_bounds = array<i64: 4, 4>}, {transform_indices = @transform_4, window_bounds = array<i64: 4>}, {transform_indices = @transform_5, window_bounds = array<i64: 16, 9>}, {transform_indices = @transform_6, window_bounds = array<i64: 4>}, {transform_indices = @transform_7, window_bounds = array<i64: 1, 4, 16, 32>}]} {
    %c8_i32 = arith.constant 8 : i32
    %0 = arith.muli %arg1, %c8_i32 : i32
    %1 = tpu.assume_multiple %0, 8 : i32
    %2 = tpu.iota {dimensions = array<i32: 0>} : vector<10x1xi32>
    %c8_i32_0 = arith.constant 8 : i32
    %3 = arith.muli %arg1, %c8_i32_0 : i32
    %c1_i32 = arith.constant 1 : i32
    %4 = arith.subi %3, %c1_i32 : i32
    %5 = vector.broadcast %4 : i32 to vector<10x1xi32>
    %6 = arith.addi %2, %5 : vector<10x1xi32>
    %c0_i32 = arith.constant 0 : i32
    %7 = vector.broadcast %c0_i32 : i32 to vector<10x1xi32>
    %8 = arith.cmpi sge, %6, %7 : vector<10x1xi32>
    %c16_i32 = arith.constant 16 : i32
    %9 = vector.broadcast %c16_i32 : i32 to vector<10x1xi32>
    %10 = arith.cmpi slt, %6, %9 : vector<10x1xi32>
    %11 = arith.andi %8, %10 : vector<10x1xi1>
    %c0 = arith.constant 0 : index
    %c0_1 = arith.constant 0 : index
    %12 = vector.load %arg3[%c0, %c0_1] : memref<18x10xf32, #tpu.memory_space<vmem>>, vector<18x10xf32>
    %c0_2 = arith.constant 0 : index
    %c0_3 = arith.constant 0 : index
    %13 = vector.load %arg4[%c0_2, %c0_3] : memref<16x34xf32, #tpu.memory_space<vmem>>, vector<16x34xf32>
    %cst = arith.constant 0.000000e+00 : f32
    %14 = vector.broadcast %cst : f32 to vector<10x16xf32>
    %c0_4 = arith.constant 0 : index
    %c0_5 = arith.constant 0 : index
    %15 = memref.load %arg5[%c0_4, %c0_5] : memref<4x4xf32, #tpu.memory_space<smem>>
    %c0_6 = arith.constant 0 : index
    %c0_7 = arith.constant 0 : index
    %16 = arith.index_cast %1 : i32 to index
    %c0_8 = arith.constant 0 : index
    %17 = vector.load %arg2[%c0_6, %c0_7, %16, %c0_8] : memref<1x4x18x16xf32, #tpu.memory_space<vmem>>, vector<1x1x10x16xf32>
    %18 = vector.shape_cast %17 : vector<1x1x10x16xf32> to vector<10x16xf32>
    %19 = vector.broadcast %15 : f32 to vector<10x16xf32>
    %20 = arith.mulf %19, %18 : vector<10x16xf32>
    %21 = arith.addf %14, %20 : vector<10x16xf32>
    %c0_9 = arith.constant 0 : index
    %c1 = arith.constant 1 : index
    %22 = memref.load %arg5[%c0_9, %c1] : memref<4x4xf32, #tpu.memory_space<smem>>
    %c0_10 = arith.constant 0 : index
    %c1_11 = arith.constant 1 : index
    %23 = arith.index_cast %1 : i32 to index
    %c0_12 = arith.constant 0 : index
    %24 = vector.load %arg2[%c0_10, %c1_11, %23, %c0_12] : memref<1x4x18x16xf32, #tpu.memory_space<vmem>>, vector<1x1x10x16xf32>
    %25 = vector.shape_cast %24 : vector<1x1x10x16xf32> to vector<10x16xf32>
    %26 = vector.broadcast %22 : f32 to vector<10x16xf32>
    %27 = arith.mulf %26, %25 : vector<10x16xf32>
    %28 = arith.addf %21, %27 : vector<10x16xf32>
    %c0_13 = arith.constant 0 : index
    %c2 = arith.constant 2 : index
    %29 = memref.load %arg5[%c0_13, %c2] : memref<4x4xf32, #tpu.memory_space<smem>>
    %c0_14 = arith.constant 0 : index
    %c2_15 = arith.constant 2 : index
    %30 = arith.index_cast %1 : i32 to index
    %c0_16 = arith.constant 0 : index
    %31 = vector.load %arg2[%c0_14, %c2_15, %30, %c0_16] : memref<1x4x18x16xf32, #tpu.memory_space<vmem>>, vector<1x1x10x16xf32>
    %32 = vector.shape_cast %31 : vector<1x1x10x16xf32> to vector<10x16xf32>
    %33 = vector.broadcast %29 : f32 to vector<10x16xf32>
    %34 = arith.mulf %33, %32 : vector<10x16xf32>
    %35 = arith.addf %28, %34 : vector<10x16xf32>
    %c0_17 = arith.constant 0 : index
    %c3 = arith.constant 3 : index
    %36 = memref.load %arg5[%c0_17, %c3] : memref<4x4xf32, #tpu.memory_space<smem>>
    %c0_18 = arith.constant 0 : index
    %c3_19 = arith.constant 3 : index
    %37 = arith.index_cast %1 : i32 to index
    %c0_20 = arith.constant 0 : index
    %38 = vector.load %arg2[%c0_18, %c3_19, %37, %c0_20] : memref<1x4x18x16xf32, #tpu.memory_space<vmem>>, vector<1x1x10x16xf32>
    %39 = vector.shape_cast %38 : vector<1x1x10x16xf32> to vector<10x16xf32>
    %40 = vector.broadcast %36 : f32 to vector<10x16xf32>
    %41 = arith.mulf %40, %39 : vector<10x16xf32>
    %42 = arith.addf %35, %41 : vector<10x16xf32>
    %c0_21 = arith.constant 0 : index
    %43 = memref.load %arg6[%c0_21] : memref<4xf32, #tpu.memory_space<smem>>
    %44 = vector.broadcast %43 : f32 to vector<10x16xf32>
    %45 = arith.addf %42, %44 : vector<10x16xf32>
    %cst_22 = arith.constant 0.000000e+00 : f32
    %46 = vector.shape_cast %11 : vector<10x1xi1> to vector<10x1xi1>
    %47 = vector.broadcast %46 : vector<10x1xi1> to vector<10x16xi1>
    %48 = vector.broadcast %cst_22 : f32 to vector<10x16xf32>
    %49 = arith.select %47, %45, %48 : vector<10x16xi1>, vector<10x16xf32>
    %cst_23 = arith.constant dense<0.000000e+00> : vector<18x16xf32>
    %50 = tpu.matmul %12, %49, %cst_23 {dimension_numbers = #tpu.dot_dimension_numbers<[1], [0], [0], [1], [0, 0, 1, 1], [], []>} : vector<18x10xf32>, vector<10x16xf32>, vector<18x16xf32> -> vector<18x16xf32>
    %cst_24 = arith.constant dense<0.000000e+00> : vector<18x34xf32>
    %51 = tpu.matmul %50, %13, %cst_24 {dimension_numbers = #tpu.dot_dimension_numbers<[1], [0], [0], [1], [0, 0, 1, 1], [], []>} : vector<18x16xf32>, vector<16x34xf32>, vector<18x34xf32> -> vector<18x34xf32>
    %cst_25 = arith.constant 0.000000e+00 : f32
    %52 = vector.broadcast %cst_25 : f32 to vector<10x16xf32>
    %c1_26 = arith.constant 1 : index
    %c0_27 = arith.constant 0 : index
    %53 = memref.load %arg5[%c1_26, %c0_27] : memref<4x4xf32, #tpu.memory_space<smem>>
    %c0_28 = arith.constant 0 : index
    %c0_29 = arith.constant 0 : index
    %54 = arith.index_cast %1 : i32 to index
    %c0_30 = arith.constant 0 : index
    %55 = vector.load %arg2[%c0_28, %c0_29, %54, %c0_30] : memref<1x4x18x16xf32, #tpu.memory_space<vmem>>, vector<1x1x10x16xf32>
    %56 = vector.shape_cast %55 : vector<1x1x10x16xf32> to vector<10x16xf32>
    %57 = vector.broadcast %53 : f32 to vector<10x16xf32>
    %58 = arith.mulf %57, %56 : vector<10x16xf32>
    %59 = arith.addf %52, %58 : vector<10x16xf32>
    %c1_31 = arith.constant 1 : index
    %c1_32 = arith.constant 1 : index
    %60 = memref.load %arg5[%c1_31, %c1_32] : memref<4x4xf32, #tpu.memory_space<smem>>
    %c0_33 = arith.constant 0 : index
    %c1_34 = arith.constant 1 : index
    %61 = arith.index_cast %1 : i32 to index
    %c0_35 = arith.constant 0 : index
    %62 = vector.load %arg2[%c0_33, %c1_34, %61, %c0_35] : memref<1x4x18x16xf32, #tpu.memory_space<vmem>>, vector<1x1x10x16xf32>
    %63 = vector.shape_cast %62 : vector<1x1x10x16xf32> to vector<10x16xf32>
    %64 = vector.broadcast %60 : f32 to vector<10x16xf32>
    %65 = arith.mulf %64, %63 : vector<10x16xf32>
    %66 = arith.addf %59, %65 : vector<10x16xf32>
    %c1_36 = arith.constant 1 : index
    %c2_37 = arith.constant 2 : index
    %67 = memref.load %arg5[%c1_36, %c2_37] : memref<4x4xf32, #tpu.memory_space<smem>>
    %c0_38 = arith.constant 0 : index
    %c2_39 = arith.constant 2 : index
    %68 = arith.index_cast %1 : i32 to index
    %c0_40 = arith.constant 0 : index
    %69 = vector.load %arg2[%c0_38, %c2_39, %68, %c0_40] : memref<1x4x18x16xf32, #tpu.memory_space<vmem>>, vector<1x1x10x16xf32>
    %70 = vector.shape_cast %69 : vector<1x1x10x16xf32> to vector<10x16xf32>
    %71 = vector.broadcast %67 : f32 to vector<10x16xf32>
    %72 = arith.mulf %71, %70 : vector<10x16xf32>
    %73 = arith.addf %66, %72 : vector<10x16xf32>
    %c1_41 = arith.constant 1 : index
    %c3_42 = arith.constant 3 : index
    %74 = memref.load %arg5[%c1_41, %c3_42] : memref<4x4xf32, #tpu.memory_space<smem>>
    %c0_43 = arith.constant 0 : index
    %c3_44 = arith.constant 3 : index
    %75 = arith.index_cast %1 : i32 to index
    %c0_45 = arith.constant 0 : index
    %76 = vector.load %arg2[%c0_43, %c3_44, %75, %c0_45] : memref<1x4x18x16xf32, #tpu.memory_space<vmem>>, vector<1x1x10x16xf32>
    %77 = vector.shape_cast %76 : vector<1x1x10x16xf32> to vector<10x16xf32>
    %78 = vector.broadcast %74 : f32 to vector<10x16xf32>
    %79 = arith.mulf %78, %77 : vector<10x16xf32>
    %80 = arith.addf %73, %79 : vector<10x16xf32>
    %c1_46 = arith.constant 1 : index
    %81 = memref.load %arg6[%c1_46] : memref<4xf32, #tpu.memory_space<smem>>
    %82 = vector.broadcast %81 : f32 to vector<10x16xf32>
    %83 = arith.addf %80, %82 : vector<10x16xf32>
    %cst_47 = arith.constant 0.000000e+00 : f32
    %84 = vector.shape_cast %11 : vector<10x1xi1> to vector<10x1xi1>
    %85 = vector.broadcast %84 : vector<10x1xi1> to vector<10x16xi1>
    %86 = vector.broadcast %cst_47 : f32 to vector<10x16xf32>
    %87 = arith.select %85, %83, %86 : vector<10x16xi1>, vector<10x16xf32>
    %cst_48 = arith.constant dense<0.000000e+00> : vector<18x16xf32>
    %88 = tpu.matmul %12, %87, %cst_48 {dimension_numbers = #tpu.dot_dimension_numbers<[1], [0], [0], [1], [0, 0, 1, 1], [], []>} : vector<18x10xf32>, vector<10x16xf32>, vector<18x16xf32> -> vector<18x16xf32>
    %cst_49 = arith.constant dense<0.000000e+00> : vector<18x34xf32>
    %89 = tpu.matmul %88, %13, %cst_49 {dimension_numbers = #tpu.dot_dimension_numbers<[1], [0], [0], [1], [0, 0, 1, 1], [], []>} : vector<18x16xf32>, vector<16x34xf32>, vector<18x34xf32> -> vector<18x34xf32>
    %cst_50 = arith.constant 0.000000e+00 : f32
    %90 = vector.broadcast %cst_50 : f32 to vector<10x16xf32>
    %c2_51 = arith.constant 2 : index
    %c0_52 = arith.constant 0 : index
    %91 = memref.load %arg5[%c2_51, %c0_52] : memref<4x4xf32, #tpu.memory_space<smem>>
    %c0_53 = arith.constant 0 : index
    %c0_54 = arith.constant 0 : index
    %92 = arith.index_cast %1 : i32 to index
    %c0_55 = arith.constant 0 : index
    %93 = vector.load %arg2[%c0_53, %c0_54, %92, %c0_55] : memref<1x4x18x16xf32, #tpu.memory_space<vmem>>, vector<1x1x10x16xf32>
    %94 = vector.shape_cast %93 : vector<1x1x10x16xf32> to vector<10x16xf32>
    %95 = vector.broadcast %91 : f32 to vector<10x16xf32>
    %96 = arith.mulf %95, %94 : vector<10x16xf32>
    %97 = arith.addf %90, %96 : vector<10x16xf32>
    %c2_56 = arith.constant 2 : index
    %c1_57 = arith.constant 1 : index
    %98 = memref.load %arg5[%c2_56, %c1_57] : memref<4x4xf32, #tpu.memory_space<smem>>
    %c0_58 = arith.constant 0 : index
    %c1_59 = arith.constant 1 : index
    %99 = arith.index_cast %1 : i32 to index
    %c0_60 = arith.constant 0 : index
    %100 = vector.load %arg2[%c0_58, %c1_59, %99, %c0_60] : memref<1x4x18x16xf32, #tpu.memory_space<vmem>>, vector<1x1x10x16xf32>
    %101 = vector.shape_cast %100 : vector<1x1x10x16xf32> to vector<10x16xf32>
    %102 = vector.broadcast %98 : f32 to vector<10x16xf32>
    %103 = arith.mulf %102, %101 : vector<10x16xf32>
    %104 = arith.addf %97, %103 : vector<10x16xf32>
    %c2_61 = arith.constant 2 : index
    %c2_62 = arith.constant 2 : index
    %105 = memref.load %arg5[%c2_61, %c2_62] : memref<4x4xf32, #tpu.memory_space<smem>>
    %c0_63 = arith.constant 0 : index
    %c2_64 = arith.constant 2 : index
    %106 = arith.index_cast %1 : i32 to index
    %c0_65 = arith.constant 0 : index
    %107 = vector.load %arg2[%c0_63, %c2_64, %106, %c0_65] : memref<1x4x18x16xf32, #tpu.memory_space<vmem>>, vector<1x1x10x16xf32>
    %108 = vector.shape_cast %107 : vector<1x1x10x16xf32> to vector<10x16xf32>
    %109 = vector.broadcast %105 : f32 to vector<10x16xf32>
    %110 = arith.mulf %109, %108 : vector<10x16xf32>
    %111 = arith.addf %104, %110 : vector<10x16xf32>
    %c2_66 = arith.constant 2 : index
    %c3_67 = arith.constant 3 : index
    %112 = memref.load %arg5[%c2_66, %c3_67] : memref<4x4xf32, #tpu.memory_space<smem>>
    %c0_68 = arith.constant 0 : index
    %c3_69 = arith.constant 3 : index
    %113 = arith.index_cast %1 : i32 to index
    %c0_70 = arith.constant 0 : index
    %114 = vector.load %arg2[%c0_68, %c3_69, %113, %c0_70] : memref<1x4x18x16xf32, #tpu.memory_space<vmem>>, vector<1x1x10x16xf32>
    %115 = vector.shape_cast %114 : vector<1x1x10x16xf32> to vector<10x16xf32>
    %116 = vector.broadcast %112 : f32 to vector<10x16xf32>
    %117 = arith.mulf %116, %115 : vector<10x16xf32>
    %118 = arith.addf %111, %117 : vector<10x16xf32>
    %c2_71 = arith.constant 2 : index
    %119 = memref.load %arg6[%c2_71] : memref<4xf32, #tpu.memory_space<smem>>
    %120 = vector.broadcast %119 : f32 to vector<10x16xf32>
    %121 = arith.addf %118, %120 : vector<10x16xf32>
    %cst_72 = arith.constant 0.000000e+00 : f32
    %122 = vector.shape_cast %11 : vector<10x1xi1> to vector<10x1xi1>
    %123 = vector.broadcast %122 : vector<10x1xi1> to vector<10x16xi1>
    %124 = vector.broadcast %cst_72 : f32 to vector<10x16xf32>
    %125 = arith.select %123, %121, %124 : vector<10x16xi1>, vector<10x16xf32>
    %cst_73 = arith.constant dense<0.000000e+00> : vector<18x16xf32>
    %126 = tpu.matmul %12, %125, %cst_73 {dimension_numbers = #tpu.dot_dimension_numbers<[1], [0], [0], [1], [0, 0, 1, 1], [], []>} : vector<18x10xf32>, vector<10x16xf32>, vector<18x16xf32> -> vector<18x16xf32>
    %cst_74 = arith.constant dense<0.000000e+00> : vector<18x34xf32>
    %127 = tpu.matmul %126, %13, %cst_74 {dimension_numbers = #tpu.dot_dimension_numbers<[1], [0], [0], [1], [0, 0, 1, 1], [], []>} : vector<18x16xf32>, vector<16x34xf32>, vector<18x34xf32> -> vector<18x34xf32>
    %cst_75 = arith.constant 0.000000e+00 : f32
    %128 = vector.broadcast %cst_75 : f32 to vector<10x16xf32>
    %c3_76 = arith.constant 3 : index
    %c0_77 = arith.constant 0 : index
    %129 = memref.load %arg5[%c3_76, %c0_77] : memref<4x4xf32, #tpu.memory_space<smem>>
    %c0_78 = arith.constant 0 : index
    %c0_79 = arith.constant 0 : index
    %130 = arith.index_cast %1 : i32 to index
    %c0_80 = arith.constant 0 : index
    %131 = vector.load %arg2[%c0_78, %c0_79, %130, %c0_80] : memref<1x4x18x16xf32, #tpu.memory_space<vmem>>, vector<1x1x10x16xf32>
    %132 = vector.shape_cast %131 : vector<1x1x10x16xf32> to vector<10x16xf32>
    %133 = vector.broadcast %129 : f32 to vector<10x16xf32>
    %134 = arith.mulf %133, %132 : vector<10x16xf32>
    %135 = arith.addf %128, %134 : vector<10x16xf32>
    %c3_81 = arith.constant 3 : index
    %c1_82 = arith.constant 1 : index
    %136 = memref.load %arg5[%c3_81, %c1_82] : memref<4x4xf32, #tpu.memory_space<smem>>
    %c0_83 = arith.constant 0 : index
    %c1_84 = arith.constant 1 : index
    %137 = arith.index_cast %1 : i32 to index
    %c0_85 = arith.constant 0 : index
    %138 = vector.load %arg2[%c0_83, %c1_84, %137, %c0_85] : memref<1x4x18x16xf32, #tpu.memory_space<vmem>>, vector<1x1x10x16xf32>
    %139 = vector.shape_cast %138 : vector<1x1x10x16xf32> to vector<10x16xf32>
    %140 = vector.broadcast %136 : f32 to vector<10x16xf32>
    %141 = arith.mulf %140, %139 : vector<10x16xf32>
    %142 = arith.addf %135, %141 : vector<10x16xf32>
    %c3_86 = arith.constant 3 : index
    %c2_87 = arith.constant 2 : index
    %143 = memref.load %arg5[%c3_86, %c2_87] : memref<4x4xf32, #tpu.memory_space<smem>>
    %c0_88 = arith.constant 0 : index
    %c2_89 = arith.constant 2 : index
    %144 = arith.index_cast %1 : i32 to index
    %c0_90 = arith.constant 0 : index
    %145 = vector.load %arg2[%c0_88, %c2_89, %144, %c0_90] : memref<1x4x18x16xf32, #tpu.memory_space<vmem>>, vector<1x1x10x16xf32>
    %146 = vector.shape_cast %145 : vector<1x1x10x16xf32> to vector<10x16xf32>
    %147 = vector.broadcast %143 : f32 to vector<10x16xf32>
    %148 = arith.mulf %147, %146 : vector<10x16xf32>
    %149 = arith.addf %142, %148 : vector<10x16xf32>
    %c3_91 = arith.constant 3 : index
    %c3_92 = arith.constant 3 : index
    %150 = memref.load %arg5[%c3_91, %c3_92] : memref<4x4xf32, #tpu.memory_space<smem>>
    %c0_93 = arith.constant 0 : index
    %c3_94 = arith.constant 3 : index
    %151 = arith.index_cast %1 : i32 to index
    %c0_95 = arith.constant 0 : index
    %152 = vector.load %arg2[%c0_93, %c3_94, %151, %c0_95] : memref<1x4x18x16xf32, #tpu.memory_space<vmem>>, vector<1x1x10x16xf32>
    %153 = vector.shape_cast %152 : vector<1x1x10x16xf32> to vector<10x16xf32>
    %154 = vector.broadcast %150 : f32 to vector<10x16xf32>
    %155 = arith.mulf %154, %153 : vector<10x16xf32>
    %156 = arith.addf %149, %155 : vector<10x16xf32>
    %c3_96 = arith.constant 3 : index
    %157 = memref.load %arg6[%c3_96] : memref<4xf32, #tpu.memory_space<smem>>
    %158 = vector.broadcast %157 : f32 to vector<10x16xf32>
    %159 = arith.addf %156, %158 : vector<10x16xf32>
    %cst_97 = arith.constant 0.000000e+00 : f32
    %160 = vector.shape_cast %11 : vector<10x1xi1> to vector<10x1xi1>
    %161 = vector.broadcast %160 : vector<10x1xi1> to vector<10x16xi1>
    %162 = vector.broadcast %cst_97 : f32 to vector<10x16xf32>
    %163 = arith.select %161, %159, %162 : vector<10x16xi1>, vector<10x16xf32>
    %cst_98 = arith.constant dense<0.000000e+00> : vector<18x16xf32>
    %164 = tpu.matmul %12, %163, %cst_98 {dimension_numbers = #tpu.dot_dimension_numbers<[1], [0], [0], [1], [0, 0, 1, 1], [], []>} : vector<18x10xf32>, vector<10x16xf32>, vector<18x16xf32> -> vector<18x16xf32>
    %cst_99 = arith.constant dense<0.000000e+00> : vector<18x34xf32>
    %165 = tpu.matmul %164, %13, %cst_99 {dimension_numbers = #tpu.dot_dimension_numbers<[1], [0], [0], [1], [0, 0, 1, 1], [], []>} : vector<18x16xf32>, vector<16x34xf32>, vector<18x34xf32> -> vector<18x34xf32>
    %cst_100 = arith.constant 0.000000e+00 : f32
    %166 = vector.broadcast %cst_100 : f32 to vector<16x32xf32>
    %cst_101 = arith.constant 0.000000e+00 : f32
    %167 = vector.broadcast %cst_101 : f32 to vector<16x32xf32>
    %cst_102 = arith.constant 0.000000e+00 : f32
    %168 = vector.broadcast %cst_102 : f32 to vector<16x32xf32>
    %cst_103 = arith.constant 0.000000e+00 : f32
    %169 = vector.broadcast %cst_103 : f32 to vector<16x32xf32>
    %170 = vector.extract_strided_slice %51 {offsets = [0, 0], sizes = [16, 32], strides = [1, 1]} : vector<18x34xf32> to vector<16x32xf32>
    %c0_104 = arith.constant 0 : index
    %c0_105 = arith.constant 0 : index
    %171 = memref.load %arg7[%c0_104, %c0_105] : memref<16x9xf32, #tpu.memory_space<smem>>
    %172 = vector.broadcast %171 : f32 to vector<16x32xf32>
    %173 = arith.mulf %172, %170 : vector<16x32xf32>
    %174 = arith.addf %166, %173 : vector<16x32xf32>
    %c4 = arith.constant 4 : index
    %c0_106 = arith.constant 0 : index
    %175 = memref.load %arg7[%c4, %c0_106] : memref<16x9xf32, #tpu.memory_space<smem>>
    %176 = vector.broadcast %175 : f32 to vector<16x32xf32>
    %177 = arith.mulf %176, %170 : vector<16x32xf32>
    %178 = arith.addf %167, %177 : vector<16x32xf32>
    %c8 = arith.constant 8 : index
    %c0_107 = arith.constant 0 : index
    %179 = memref.load %arg7[%c8, %c0_107] : memref<16x9xf32, #tpu.memory_space<smem>>
    %180 = vector.broadcast %179 : f32 to vector<16x32xf32>
    %181 = arith.mulf %180, %170 : vector<16x32xf32>
    %182 = arith.addf %168, %181 : vector<16x32xf32>
    %c12 = arith.constant 12 : index
    %c0_108 = arith.constant 0 : index
    %183 = memref.load %arg7[%c12, %c0_108] : memref<16x9xf32, #tpu.memory_space<smem>>
    %184 = vector.broadcast %183 : f32 to vector<16x32xf32>
    %185 = arith.mulf %184, %170 : vector<16x32xf32>
    %186 = arith.addf %169, %185 : vector<16x32xf32>
    %187 = vector.extract_strided_slice %51 {offsets = [0, 1], sizes = [16, 32], strides = [1, 1]} : vector<18x34xf32> to vector<16x32xf32>
    %c0_109 = arith.constant 0 : index
    %c1_110 = arith.constant 1 : index
    %188 = memref.load %arg7[%c0_109, %c1_110] : memref<16x9xf32, #tpu.memory_space<smem>>
    %189 = vector.broadcast %188 : f32 to vector<16x32xf32>
    %190 = arith.mulf %189, %187 : vector<16x32xf32>
    %191 = arith.addf %174, %190 : vector<16x32xf32>
    %c4_111 = arith.constant 4 : index
    %c1_112 = arith.constant 1 : index
    %192 = memref.load %arg7[%c4_111, %c1_112] : memref<16x9xf32, #tpu.memory_space<smem>>
    %193 = vector.broadcast %192 : f32 to vector<16x32xf32>
    %194 = arith.mulf %193, %187 : vector<16x32xf32>
    %195 = arith.addf %178, %194 : vector<16x32xf32>
    %c8_113 = arith.constant 8 : index
    %c1_114 = arith.constant 1 : index
    %196 = memref.load %arg7[%c8_113, %c1_114] : memref<16x9xf32, #tpu.memory_space<smem>>
    %197 = vector.broadcast %196 : f32 to vector<16x32xf32>
    %198 = arith.mulf %197, %187 : vector<16x32xf32>
    %199 = arith.addf %182, %198 : vector<16x32xf32>
    %c12_115 = arith.constant 12 : index
    %c1_116 = arith.constant 1 : index
    %200 = memref.load %arg7[%c12_115, %c1_116] : memref<16x9xf32, #tpu.memory_space<smem>>
    %201 = vector.broadcast %200 : f32 to vector<16x32xf32>
    %202 = arith.mulf %201, %187 : vector<16x32xf32>
    %203 = arith.addf %186, %202 : vector<16x32xf32>
    %204 = vector.extract_strided_slice %51 {offsets = [0, 2], sizes = [16, 32], strides = [1, 1]} : vector<18x34xf32> to vector<16x32xf32>
    %c0_117 = arith.constant 0 : index
    %c2_118 = arith.constant 2 : index
    %205 = memref.load %arg7[%c0_117, %c2_118] : memref<16x9xf32, #tpu.memory_space<smem>>
    %206 = vector.broadcast %205 : f32 to vector<16x32xf32>
    %207 = arith.mulf %206, %204 : vector<16x32xf32>
    %208 = arith.addf %191, %207 : vector<16x32xf32>
    %c4_119 = arith.constant 4 : index
    %c2_120 = arith.constant 2 : index
    %209 = memref.load %arg7[%c4_119, %c2_120] : memref<16x9xf32, #tpu.memory_space<smem>>
    %210 = vector.broadcast %209 : f32 to vector<16x32xf32>
    %211 = arith.mulf %210, %204 : vector<16x32xf32>
    %212 = arith.addf %195, %211 : vector<16x32xf32>
    %c8_121 = arith.constant 8 : index
    %c2_122 = arith.constant 2 : index
    %213 = memref.load %arg7[%c8_121, %c2_122] : memref<16x9xf32, #tpu.memory_space<smem>>
    %214 = vector.broadcast %213 : f32 to vector<16x32xf32>
    %215 = arith.mulf %214, %204 : vector<16x32xf32>
    %216 = arith.addf %199, %215 : vector<16x32xf32>
    %c12_123 = arith.constant 12 : index
    %c2_124 = arith.constant 2 : index
    %217 = memref.load %arg7[%c12_123, %c2_124] : memref<16x9xf32, #tpu.memory_space<smem>>
    %218 = vector.broadcast %217 : f32 to vector<16x32xf32>
    %219 = arith.mulf %218, %204 : vector<16x32xf32>
    %220 = arith.addf %203, %219 : vector<16x32xf32>
    %221 = vector.extract_strided_slice %51 {offsets = [1, 0], sizes = [16, 32], strides = [1, 1]} : vector<18x34xf32> to vector<16x32xf32>
    %c0_125 = arith.constant 0 : index
    %c3_126 = arith.constant 3 : index
    %222 = memref.load %arg7[%c0_125, %c3_126] : memref<16x9xf32, #tpu.memory_space<smem>>
    %223 = vector.broadcast %222 : f32 to vector<16x32xf32>
    %224 = arith.mulf %223, %221 : vector<16x32xf32>
    %225 = arith.addf %208, %224 : vector<16x32xf32>
    %c4_127 = arith.constant 4 : index
    %c3_128 = arith.constant 3 : index
    %226 = memref.load %arg7[%c4_127, %c3_128] : memref<16x9xf32, #tpu.memory_space<smem>>
    %227 = vector.broadcast %226 : f32 to vector<16x32xf32>
    %228 = arith.mulf %227, %221 : vector<16x32xf32>
    %229 = arith.addf %212, %228 : vector<16x32xf32>
    %c8_129 = arith.constant 8 : index
    %c3_130 = arith.constant 3 : index
    %230 = memref.load %arg7[%c8_129, %c3_130] : memref<16x9xf32, #tpu.memory_space<smem>>
    %231 = vector.broadcast %230 : f32 to vector<16x32xf32>
    %232 = arith.mulf %231, %221 : vector<16x32xf32>
    %233 = arith.addf %216, %232 : vector<16x32xf32>
    %c12_131 = arith.constant 12 : index
    %c3_132 = arith.constant 3 : index
    %234 = memref.load %arg7[%c12_131, %c3_132] : memref<16x9xf32, #tpu.memory_space<smem>>
    %235 = vector.broadcast %234 : f32 to vector<16x32xf32>
    %236 = arith.mulf %235, %221 : vector<16x32xf32>
    %237 = arith.addf %220, %236 : vector<16x32xf32>
    %238 = vector.extract_strided_slice %51 {offsets = [1, 1], sizes = [16, 32], strides = [1, 1]} : vector<18x34xf32> to vector<16x32xf32>
    %c0_133 = arith.constant 0 : index
    %c4_134 = arith.constant 4 : index
    %239 = memref.load %arg7[%c0_133, %c4_134] : memref<16x9xf32, #tpu.memory_space<smem>>
    %240 = vector.broadcast %239 : f32 to vector<16x32xf32>
    %241 = arith.mulf %240, %238 : vector<16x32xf32>
    %242 = arith.addf %225, %241 : vector<16x32xf32>
    %c4_135 = arith.constant 4 : index
    %c4_136 = arith.constant 4 : index
    %243 = memref.load %arg7[%c4_135, %c4_136] : memref<16x9xf32, #tpu.memory_space<smem>>
    %244 = vector.broadcast %243 : f32 to vector<16x32xf32>
    %245 = arith.mulf %244, %238 : vector<16x32xf32>
    %246 = arith.addf %229, %245 : vector<16x32xf32>
    %c8_137 = arith.constant 8 : index
    %c4_138 = arith.constant 4 : index
    %247 = memref.load %arg7[%c8_137, %c4_138] : memref<16x9xf32, #tpu.memory_space<smem>>
    %248 = vector.broadcast %247 : f32 to vector<16x32xf32>
    %249 = arith.mulf %248, %238 : vector<16x32xf32>
    %250 = arith.addf %233, %249 : vector<16x32xf32>
    %c12_139 = arith.constant 12 : index
    %c4_140 = arith.constant 4 : index
    %251 = memref.load %arg7[%c12_139, %c4_140] : memref<16x9xf32, #tpu.memory_space<smem>>
    %252 = vector.broadcast %251 : f32 to vector<16x32xf32>
    %253 = arith.mulf %252, %238 : vector<16x32xf32>
    %254 = arith.addf %237, %253 : vector<16x32xf32>
    %255 = vector.extract_strided_slice %51 {offsets = [1, 2], sizes = [16, 32], strides = [1, 1]} : vector<18x34xf32> to vector<16x32xf32>
    %c0_141 = arith.constant 0 : index
    %c5 = arith.constant 5 : index
    %256 = memref.load %arg7[%c0_141, %c5] : memref<16x9xf32, #tpu.memory_space<smem>>
    %257 = vector.broadcast %256 : f32 to vector<16x32xf32>
    %258 = arith.mulf %257, %255 : vector<16x32xf32>
    %259 = arith.addf %242, %258 : vector<16x32xf32>
    %c4_142 = arith.constant 4 : index
    %c5_143 = arith.constant 5 : index
    %260 = memref.load %arg7[%c4_142, %c5_143] : memref<16x9xf32, #tpu.memory_space<smem>>
    %261 = vector.broadcast %260 : f32 to vector<16x32xf32>
    %262 = arith.mulf %261, %255 : vector<16x32xf32>
    %263 = arith.addf %246, %262 : vector<16x32xf32>
    %c8_144 = arith.constant 8 : index
    %c5_145 = arith.constant 5 : index
    %264 = memref.load %arg7[%c8_144, %c5_145] : memref<16x9xf32, #tpu.memory_space<smem>>
    %265 = vector.broadcast %264 : f32 to vector<16x32xf32>
    %266 = arith.mulf %265, %255 : vector<16x32xf32>
    %267 = arith.addf %250, %266 : vector<16x32xf32>
    %c12_146 = arith.constant 12 : index
    %c5_147 = arith.constant 5 : index
    %268 = memref.load %arg7[%c12_146, %c5_147] : memref<16x9xf32, #tpu.memory_space<smem>>
    %269 = vector.broadcast %268 : f32 to vector<16x32xf32>
    %270 = arith.mulf %269, %255 : vector<16x32xf32>
    %271 = arith.addf %254, %270 : vector<16x32xf32>
    %272 = vector.extract_strided_slice %51 {offsets = [2, 0], sizes = [16, 32], strides = [1, 1]} : vector<18x34xf32> to vector<16x32xf32>
    %c0_148 = arith.constant 0 : index
    %c6 = arith.constant 6 : index
    %273 = memref.load %arg7[%c0_148, %c6] : memref<16x9xf32, #tpu.memory_space<smem>>
    %274 = vector.broadcast %273 : f32 to vector<16x32xf32>
    %275 = arith.mulf %274, %272 : vector<16x32xf32>
    %276 = arith.addf %259, %275 : vector<16x32xf32>
    %c4_149 = arith.constant 4 : index
    %c6_150 = arith.constant 6 : index
    %277 = memref.load %arg7[%c4_149, %c6_150] : memref<16x9xf32, #tpu.memory_space<smem>>
    %278 = vector.broadcast %277 : f32 to vector<16x32xf32>
    %279 = arith.mulf %278, %272 : vector<16x32xf32>
    %280 = arith.addf %263, %279 : vector<16x32xf32>
    %c8_151 = arith.constant 8 : index
    %c6_152 = arith.constant 6 : index
    %281 = memref.load %arg7[%c8_151, %c6_152] : memref<16x9xf32, #tpu.memory_space<smem>>
    %282 = vector.broadcast %281 : f32 to vector<16x32xf32>
    %283 = arith.mulf %282, %272 : vector<16x32xf32>
    %284 = arith.addf %267, %283 : vector<16x32xf32>
    %c12_153 = arith.constant 12 : index
    %c6_154 = arith.constant 6 : index
    %285 = memref.load %arg7[%c12_153, %c6_154] : memref<16x9xf32, #tpu.memory_space<smem>>
    %286 = vector.broadcast %285 : f32 to vector<16x32xf32>
    %287 = arith.mulf %286, %272 : vector<16x32xf32>
    %288 = arith.addf %271, %287 : vector<16x32xf32>
    %289 = vector.extract_strided_slice %51 {offsets = [2, 1], sizes = [16, 32], strides = [1, 1]} : vector<18x34xf32> to vector<16x32xf32>
    %c0_155 = arith.constant 0 : index
    %c7 = arith.constant 7 : index
    %290 = memref.load %arg7[%c0_155, %c7] : memref<16x9xf32, #tpu.memory_space<smem>>
    %291 = vector.broadcast %290 : f32 to vector<16x32xf32>
    %292 = arith.mulf %291, %289 : vector<16x32xf32>
    %293 = arith.addf %276, %292 : vector<16x32xf32>
    %c4_156 = arith.constant 4 : index
    %c7_157 = arith.constant 7 : index
    %294 = memref.load %arg7[%c4_156, %c7_157] : memref<16x9xf32, #tpu.memory_space<smem>>
    %295 = vector.broadcast %294 : f32 to vector<16x32xf32>
    %296 = arith.mulf %295, %289 : vector<16x32xf32>
    %297 = arith.addf %280, %296 : vector<16x32xf32>
    %c8_158 = arith.constant 8 : index
    %c7_159 = arith.constant 7 : index
    %298 = memref.load %arg7[%c8_158, %c7_159] : memref<16x9xf32, #tpu.memory_space<smem>>
    %299 = vector.broadcast %298 : f32 to vector<16x32xf32>
    %300 = arith.mulf %299, %289 : vector<16x32xf32>
    %301 = arith.addf %284, %300 : vector<16x32xf32>
    %c12_160 = arith.constant 12 : index
    %c7_161 = arith.constant 7 : index
    %302 = memref.load %arg7[%c12_160, %c7_161] : memref<16x9xf32, #tpu.memory_space<smem>>
    %303 = vector.broadcast %302 : f32 to vector<16x32xf32>
    %304 = arith.mulf %303, %289 : vector<16x32xf32>
    %305 = arith.addf %288, %304 : vector<16x32xf32>
    %306 = vector.extract_strided_slice %51 {offsets = [2, 2], sizes = [16, 32], strides = [1, 1]} : vector<18x34xf32> to vector<16x32xf32>
    %c0_162 = arith.constant 0 : index
    %c8_163 = arith.constant 8 : index
    %307 = memref.load %arg7[%c0_162, %c8_163] : memref<16x9xf32, #tpu.memory_space<smem>>
    %308 = vector.broadcast %307 : f32 to vector<16x32xf32>
    %309 = arith.mulf %308, %306 : vector<16x32xf32>
    %310 = arith.addf %293, %309 : vector<16x32xf32>
    %c4_164 = arith.constant 4 : index
    %c8_165 = arith.constant 8 : index
    %311 = memref.load %arg7[%c4_164, %c8_165] : memref<16x9xf32, #tpu.memory_space<smem>>
    %312 = vector.broadcast %311 : f32 to vector<16x32xf32>
    %313 = arith.mulf %312, %306 : vector<16x32xf32>
    %314 = arith.addf %297, %313 : vector<16x32xf32>
    %c8_166 = arith.constant 8 : index
    %c8_167 = arith.constant 8 : index
    %315 = memref.load %arg7[%c8_166, %c8_167] : memref<16x9xf32, #tpu.memory_space<smem>>
    %316 = vector.broadcast %315 : f32 to vector<16x32xf32>
    %317 = arith.mulf %316, %306 : vector<16x32xf32>
    %318 = arith.addf %301, %317 : vector<16x32xf32>
    %c12_168 = arith.constant 12 : index
    %c8_169 = arith.constant 8 : index
    %319 = memref.load %arg7[%c12_168, %c8_169] : memref<16x9xf32, #tpu.memory_space<smem>>
    %320 = vector.broadcast %319 : f32 to vector<16x32xf32>
    %321 = arith.mulf %320, %306 : vector<16x32xf32>
    %322 = arith.addf %305, %321 : vector<16x32xf32>
    %323 = vector.extract_strided_slice %89 {offsets = [0, 0], sizes = [16, 32], strides = [1, 1]} : vector<18x34xf32> to vector<16x32xf32>
    %c1_170 = arith.constant 1 : index
    %c0_171 = arith.constant 0 : index
    %324 = memref.load %arg7[%c1_170, %c0_171] : memref<16x9xf32, #tpu.memory_space<smem>>
    %325 = vector.broadcast %324 : f32 to vector<16x32xf32>
    %326 = arith.mulf %325, %323 : vector<16x32xf32>
    %327 = arith.addf %310, %326 : vector<16x32xf32>
    %c5_172 = arith.constant 5 : index
    %c0_173 = arith.constant 0 : index
    %328 = memref.load %arg7[%c5_172, %c0_173] : memref<16x9xf32, #tpu.memory_space<smem>>
    %329 = vector.broadcast %328 : f32 to vector<16x32xf32>
    %330 = arith.mulf %329, %323 : vector<16x32xf32>
    %331 = arith.addf %314, %330 : vector<16x32xf32>
    %c9 = arith.constant 9 : index
    %c0_174 = arith.constant 0 : index
    %332 = memref.load %arg7[%c9, %c0_174] : memref<16x9xf32, #tpu.memory_space<smem>>
    %333 = vector.broadcast %332 : f32 to vector<16x32xf32>
    %334 = arith.mulf %333, %323 : vector<16x32xf32>
    %335 = arith.addf %318, %334 : vector<16x32xf32>
    %c13 = arith.constant 13 : index
    %c0_175 = arith.constant 0 : index
    %336 = memref.load %arg7[%c13, %c0_175] : memref<16x9xf32, #tpu.memory_space<smem>>
    %337 = vector.broadcast %336 : f32 to vector<16x32xf32>
    %338 = arith.mulf %337, %323 : vector<16x32xf32>
    %339 = arith.addf %322, %338 : vector<16x32xf32>
    %340 = vector.extract_strided_slice %89 {offsets = [0, 1], sizes = [16, 32], strides = [1, 1]} : vector<18x34xf32> to vector<16x32xf32>
    %c1_176 = arith.constant 1 : index
    %c1_177 = arith.constant 1 : index
    %341 = memref.load %arg7[%c1_176, %c1_177] : memref<16x9xf32, #tpu.memory_space<smem>>
    %342 = vector.broadcast %341 : f32 to vector<16x32xf32>
    %343 = arith.mulf %342, %340 : vector<16x32xf32>
    %344 = arith.addf %327, %343 : vector<16x32xf32>
    %c5_178 = arith.constant 5 : index
    %c1_179 = arith.constant 1 : index
    %345 = memref.load %arg7[%c5_178, %c1_179] : memref<16x9xf32, #tpu.memory_space<smem>>
    %346 = vector.broadcast %345 : f32 to vector<16x32xf32>
    %347 = arith.mulf %346, %340 : vector<16x32xf32>
    %348 = arith.addf %331, %347 : vector<16x32xf32>
    %c9_180 = arith.constant 9 : index
    %c1_181 = arith.constant 1 : index
    %349 = memref.load %arg7[%c9_180, %c1_181] : memref<16x9xf32, #tpu.memory_space<smem>>
    %350 = vector.broadcast %349 : f32 to vector<16x32xf32>
    %351 = arith.mulf %350, %340 : vector<16x32xf32>
    %352 = arith.addf %335, %351 : vector<16x32xf32>
    %c13_182 = arith.constant 13 : index
    %c1_183 = arith.constant 1 : index
    %353 = memref.load %arg7[%c13_182, %c1_183] : memref<16x9xf32, #tpu.memory_space<smem>>
    %354 = vector.broadcast %353 : f32 to vector<16x32xf32>
    %355 = arith.mulf %354, %340 : vector<16x32xf32>
    %356 = arith.addf %339, %355 : vector<16x32xf32>
    %357 = vector.extract_strided_slice %89 {offsets = [0, 2], sizes = [16, 32], strides = [1, 1]} : vector<18x34xf32> to vector<16x32xf32>
    %c1_184 = arith.constant 1 : index
    %c2_185 = arith.constant 2 : index
    %358 = memref.load %arg7[%c1_184, %c2_185] : memref<16x9xf32, #tpu.memory_space<smem>>
    %359 = vector.broadcast %358 : f32 to vector<16x32xf32>
    %360 = arith.mulf %359, %357 : vector<16x32xf32>
    %361 = arith.addf %344, %360 : vector<16x32xf32>
    %c5_186 = arith.constant 5 : index
    %c2_187 = arith.constant 2 : index
    %362 = memref.load %arg7[%c5_186, %c2_187] : memref<16x9xf32, #tpu.memory_space<smem>>
    %363 = vector.broadcast %362 : f32 to vector<16x32xf32>
    %364 = arith.mulf %363, %357 : vector<16x32xf32>
    %365 = arith.addf %348, %364 : vector<16x32xf32>
    %c9_188 = arith.constant 9 : index
    %c2_189 = arith.constant 2 : index
    %366 = memref.load %arg7[%c9_188, %c2_189] : memref<16x9xf32, #tpu.memory_space<smem>>
    %367 = vector.broadcast %366 : f32 to vector<16x32xf32>
    %368 = arith.mulf %367, %357 : vector<16x32xf32>
    %369 = arith.addf %352, %368 : vector<16x32xf32>
    %c13_190 = arith.constant 13 : index
    %c2_191 = arith.constant 2 : index
    %370 = memref.load %arg7[%c13_190, %c2_191] : memref<16x9xf32, #tpu.memory_space<smem>>
    %371 = vector.broadcast %370 : f32 to vector<16x32xf32>
    %372 = arith.mulf %371, %357 : vector<16x32xf32>
    %373 = arith.addf %356, %372 : vector<16x32xf32>
    %374 = vector.extract_strided_slice %89 {offsets = [1, 0], sizes = [16, 32], strides = [1, 1]} : vector<18x34xf32> to vector<16x32xf32>
    %c1_192 = arith.constant 1 : index
    %c3_193 = arith.constant 3 : index
    %375 = memref.load %arg7[%c1_192, %c3_193] : memref<16x9xf32, #tpu.memory_space<smem>>
    %376 = vector.broadcast %375 : f32 to vector<16x32xf32>
    %377 = arith.mulf %376, %374 : vector<16x32xf32>
    %378 = arith.addf %361, %377 : vector<16x32xf32>
    %c5_194 = arith.constant 5 : index
    %c3_195 = arith.constant 3 : index
    %379 = memref.load %arg7[%c5_194, %c3_195] : memref<16x9xf32, #tpu.memory_space<smem>>
    %380 = vector.broadcast %379 : f32 to vector<16x32xf32>
    %381 = arith.mulf %380, %374 : vector<16x32xf32>
    %382 = arith.addf %365, %381 : vector<16x32xf32>
    %c9_196 = arith.constant 9 : index
    %c3_197 = arith.constant 3 : index
    %383 = memref.load %arg7[%c9_196, %c3_197] : memref<16x9xf32, #tpu.memory_space<smem>>
    %384 = vector.broadcast %383 : f32 to vector<16x32xf32>
    %385 = arith.mulf %384, %374 : vector<16x32xf32>
    %386 = arith.addf %369, %385 : vector<16x32xf32>
    %c13_198 = arith.constant 13 : index
    %c3_199 = arith.constant 3 : index
    %387 = memref.load %arg7[%c13_198, %c3_199] : memref<16x9xf32, #tpu.memory_space<smem>>
    %388 = vector.broadcast %387 : f32 to vector<16x32xf32>
    %389 = arith.mulf %388, %374 : vector<16x32xf32>
    %390 = arith.addf %373, %389 : vector<16x32xf32>
    %391 = vector.extract_strided_slice %89 {offsets = [1, 1], sizes = [16, 32], strides = [1, 1]} : vector<18x34xf32> to vector<16x32xf32>
    %c1_200 = arith.constant 1 : index
    %c4_201 = arith.constant 4 : index
    %392 = memref.load %arg7[%c1_200, %c4_201] : memref<16x9xf32, #tpu.memory_space<smem>>
    %393 = vector.broadcast %392 : f32 to vector<16x32xf32>
    %394 = arith.mulf %393, %391 : vector<16x32xf32>
    %395 = arith.addf %378, %394 : vector<16x32xf32>
    %c5_202 = arith.constant 5 : index
    %c4_203 = arith.constant 4 : index
    %396 = memref.load %arg7[%c5_202, %c4_203] : memref<16x9xf32, #tpu.memory_space<smem>>
    %397 = vector.broadcast %396 : f32 to vector<16x32xf32>
    %398 = arith.mulf %397, %391 : vector<16x32xf32>
    %399 = arith.addf %382, %398 : vector<16x32xf32>
    %c9_204 = arith.constant 9 : index
    %c4_205 = arith.constant 4 : index
    %400 = memref.load %arg7[%c9_204, %c4_205] : memref<16x9xf32, #tpu.memory_space<smem>>
    %401 = vector.broadcast %400 : f32 to vector<16x32xf32>
    %402 = arith.mulf %401, %391 : vector<16x32xf32>
    %403 = arith.addf %386, %402 : vector<16x32xf32>
    %c13_206 = arith.constant 13 : index
    %c4_207 = arith.constant 4 : index
    %404 = memref.load %arg7[%c13_206, %c4_207] : memref<16x9xf32, #tpu.memory_space<smem>>
    %405 = vector.broadcast %404 : f32 to vector<16x32xf32>
    %406 = arith.mulf %405, %391 : vector<16x32xf32>
    %407 = arith.addf %390, %406 : vector<16x32xf32>
    %408 = vector.extract_strided_slice %89 {offsets = [1, 2], sizes = [16, 32], strides = [1, 1]} : vector<18x34xf32> to vector<16x32xf32>
    %c1_208 = arith.constant 1 : index
    %c5_209 = arith.constant 5 : index
    %409 = memref.load %arg7[%c1_208, %c5_209] : memref<16x9xf32, #tpu.memory_space<smem>>
    %410 = vector.broadcast %409 : f32 to vector<16x32xf32>
    %411 = arith.mulf %410, %408 : vector<16x32xf32>
    %412 = arith.addf %395, %411 : vector<16x32xf32>
    %c5_210 = arith.constant 5 : index
    %c5_211 = arith.constant 5 : index
    %413 = memref.load %arg7[%c5_210, %c5_211] : memref<16x9xf32, #tpu.memory_space<smem>>
    %414 = vector.broadcast %413 : f32 to vector<16x32xf32>
    %415 = arith.mulf %414, %408 : vector<16x32xf32>
    %416 = arith.addf %399, %415 : vector<16x32xf32>
    %c9_212 = arith.constant 9 : index
    %c5_213 = arith.constant 5 : index
    %417 = memref.load %arg7[%c9_212, %c5_213] : memref<16x9xf32, #tpu.memory_space<smem>>
    %418 = vector.broadcast %417 : f32 to vector<16x32xf32>
    %419 = arith.mulf %418, %408 : vector<16x32xf32>
    %420 = arith.addf %403, %419 : vector<16x32xf32>
    %c13_214 = arith.constant 13 : index
    %c5_215 = arith.constant 5 : index
    %421 = memref.load %arg7[%c13_214, %c5_215] : memref<16x9xf32, #tpu.memory_space<smem>>
    %422 = vector.broadcast %421 : f32 to vector<16x32xf32>
    %423 = arith.mulf %422, %408 : vector<16x32xf32>
    %424 = arith.addf %407, %423 : vector<16x32xf32>
    %425 = vector.extract_strided_slice %89 {offsets = [2, 0], sizes = [16, 32], strides = [1, 1]} : vector<18x34xf32> to vector<16x32xf32>
    %c1_216 = arith.constant 1 : index
    %c6_217 = arith.constant 6 : index
    %426 = memref.load %arg7[%c1_216, %c6_217] : memref<16x9xf32, #tpu.memory_space<smem>>
    %427 = vector.broadcast %426 : f32 to vector<16x32xf32>
    %428 = arith.mulf %427, %425 : vector<16x32xf32>
    %429 = arith.addf %412, %428 : vector<16x32xf32>
    %c5_218 = arith.constant 5 : index
    %c6_219 = arith.constant 6 : index
    %430 = memref.load %arg7[%c5_218, %c6_219] : memref<16x9xf32, #tpu.memory_space<smem>>
    %431 = vector.broadcast %430 : f32 to vector<16x32xf32>
    %432 = arith.mulf %431, %425 : vector<16x32xf32>
    %433 = arith.addf %416, %432 : vector<16x32xf32>
    %c9_220 = arith.constant 9 : index
    %c6_221 = arith.constant 6 : index
    %434 = memref.load %arg7[%c9_220, %c6_221] : memref<16x9xf32, #tpu.memory_space<smem>>
    %435 = vector.broadcast %434 : f32 to vector<16x32xf32>
    %436 = arith.mulf %435, %425 : vector<16x32xf32>
    %437 = arith.addf %420, %436 : vector<16x32xf32>
    %c13_222 = arith.constant 13 : index
    %c6_223 = arith.constant 6 : index
    %438 = memref.load %arg7[%c13_222, %c6_223] : memref<16x9xf32, #tpu.memory_space<smem>>
    %439 = vector.broadcast %438 : f32 to vector<16x32xf32>
    %440 = arith.mulf %439, %425 : vector<16x32xf32>
    %441 = arith.addf %424, %440 : vector<16x32xf32>
    %442 = vector.extract_strided_slice %89 {offsets = [2, 1], sizes = [16, 32], strides = [1, 1]} : vector<18x34xf32> to vector<16x32xf32>
    %c1_224 = arith.constant 1 : index
    %c7_225 = arith.constant 7 : index
    %443 = memref.load %arg7[%c1_224, %c7_225] : memref<16x9xf32, #tpu.memory_space<smem>>
    %444 = vector.broadcast %443 : f32 to vector<16x32xf32>
    %445 = arith.mulf %444, %442 : vector<16x32xf32>
    %446 = arith.addf %429, %445 : vector<16x32xf32>
    %c5_226 = arith.constant 5 : index
    %c7_227 = arith.constant 7 : index
    %447 = memref.load %arg7[%c5_226, %c7_227] : memref<16x9xf32, #tpu.memory_space<smem>>
    %448 = vector.broadcast %447 : f32 to vector<16x32xf32>
    %449 = arith.mulf %448, %442 : vector<16x32xf32>
    %450 = arith.addf %433, %449 : vector<16x32xf32>
    %c9_228 = arith.constant 9 : index
    %c7_229 = arith.constant 7 : index
    %451 = memref.load %arg7[%c9_228, %c7_229] : memref<16x9xf32, #tpu.memory_space<smem>>
    %452 = vector.broadcast %451 : f32 to vector<16x32xf32>
    %453 = arith.mulf %452, %442 : vector<16x32xf32>
    %454 = arith.addf %437, %453 : vector<16x32xf32>
    %c13_230 = arith.constant 13 : index
    %c7_231 = arith.constant 7 : index
    %455 = memref.load %arg7[%c13_230, %c7_231] : memref<16x9xf32, #tpu.memory_space<smem>>
    %456 = vector.broadcast %455 : f32 to vector<16x32xf32>
    %457 = arith.mulf %456, %442 : vector<16x32xf32>
    %458 = arith.addf %441, %457 : vector<16x32xf32>
    %459 = vector.extract_strided_slice %89 {offsets = [2, 2], sizes = [16, 32], strides = [1, 1]} : vector<18x34xf32> to vector<16x32xf32>
    %c1_232 = arith.constant 1 : index
    %c8_233 = arith.constant 8 : index
    %460 = memref.load %arg7[%c1_232, %c8_233] : memref<16x9xf32, #tpu.memory_space<smem>>
    %461 = vector.broadcast %460 : f32 to vector<16x32xf32>
    %462 = arith.mulf %461, %459 : vector<16x32xf32>
    %463 = arith.addf %446, %462 : vector<16x32xf32>
    %c5_234 = arith.constant 5 : index
    %c8_235 = arith.constant 8 : index
    %464 = memref.load %arg7[%c5_234, %c8_235] : memref<16x9xf32, #tpu.memory_space<smem>>
    %465 = vector.broadcast %464 : f32 to vector<16x32xf32>
    %466 = arith.mulf %465, %459 : vector<16x32xf32>
    %467 = arith.addf %450, %466 : vector<16x32xf32>
    %c9_236 = arith.constant 9 : index
    %c8_237 = arith.constant 8 : index
    %468 = memref.load %arg7[%c9_236, %c8_237] : memref<16x9xf32, #tpu.memory_space<smem>>
    %469 = vector.broadcast %468 : f32 to vector<16x32xf32>
    %470 = arith.mulf %469, %459 : vector<16x32xf32>
    %471 = arith.addf %454, %470 : vector<16x32xf32>
    %c13_238 = arith.constant 13 : index
    %c8_239 = arith.constant 8 : index
    %472 = memref.load %arg7[%c13_238, %c8_239] : memref<16x9xf32, #tpu.memory_space<smem>>
    %473 = vector.broadcast %472 : f32 to vector<16x32xf32>
    %474 = arith.mulf %473, %459 : vector<16x32xf32>
    %475 = arith.addf %458, %474 : vector<16x32xf32>
    %476 = vector.extract_strided_slice %127 {offsets = [0, 0], sizes = [16, 32], strides = [1, 1]} : vector<18x34xf32> to vector<16x32xf32>
    %c2_240 = arith.constant 2 : index
    %c0_241 = arith.constant 0 : index
    %477 = memref.load %arg7[%c2_240, %c0_241] : memref<16x9xf32, #tpu.memory_space<smem>>
    %478 = vector.broadcast %477 : f32 to vector<16x32xf32>
    %479 = arith.mulf %478, %476 : vector<16x32xf32>
    %480 = arith.addf %463, %479 : vector<16x32xf32>
    %c6_242 = arith.constant 6 : index
    %c0_243 = arith.constant 0 : index
    %481 = memref.load %arg7[%c6_242, %c0_243] : memref<16x9xf32, #tpu.memory_space<smem>>
    %482 = vector.broadcast %481 : f32 to vector<16x32xf32>
    %483 = arith.mulf %482, %476 : vector<16x32xf32>
    %484 = arith.addf %467, %483 : vector<16x32xf32>
    %c10 = arith.constant 10 : index
    %c0_244 = arith.constant 0 : index
    %485 = memref.load %arg7[%c10, %c0_244] : memref<16x9xf32, #tpu.memory_space<smem>>
    %486 = vector.broadcast %485 : f32 to vector<16x32xf32>
    %487 = arith.mulf %486, %476 : vector<16x32xf32>
    %488 = arith.addf %471, %487 : vector<16x32xf32>
    %c14 = arith.constant 14 : index
    %c0_245 = arith.constant 0 : index
    %489 = memref.load %arg7[%c14, %c0_245] : memref<16x9xf32, #tpu.memory_space<smem>>
    %490 = vector.broadcast %489 : f32 to vector<16x32xf32>
    %491 = arith.mulf %490, %476 : vector<16x32xf32>
    %492 = arith.addf %475, %491 : vector<16x32xf32>
    %493 = vector.extract_strided_slice %127 {offsets = [0, 1], sizes = [16, 32], strides = [1, 1]} : vector<18x34xf32> to vector<16x32xf32>
    %c2_246 = arith.constant 2 : index
    %c1_247 = arith.constant 1 : index
    %494 = memref.load %arg7[%c2_246, %c1_247] : memref<16x9xf32, #tpu.memory_space<smem>>
    %495 = vector.broadcast %494 : f32 to vector<16x32xf32>
    %496 = arith.mulf %495, %493 : vector<16x32xf32>
    %497 = arith.addf %480, %496 : vector<16x32xf32>
    %c6_248 = arith.constant 6 : index
    %c1_249 = arith.constant 1 : index
    %498 = memref.load %arg7[%c6_248, %c1_249] : memref<16x9xf32, #tpu.memory_space<smem>>
    %499 = vector.broadcast %498 : f32 to vector<16x32xf32>
    %500 = arith.mulf %499, %493 : vector<16x32xf32>
    %501 = arith.addf %484, %500 : vector<16x32xf32>
    %c10_250 = arith.constant 10 : index
    %c1_251 = arith.constant 1 : index
    %502 = memref.load %arg7[%c10_250, %c1_251] : memref<16x9xf32, #tpu.memory_space<smem>>
    %503 = vector.broadcast %502 : f32 to vector<16x32xf32>
    %504 = arith.mulf %503, %493 : vector<16x32xf32>
    %505 = arith.addf %488, %504 : vector<16x32xf32>
    %c14_252 = arith.constant 14 : index
    %c1_253 = arith.constant 1 : index
    %506 = memref.load %arg7[%c14_252, %c1_253] : memref<16x9xf32, #tpu.memory_space<smem>>
    %507 = vector.broadcast %506 : f32 to vector<16x32xf32>
    %508 = arith.mulf %507, %493 : vector<16x32xf32>
    %509 = arith.addf %492, %508 : vector<16x32xf32>
    %510 = vector.extract_strided_slice %127 {offsets = [0, 2], sizes = [16, 32], strides = [1, 1]} : vector<18x34xf32> to vector<16x32xf32>
    %c2_254 = arith.constant 2 : index
    %c2_255 = arith.constant 2 : index
    %511 = memref.load %arg7[%c2_254, %c2_255] : memref<16x9xf32, #tpu.memory_space<smem>>
    %512 = vector.broadcast %511 : f32 to vector<16x32xf32>
    %513 = arith.mulf %512, %510 : vector<16x32xf32>
    %514 = arith.addf %497, %513 : vector<16x32xf32>
    %c6_256 = arith.constant 6 : index
    %c2_257 = arith.constant 2 : index
    %515 = memref.load %arg7[%c6_256, %c2_257] : memref<16x9xf32, #tpu.memory_space<smem>>
    %516 = vector.broadcast %515 : f32 to vector<16x32xf32>
    %517 = arith.mulf %516, %510 : vector<16x32xf32>
    %518 = arith.addf %501, %517 : vector<16x32xf32>
    %c10_258 = arith.constant 10 : index
    %c2_259 = arith.constant 2 : index
    %519 = memref.load %arg7[%c10_258, %c2_259] : memref<16x9xf32, #tpu.memory_space<smem>>
    %520 = vector.broadcast %519 : f32 to vector<16x32xf32>
    %521 = arith.mulf %520, %510 : vector<16x32xf32>
    %522 = arith.addf %505, %521 : vector<16x32xf32>
    %c14_260 = arith.constant 14 : index
    %c2_261 = arith.constant 2 : index
    %523 = memref.load %arg7[%c14_260, %c2_261] : memref<16x9xf32, #tpu.memory_space<smem>>
    %524 = vector.broadcast %523 : f32 to vector<16x32xf32>
    %525 = arith.mulf %524, %510 : vector<16x32xf32>
    %526 = arith.addf %509, %525 : vector<16x32xf32>
    %527 = vector.extract_strided_slice %127 {offsets = [1, 0], sizes = [16, 32], strides = [1, 1]} : vector<18x34xf32> to vector<16x32xf32>
    %c2_262 = arith.constant 2 : index
    %c3_263 = arith.constant 3 : index
    %528 = memref.load %arg7[%c2_262, %c3_263] : memref<16x9xf32, #tpu.memory_space<smem>>
    %529 = vector.broadcast %528 : f32 to vector<16x32xf32>
    %530 = arith.mulf %529, %527 : vector<16x32xf32>
    %531 = arith.addf %514, %530 : vector<16x32xf32>
    %c6_264 = arith.constant 6 : index
    %c3_265 = arith.constant 3 : index
    %532 = memref.load %arg7[%c6_264, %c3_265] : memref<16x9xf32, #tpu.memory_space<smem>>
    %533 = vector.broadcast %532 : f32 to vector<16x32xf32>
    %534 = arith.mulf %533, %527 : vector<16x32xf32>
    %535 = arith.addf %518, %534 : vector<16x32xf32>
    %c10_266 = arith.constant 10 : index
    %c3_267 = arith.constant 3 : index
    %536 = memref.load %arg7[%c10_266, %c3_267] : memref<16x9xf32, #tpu.memory_space<smem>>
    %537 = vector.broadcast %536 : f32 to vector<16x32xf32>
    %538 = arith.mulf %537, %527 : vector<16x32xf32>
    %539 = arith.addf %522, %538 : vector<16x32xf32>
    %c14_268 = arith.constant 14 : index
    %c3_269 = arith.constant 3 : index
    %540 = memref.load %arg7[%c14_268, %c3_269] : memref<16x9xf32, #tpu.memory_space<smem>>
    %541 = vector.broadcast %540 : f32 to vector<16x32xf32>
    %542 = arith.mulf %541, %527 : vector<16x32xf32>
    %543 = arith.addf %526, %542 : vector<16x32xf32>
    %544 = vector.extract_strided_slice %127 {offsets = [1, 1], sizes = [16, 32], strides = [1, 1]} : vector<18x34xf32> to vector<16x32xf32>
    %c2_270 = arith.constant 2 : index
    %c4_271 = arith.constant 4 : index
    %545 = memref.load %arg7[%c2_270, %c4_271] : memref<16x9xf32, #tpu.memory_space<smem>>
    %546 = vector.broadcast %545 : f32 to vector<16x32xf32>
    %547 = arith.mulf %546, %544 : vector<16x32xf32>
    %548 = arith.addf %531, %547 : vector<16x32xf32>
    %c6_272 = arith.constant 6 : index
    %c4_273 = arith.constant 4 : index
    %549 = memref.load %arg7[%c6_272, %c4_273] : memref<16x9xf32, #tpu.memory_space<smem>>
    %550 = vector.broadcast %549 : f32 to vector<16x32xf32>
    %551 = arith.mulf %550, %544 : vector<16x32xf32>
    %552 = arith.addf %535, %551 : vector<16x32xf32>
    %c10_274 = arith.constant 10 : index
    %c4_275 = arith.constant 4 : index
    %553 = memref.load %arg7[%c10_274, %c4_275] : memref<16x9xf32, #tpu.memory_space<smem>>
    %554 = vector.broadcast %553 : f32 to vector<16x32xf32>
    %555 = arith.mulf %554, %544 : vector<16x32xf32>
    %556 = arith.addf %539, %555 : vector<16x32xf32>
    %c14_276 = arith.constant 14 : index
    %c4_277 = arith.constant 4 : index
    %557 = memref.load %arg7[%c14_276, %c4_277] : memref<16x9xf32, #tpu.memory_space<smem>>
    %558 = vector.broadcast %557 : f32 to vector<16x32xf32>
    %559 = arith.mulf %558, %544 : vector<16x32xf32>
    %560 = arith.addf %543, %559 : vector<16x32xf32>
    %561 = vector.extract_strided_slice %127 {offsets = [1, 2], sizes = [16, 32], strides = [1, 1]} : vector<18x34xf32> to vector<16x32xf32>
    %c2_278 = arith.constant 2 : index
    %c5_279 = arith.constant 5 : index
    %562 = memref.load %arg7[%c2_278, %c5_279] : memref<16x9xf32, #tpu.memory_space<smem>>
    %563 = vector.broadcast %562 : f32 to vector<16x32xf32>
    %564 = arith.mulf %563, %561 : vector<16x32xf32>
    %565 = arith.addf %548, %564 : vector<16x32xf32>
    %c6_280 = arith.constant 6 : index
    %c5_281 = arith.constant 5 : index
    %566 = memref.load %arg7[%c6_280, %c5_281] : memref<16x9xf32, #tpu.memory_space<smem>>
    %567 = vector.broadcast %566 : f32 to vector<16x32xf32>
    %568 = arith.mulf %567, %561 : vector<16x32xf32>
    %569 = arith.addf %552, %568 : vector<16x32xf32>
    %c10_282 = arith.constant 10 : index
    %c5_283 = arith.constant 5 : index
    %570 = memref.load %arg7[%c10_282, %c5_283] : memref<16x9xf32, #tpu.memory_space<smem>>
    %571 = vector.broadcast %570 : f32 to vector<16x32xf32>
    %572 = arith.mulf %571, %561 : vector<16x32xf32>
    %573 = arith.addf %556, %572 : vector<16x32xf32>
    %c14_284 = arith.constant 14 : index
    %c5_285 = arith.constant 5 : index
    %574 = memref.load %arg7[%c14_284, %c5_285] : memref<16x9xf32, #tpu.memory_space<smem>>
    %575 = vector.broadcast %574 : f32 to vector<16x32xf32>
    %576 = arith.mulf %575, %561 : vector<16x32xf32>
    %577 = arith.addf %560, %576 : vector<16x32xf32>
    %578 = vector.extract_strided_slice %127 {offsets = [2, 0], sizes = [16, 32], strides = [1, 1]} : vector<18x34xf32> to vector<16x32xf32>
    %c2_286 = arith.constant 2 : index
    %c6_287 = arith.constant 6 : index
    %579 = memref.load %arg7[%c2_286, %c6_287] : memref<16x9xf32, #tpu.memory_space<smem>>
    %580 = vector.broadcast %579 : f32 to vector<16x32xf32>
    %581 = arith.mulf %580, %578 : vector<16x32xf32>
    %582 = arith.addf %565, %581 : vector<16x32xf32>
    %c6_288 = arith.constant 6 : index
    %c6_289 = arith.constant 6 : index
    %583 = memref.load %arg7[%c6_288, %c6_289] : memref<16x9xf32, #tpu.memory_space<smem>>
    %584 = vector.broadcast %583 : f32 to vector<16x32xf32>
    %585 = arith.mulf %584, %578 : vector<16x32xf32>
    %586 = arith.addf %569, %585 : vector<16x32xf32>
    %c10_290 = arith.constant 10 : index
    %c6_291 = arith.constant 6 : index
    %587 = memref.load %arg7[%c10_290, %c6_291] : memref<16x9xf32, #tpu.memory_space<smem>>
    %588 = vector.broadcast %587 : f32 to vector<16x32xf32>
    %589 = arith.mulf %588, %578 : vector<16x32xf32>
    %590 = arith.addf %573, %589 : vector<16x32xf32>
    %c14_292 = arith.constant 14 : index
    %c6_293 = arith.constant 6 : index
    %591 = memref.load %arg7[%c14_292, %c6_293] : memref<16x9xf32, #tpu.memory_space<smem>>
    %592 = vector.broadcast %591 : f32 to vector<16x32xf32>
    %593 = arith.mulf %592, %578 : vector<16x32xf32>
    %594 = arith.addf %577, %593 : vector<16x32xf32>
    %595 = vector.extract_strided_slice %127 {offsets = [2, 1], sizes = [16, 32], strides = [1, 1]} : vector<18x34xf32> to vector<16x32xf32>
    %c2_294 = arith.constant 2 : index
    %c7_295 = arith.constant 7 : index
    %596 = memref.load %arg7[%c2_294, %c7_295] : memref<16x9xf32, #tpu.memory_space<smem>>
    %597 = vector.broadcast %596 : f32 to vector<16x32xf32>
    %598 = arith.mulf %597, %595 : vector<16x32xf32>
    %599 = arith.addf %582, %598 : vector<16x32xf32>
    %c6_296 = arith.constant 6 : index
    %c7_297 = arith.constant 7 : index
    %600 = memref.load %arg7[%c6_296, %c7_297] : memref<16x9xf32, #tpu.memory_space<smem>>
    %601 = vector.broadcast %600 : f32 to vector<16x32xf32>
    %602 = arith.mulf %601, %595 : vector<16x32xf32>
    %603 = arith.addf %586, %602 : vector<16x32xf32>
    %c10_298 = arith.constant 10 : index
    %c7_299 = arith.constant 7 : index
    %604 = memref.load %arg7[%c10_298, %c7_299] : memref<16x9xf32, #tpu.memory_space<smem>>
    %605 = vector.broadcast %604 : f32 to vector<16x32xf32>
    %606 = arith.mulf %605, %595 : vector<16x32xf32>
    %607 = arith.addf %590, %606 : vector<16x32xf32>
    %c14_300 = arith.constant 14 : index
    %c7_301 = arith.constant 7 : index
    %608 = memref.load %arg7[%c14_300, %c7_301] : memref<16x9xf32, #tpu.memory_space<smem>>
    %609 = vector.broadcast %608 : f32 to vector<16x32xf32>
    %610 = arith.mulf %609, %595 : vector<16x32xf32>
    %611 = arith.addf %594, %610 : vector<16x32xf32>
    %612 = vector.extract_strided_slice %127 {offsets = [2, 2], sizes = [16, 32], strides = [1, 1]} : vector<18x34xf32> to vector<16x32xf32>
    %c2_302 = arith.constant 2 : index
    %c8_303 = arith.constant 8 : index
    %613 = memref.load %arg7[%c2_302, %c8_303] : memref<16x9xf32, #tpu.memory_space<smem>>
    %614 = vector.broadcast %613 : f32 to vector<16x32xf32>
    %615 = arith.mulf %614, %612 : vector<16x32xf32>
    %616 = arith.addf %599, %615 : vector<16x32xf32>
    %c6_304 = arith.constant 6 : index
    %c8_305 = arith.constant 8 : index
    %617 = memref.load %arg7[%c6_304, %c8_305] : memref<16x9xf32, #tpu.memory_space<smem>>
    %618 = vector.broadcast %617 : f32 to vector<16x32xf32>
    %619 = arith.mulf %618, %612 : vector<16x32xf32>
    %620 = arith.addf %603, %619 : vector<16x32xf32>
    %c10_306 = arith.constant 10 : index
    %c8_307 = arith.constant 8 : index
    %621 = memref.load %arg7[%c10_306, %c8_307] : memref<16x9xf32, #tpu.memory_space<smem>>
    %622 = vector.broadcast %621 : f32 to vector<16x32xf32>
    %623 = arith.mulf %622, %612 : vector<16x32xf32>
    %624 = arith.addf %607, %623 : vector<16x32xf32>
    %c14_308 = arith.constant 14 : index
    %c8_309 = arith.constant 8 : index
    %625 = memref.load %arg7[%c14_308, %c8_309] : memref<16x9xf32, #tpu.memory_space<smem>>
    %626 = vector.broadcast %625 : f32 to vector<16x32xf32>
    %627 = arith.mulf %626, %612 : vector<16x32xf32>
    %628 = arith.addf %611, %627 : vector<16x32xf32>
    %629 = vector.extract_strided_slice %165 {offsets = [0, 0], sizes = [16, 32], strides = [1, 1]} : vector<18x34xf32> to vector<16x32xf32>
    %c3_310 = arith.constant 3 : index
    %c0_311 = arith.constant 0 : index
    %630 = memref.load %arg7[%c3_310, %c0_311] : memref<16x9xf32, #tpu.memory_space<smem>>
    %631 = vector.broadcast %630 : f32 to vector<16x32xf32>
    %632 = arith.mulf %631, %629 : vector<16x32xf32>
    %633 = arith.addf %616, %632 : vector<16x32xf32>
    %c7_312 = arith.constant 7 : index
    %c0_313 = arith.constant 0 : index
    %634 = memref.load %arg7[%c7_312, %c0_313] : memref<16x9xf32, #tpu.memory_space<smem>>
    %635 = vector.broadcast %634 : f32 to vector<16x32xf32>
    %636 = arith.mulf %635, %629 : vector<16x32xf32>
    %637 = arith.addf %620, %636 : vector<16x32xf32>
    %c11 = arith.constant 11 : index
    %c0_314 = arith.constant 0 : index
    %638 = memref.load %arg7[%c11, %c0_314] : memref<16x9xf32, #tpu.memory_space<smem>>
    %639 = vector.broadcast %638 : f32 to vector<16x32xf32>
    %640 = arith.mulf %639, %629 : vector<16x32xf32>
    %641 = arith.addf %624, %640 : vector<16x32xf32>
    %c15 = arith.constant 15 : index
    %c0_315 = arith.constant 0 : index
    %642 = memref.load %arg7[%c15, %c0_315] : memref<16x9xf32, #tpu.memory_space<smem>>
    %643 = vector.broadcast %642 : f32 to vector<16x32xf32>
    %644 = arith.mulf %643, %629 : vector<16x32xf32>
    %645 = arith.addf %628, %644 : vector<16x32xf32>
    %646 = vector.extract_strided_slice %165 {offsets = [0, 1], sizes = [16, 32], strides = [1, 1]} : vector<18x34xf32> to vector<16x32xf32>
    %c3_316 = arith.constant 3 : index
    %c1_317 = arith.constant 1 : index
    %647 = memref.load %arg7[%c3_316, %c1_317] : memref<16x9xf32, #tpu.memory_space<smem>>
    %648 = vector.broadcast %647 : f32 to vector<16x32xf32>
    %649 = arith.mulf %648, %646 : vector<16x32xf32>
    %650 = arith.addf %633, %649 : vector<16x32xf32>
    %c7_318 = arith.constant 7 : index
    %c1_319 = arith.constant 1 : index
    %651 = memref.load %arg7[%c7_318, %c1_319] : memref<16x9xf32, #tpu.memory_space<smem>>
    %652 = vector.broadcast %651 : f32 to vector<16x32xf32>
    %653 = arith.mulf %652, %646 : vector<16x32xf32>
    %654 = arith.addf %637, %653 : vector<16x32xf32>
    %c11_320 = arith.constant 11 : index
    %c1_321 = arith.constant 1 : index
    %655 = memref.load %arg7[%c11_320, %c1_321] : memref<16x9xf32, #tpu.memory_space<smem>>
    %656 = vector.broadcast %655 : f32 to vector<16x32xf32>
    %657 = arith.mulf %656, %646 : vector<16x32xf32>
    %658 = arith.addf %641, %657 : vector<16x32xf32>
    %c15_322 = arith.constant 15 : index
    %c1_323 = arith.constant 1 : index
    %659 = memref.load %arg7[%c15_322, %c1_323] : memref<16x9xf32, #tpu.memory_space<smem>>
    %660 = vector.broadcast %659 : f32 to vector<16x32xf32>
    %661 = arith.mulf %660, %646 : vector<16x32xf32>
    %662 = arith.addf %645, %661 : vector<16x32xf32>
    %663 = vector.extract_strided_slice %165 {offsets = [0, 2], sizes = [16, 32], strides = [1, 1]} : vector<18x34xf32> to vector<16x32xf32>
    %c3_324 = arith.constant 3 : index
    %c2_325 = arith.constant 2 : index
    %664 = memref.load %arg7[%c3_324, %c2_325] : memref<16x9xf32, #tpu.memory_space<smem>>
    %665 = vector.broadcast %664 : f32 to vector<16x32xf32>
    %666 = arith.mulf %665, %663 : vector<16x32xf32>
    %667 = arith.addf %650, %666 : vector<16x32xf32>
    %c7_326 = arith.constant 7 : index
    %c2_327 = arith.constant 2 : index
    %668 = memref.load %arg7[%c7_326, %c2_327] : memref<16x9xf32, #tpu.memory_space<smem>>
    %669 = vector.broadcast %668 : f32 to vector<16x32xf32>
    %670 = arith.mulf %669, %663 : vector<16x32xf32>
    %671 = arith.addf %654, %670 : vector<16x32xf32>
    %c11_328 = arith.constant 11 : index
    %c2_329 = arith.constant 2 : index
    %672 = memref.load %arg7[%c11_328, %c2_329] : memref<16x9xf32, #tpu.memory_space<smem>>
    %673 = vector.broadcast %672 : f32 to vector<16x32xf32>
    %674 = arith.mulf %673, %663 : vector<16x32xf32>
    %675 = arith.addf %658, %674 : vector<16x32xf32>
    %c15_330 = arith.constant 15 : index
    %c2_331 = arith.constant 2 : index
    %676 = memref.load %arg7[%c15_330, %c2_331] : memref<16x9xf32, #tpu.memory_space<smem>>
    %677 = vector.broadcast %676 : f32 to vector<16x32xf32>
    %678 = arith.mulf %677, %663 : vector<16x32xf32>
    %679 = arith.addf %662, %678 : vector<16x32xf32>
    %680 = vector.extract_strided_slice %165 {offsets = [1, 0], sizes = [16, 32], strides = [1, 1]} : vector<18x34xf32> to vector<16x32xf32>
    %c3_332 = arith.constant 3 : index
    %c3_333 = arith.constant 3 : index
    %681 = memref.load %arg7[%c3_332, %c3_333] : memref<16x9xf32, #tpu.memory_space<smem>>
    %682 = vector.broadcast %681 : f32 to vector<16x32xf32>
    %683 = arith.mulf %682, %680 : vector<16x32xf32>
    %684 = arith.addf %667, %683 : vector<16x32xf32>
    %c7_334 = arith.constant 7 : index
    %c3_335 = arith.constant 3 : index
    %685 = memref.load %arg7[%c7_334, %c3_335] : memref<16x9xf32, #tpu.memory_space<smem>>
    %686 = vector.broadcast %685 : f32 to vector<16x32xf32>
    %687 = arith.mulf %686, %680 : vector<16x32xf32>
    %688 = arith.addf %671, %687 : vector<16x32xf32>
    %c11_336 = arith.constant 11 : index
    %c3_337 = arith.constant 3 : index
    %689 = memref.load %arg7[%c11_336, %c3_337] : memref<16x9xf32, #tpu.memory_space<smem>>
    %690 = vector.broadcast %689 : f32 to vector<16x32xf32>
    %691 = arith.mulf %690, %680 : vector<16x32xf32>
    %692 = arith.addf %675, %691 : vector<16x32xf32>
    %c15_338 = arith.constant 15 : index
    %c3_339 = arith.constant 3 : index
    %693 = memref.load %arg7[%c15_338, %c3_339] : memref<16x9xf32, #tpu.memory_space<smem>>
    %694 = vector.broadcast %693 : f32 to vector<16x32xf32>
    %695 = arith.mulf %694, %680 : vector<16x32xf32>
    %696 = arith.addf %679, %695 : vector<16x32xf32>
    %697 = vector.extract_strided_slice %165 {offsets = [1, 1], sizes = [16, 32], strides = [1, 1]} : vector<18x34xf32> to vector<16x32xf32>
    %c3_340 = arith.constant 3 : index
    %c4_341 = arith.constant 4 : index
    %698 = memref.load %arg7[%c3_340, %c4_341] : memref<16x9xf32, #tpu.memory_space<smem>>
    %699 = vector.broadcast %698 : f32 to vector<16x32xf32>
    %700 = arith.mulf %699, %697 : vector<16x32xf32>
    %701 = arith.addf %684, %700 : vector<16x32xf32>
    %c7_342 = arith.constant 7 : index
    %c4_343 = arith.constant 4 : index
    %702 = memref.load %arg7[%c7_342, %c4_343] : memref<16x9xf32, #tpu.memory_space<smem>>
    %703 = vector.broadcast %702 : f32 to vector<16x32xf32>
    %704 = arith.mulf %703, %697 : vector<16x32xf32>
    %705 = arith.addf %688, %704 : vector<16x32xf32>
    %c11_344 = arith.constant 11 : index
    %c4_345 = arith.constant 4 : index
    %706 = memref.load %arg7[%c11_344, %c4_345] : memref<16x9xf32, #tpu.memory_space<smem>>
    %707 = vector.broadcast %706 : f32 to vector<16x32xf32>
    %708 = arith.mulf %707, %697 : vector<16x32xf32>
    %709 = arith.addf %692, %708 : vector<16x32xf32>
    %c15_346 = arith.constant 15 : index
    %c4_347 = arith.constant 4 : index
    %710 = memref.load %arg7[%c15_346, %c4_347] : memref<16x9xf32, #tpu.memory_space<smem>>
    %711 = vector.broadcast %710 : f32 to vector<16x32xf32>
    %712 = arith.mulf %711, %697 : vector<16x32xf32>
    %713 = arith.addf %696, %712 : vector<16x32xf32>
    %714 = vector.extract_strided_slice %165 {offsets = [1, 2], sizes = [16, 32], strides = [1, 1]} : vector<18x34xf32> to vector<16x32xf32>
    %c3_348 = arith.constant 3 : index
    %c5_349 = arith.constant 5 : index
    %715 = memref.load %arg7[%c3_348, %c5_349] : memref<16x9xf32, #tpu.memory_space<smem>>
    %716 = vector.broadcast %715 : f32 to vector<16x32xf32>
    %717 = arith.mulf %716, %714 : vector<16x32xf32>
    %718 = arith.addf %701, %717 : vector<16x32xf32>
    %c7_350 = arith.constant 7 : index
    %c5_351 = arith.constant 5 : index
    %719 = memref.load %arg7[%c7_350, %c5_351] : memref<16x9xf32, #tpu.memory_space<smem>>
    %720 = vector.broadcast %719 : f32 to vector<16x32xf32>
    %721 = arith.mulf %720, %714 : vector<16x32xf32>
    %722 = arith.addf %705, %721 : vector<16x32xf32>
    %c11_352 = arith.constant 11 : index
    %c5_353 = arith.constant 5 : index
    %723 = memref.load %arg7[%c11_352, %c5_353] : memref<16x9xf32, #tpu.memory_space<smem>>
    %724 = vector.broadcast %723 : f32 to vector<16x32xf32>
    %725 = arith.mulf %724, %714 : vector<16x32xf32>
    %726 = arith.addf %709, %725 : vector<16x32xf32>
    %c15_354 = arith.constant 15 : index
    %c5_355 = arith.constant 5 : index
    %727 = memref.load %arg7[%c15_354, %c5_355] : memref<16x9xf32, #tpu.memory_space<smem>>
    %728 = vector.broadcast %727 : f32 to vector<16x32xf32>
    %729 = arith.mulf %728, %714 : vector<16x32xf32>
    %730 = arith.addf %713, %729 : vector<16x32xf32>
    %731 = vector.extract_strided_slice %165 {offsets = [2, 0], sizes = [16, 32], strides = [1, 1]} : vector<18x34xf32> to vector<16x32xf32>
    %c3_356 = arith.constant 3 : index
    %c6_357 = arith.constant 6 : index
    %732 = memref.load %arg7[%c3_356, %c6_357] : memref<16x9xf32, #tpu.memory_space<smem>>
    %733 = vector.broadcast %732 : f32 to vector<16x32xf32>
    %734 = arith.mulf %733, %731 : vector<16x32xf32>
    %735 = arith.addf %718, %734 : vector<16x32xf32>
    %c7_358 = arith.constant 7 : index
    %c6_359 = arith.constant 6 : index
    %736 = memref.load %arg7[%c7_358, %c6_359] : memref<16x9xf32, #tpu.memory_space<smem>>
    %737 = vector.broadcast %736 : f32 to vector<16x32xf32>
    %738 = arith.mulf %737, %731 : vector<16x32xf32>
    %739 = arith.addf %722, %738 : vector<16x32xf32>
    %c11_360 = arith.constant 11 : index
    %c6_361 = arith.constant 6 : index
    %740 = memref.load %arg7[%c11_360, %c6_361] : memref<16x9xf32, #tpu.memory_space<smem>>
    %741 = vector.broadcast %740 : f32 to vector<16x32xf32>
    %742 = arith.mulf %741, %731 : vector<16x32xf32>
    %743 = arith.addf %726, %742 : vector<16x32xf32>
    %c15_362 = arith.constant 15 : index
    %c6_363 = arith.constant 6 : index
    %744 = memref.load %arg7[%c15_362, %c6_363] : memref<16x9xf32, #tpu.memory_space<smem>>
    %745 = vector.broadcast %744 : f32 to vector<16x32xf32>
    %746 = arith.mulf %745, %731 : vector<16x32xf32>
    %747 = arith.addf %730, %746 : vector<16x32xf32>
    %748 = vector.extract_strided_slice %165 {offsets = [2, 1], sizes = [16, 32], strides = [1, 1]} : vector<18x34xf32> to vector<16x32xf32>
    %c3_364 = arith.constant 3 : index
    %c7_365 = arith.constant 7 : index
    %749 = memref.load %arg7[%c3_364, %c7_365] : memref<16x9xf32, #tpu.memory_space<smem>>
    %750 = vector.broadcast %749 : f32 to vector<16x32xf32>
    %751 = arith.mulf %750, %748 : vector<16x32xf32>
    %752 = arith.addf %735, %751 : vector<16x32xf32>
    %c7_366 = arith.constant 7 : index
    %c7_367 = arith.constant 7 : index
    %753 = memref.load %arg7[%c7_366, %c7_367] : memref<16x9xf32, #tpu.memory_space<smem>>
    %754 = vector.broadcast %753 : f32 to vector<16x32xf32>
    %755 = arith.mulf %754, %748 : vector<16x32xf32>
    %756 = arith.addf %739, %755 : vector<16x32xf32>
    %c11_368 = arith.constant 11 : index
    %c7_369 = arith.constant 7 : index
    %757 = memref.load %arg7[%c11_368, %c7_369] : memref<16x9xf32, #tpu.memory_space<smem>>
    %758 = vector.broadcast %757 : f32 to vector<16x32xf32>
    %759 = arith.mulf %758, %748 : vector<16x32xf32>
    %760 = arith.addf %743, %759 : vector<16x32xf32>
    %c15_370 = arith.constant 15 : index
    %c7_371 = arith.constant 7 : index
    %761 = memref.load %arg7[%c15_370, %c7_371] : memref<16x9xf32, #tpu.memory_space<smem>>
    %762 = vector.broadcast %761 : f32 to vector<16x32xf32>
    %763 = arith.mulf %762, %748 : vector<16x32xf32>
    %764 = arith.addf %747, %763 : vector<16x32xf32>
    %765 = vector.extract_strided_slice %165 {offsets = [2, 2], sizes = [16, 32], strides = [1, 1]} : vector<18x34xf32> to vector<16x32xf32>
    %c3_372 = arith.constant 3 : index
    %c8_373 = arith.constant 8 : index
    %766 = memref.load %arg7[%c3_372, %c8_373] : memref<16x9xf32, #tpu.memory_space<smem>>
    %767 = vector.broadcast %766 : f32 to vector<16x32xf32>
    %768 = arith.mulf %767, %765 : vector<16x32xf32>
    %769 = arith.addf %752, %768 : vector<16x32xf32>
    %c7_374 = arith.constant 7 : index
    %c8_375 = arith.constant 8 : index
    %770 = memref.load %arg7[%c7_374, %c8_375] : memref<16x9xf32, #tpu.memory_space<smem>>
    %771 = vector.broadcast %770 : f32 to vector<16x32xf32>
    %772 = arith.mulf %771, %765 : vector<16x32xf32>
    %773 = arith.addf %756, %772 : vector<16x32xf32>
    %c11_376 = arith.constant 11 : index
    %c8_377 = arith.constant 8 : index
    %774 = memref.load %arg7[%c11_376, %c8_377] : memref<16x9xf32, #tpu.memory_space<smem>>
    %775 = vector.broadcast %774 : f32 to vector<16x32xf32>
    %776 = arith.mulf %775, %765 : vector<16x32xf32>
    %777 = arith.addf %760, %776 : vector<16x32xf32>
    %c15_378 = arith.constant 15 : index
    %c8_379 = arith.constant 8 : index
    %778 = memref.load %arg7[%c15_378, %c8_379] : memref<16x9xf32, #tpu.memory_space<smem>>
    %779 = vector.broadcast %778 : f32 to vector<16x32xf32>
    %780 = arith.mulf %779, %765 : vector<16x32xf32>
    %781 = arith.addf %764, %780 : vector<16x32xf32>
    %c0_380 = arith.constant 0 : index
    %782 = memref.load %arg8[%c0_380] : memref<4xf32, #tpu.memory_space<smem>>
    %783 = vector.broadcast %782 : f32 to vector<16x32xf32>
    %784 = arith.addf %769, %783 : vector<16x32xf32>
    %c0_381 = arith.constant 0 : index
    %c0_382 = arith.constant 0 : index
    %c0_383 = arith.constant 0 : index
    %c0_384 = arith.constant 0 : index
    %785 = vector.load %arg9[%c0_381, %c0_382, %c0_383, %c0_384] : memref<1x4x16x32xf32, #tpu.memory_space<vmem>>, vector<1x1x16x32xf32>
    %786 = vector.shape_cast %785 : vector<1x1x16x32xf32> to vector<16x32xf32>
    %787 = vector.shape_cast %784 : vector<16x32xf32> to vector<1x1x16x32xf32>
    tpu.vector_store %arg9[%c0_381, %c0_382, %c0_383, %c0_384], %787 {strides = array<i32>} : memref<1x4x16x32xf32, #tpu.memory_space<vmem>>, vector<1x1x16x32xf32>,
    %c1_385 = arith.constant 1 : index
    %788 = memref.load %arg8[%c1_385] : memref<4xf32, #tpu.memory_space<smem>>
    %789 = vector.broadcast %788 : f32 to vector<16x32xf32>
    %790 = arith.addf %773, %789 : vector<16x32xf32>
    %c0_386 = arith.constant 0 : index
    %c1_387 = arith.constant 1 : index
    %c0_388 = arith.constant 0 : index
    %c0_389 = arith.constant 0 : index
    %791 = vector.load %arg9[%c0_386, %c1_387, %c0_388, %c0_389] : memref<1x4x16x32xf32, #tpu.memory_space<vmem>>, vector<1x1x16x32xf32>
    %792 = vector.shape_cast %791 : vector<1x1x16x32xf32> to vector<16x32xf32>
    %793 = vector.shape_cast %790 : vector<16x32xf32> to vector<1x1x16x32xf32>
    tpu.vector_store %arg9[%c0_386, %c1_387, %c0_388, %c0_389], %793 {strides = array<i32>} : memref<1x4x16x32xf32, #tpu.memory_space<vmem>>, vector<1x1x16x32xf32>,
    %c2_390 = arith.constant 2 : index
    %794 = memref.load %arg8[%c2_390] : memref<4xf32, #tpu.memory_space<smem>>
    %795 = vector.broadcast %794 : f32 to vector<16x32xf32>
    %796 = arith.addf %777, %795 : vector<16x32xf32>
    %c0_391 = arith.constant 0 : index
    %c2_392 = arith.constant 2 : index
    %c0_393 = arith.constant 0 : index
    %c0_394 = arith.constant 0 : index
    %797 = vector.load %arg9[%c0_391, %c2_392, %c0_393, %c0_394] : memref<1x4x16x32xf32, #tpu.memory_space<vmem>>, vector<1x1x16x32xf32>
    %798 = vector.shape_cast %797 : vector<1x1x16x32xf32> to vector<16x32xf32>
    %799 = vector.shape_cast %796 : vector<16x32xf32> to vector<1x1x16x32xf32>
    tpu.vector_store %arg9[%c0_391, %c2_392, %c0_393, %c0_394], %799 {strides = array<i32>} : memref<1x4x16x32xf32, #tpu.memory_space<vmem>>, vector<1x1x16x32xf32>,
    %c3_395 = arith.constant 3 : index
    %800 = memref.load %arg8[%c3_395] : memref<4xf32, #tpu.memory_space<smem>>
    %801 = vector.broadcast %800 : f32 to vector<16x32xf32>
    %802 = arith.addf %781, %801 : vector<16x32xf32>
    %c0_396 = arith.constant 0 : index
    %c3_397 = arith.constant 3 : index
    %c0_398 = arith.constant 0 : index
    %c0_399 = arith.constant 0 : index
    %803 = vector.load %arg9[%c0_396, %c3_397, %c0_398, %c0_399] : memref<1x4x16x32xf32, #tpu.memory_space<vmem>>, vector<1x1x16x32xf32>
    %804 = vector.shape_cast %803 : vector<1x1x16x32xf32> to vector<16x32xf32>
    %805 = vector.shape_cast %802 : vector<16x32xf32> to vector<1x1x16x32xf32>
    tpu.vector_store %arg9[%c0_396, %c3_397, %c0_398, %c0_399], %805 {strides = array<i32>} : memref<1x4x16x32xf32, #tpu.memory_space<vmem>>, vector<1x1x16x32xf32>,
    return
  }
  func.func @transform_0(%arg0: i32, %arg1: i32) -> (i32, i32, i32, i32) {
    %c0_i32 = arith.constant 0 : i32
    %c0_i32_0 = arith.constant 0 : i32
    %c0_i32_1 = arith.constant 0 : i32
    %c0_i32_2 = arith.constant 0 : i32
    return %arg0, %c0_i32, %c0_i32_0, %c0_i32_1 : i32, i32, i32, i32
  }
  func.func @transform_1(%arg0: i32, %arg1: i32) -> (i32, i32) {
    %c0_i32 = arith.constant 0 : i32
    %c0_i32_0 = arith.constant 0 : i32
    %c0_i32_1 = arith.constant 0 : i32
    return %c0_i32, %c0_i32_0 : i32, i32
  }
  func.func @transform_2(%arg0: i32, %arg1: i32) -> (i32, i32) {
    %c0_i32 = arith.constant 0 : i32
    %c0_i32_0 = arith.constant 0 : i32
    %c0_i32_1 = arith.constant 0 : i32
    return %c0_i32, %c0_i32_0 : i32, i32
  }
  func.func @transform_3(%arg0: i32, %arg1: i32) -> (i32, i32) {
    %c0_i32 = arith.constant 0 : i32
    %c0_i32_0 = arith.constant 0 : i32
    %c0_i32_1 = arith.constant 0 : i32
    return %c0_i32, %c0_i32_0 : i32, i32
  }
  func.func @transform_4(%arg0: i32, %arg1: i32) -> i32 {
    %c0_i32 = arith.constant 0 : i32
    %c0_i32_0 = arith.constant 0 : i32
    return %c0_i32 : i32
  }
  func.func @transform_5(%arg0: i32, %arg1: i32) -> (i32, i32) {
    %c0_i32 = arith.constant 0 : i32
    %c0_i32_0 = arith.constant 0 : i32
    %c0_i32_1 = arith.constant 0 : i32
    return %c0_i32, %c0_i32_0 : i32, i32
  }
  func.func @transform_6(%arg0: i32, %arg1: i32) -> i32 {
    %c0_i32 = arith.constant 0 : i32
    %c0_i32_0 = arith.constant 0 : i32
    return %c0_i32 : i32
  }
  func.func @transform_7(%arg0: i32, %arg1: i32) -> (i32, i32, i32, i32) {
    %c0_i32 = arith.constant 0 : i32
    %c0_i32_0 = arith.constant 0 : i32
    %c0_i32_1 = arith.constant 0 : i32
    return %arg0, %c0_i32, %arg1, %c0_i32_0 : i32, i32, i32, i32
  }
}

</mosaic_0001>

<llo_original>
// kernel: tpu_custom_call.1
$region0: #{tpu_custom_call.1}
  #allocation0 [shape = 'u32[]', space=smem, size = 0x4, offset = 0x4, fixed_abs, tag = 'smem constant byte address 0x4 - core index']
  #allocation1 [shape = 'u32[72,128]{1,0:T(1,128)}', space=vmem, size = 0x9000, scoped, tag = 'internal scratch']
  #allocation11 [shape = 's32[]', space=sflag, size = 0x4, offset = 0, fixed_abs, tag = 'sflag constant byte address 0x0 - dummy sync flag']
  %s0 = inlined_call_operand.vmem [shape: f32[2,4,18,16], index: 0, kind: input, shape index: {}]
  %s1 = inlined_call_operand.vmem [shape: f32[18,10], index: 1, kind: input, shape index: {}]
  %s2 = inlined_call_operand.vmem [shape: f32[16,34], index: 2, kind: input, shape index: {}]
  %s3 = inlined_call_operand.vmem [shape: f32[4,4], index: 3, kind: input, shape index: {}]
  %s4 = inlined_call_operand.vmem [shape: f32[4], index: 4, kind: input, shape index: {}]
  %s5 = inlined_call_operand.vmem [shape: f32[16,9], index: 5, kind: input, shape index: {}]
  %s6 = inlined_call_operand.vmem [shape: f32[4], index: 6, kind: input, shape index: {}]
  %s7 = inlined_call_operand.hbm [shape: f32[2,4,32,32], index: 7, kind: output, shape index: {}]
  %s8 = sld [smem:[#allocation0]]
  $region77: #{tpu_custom_call.1} parent=0
    _
  %s10 = ssub.s32 1, %s8
  %s11 = scalar_select 0, %s10, %s8
  $region1: #{tpu_custom_call.1} parent=0
    #allocation2 [shape = 'u8[2048]{0}', space=smem, size = 0x800, scoped, tag = 'input window, operand 3, single buffered']
    #allocation3 [shape = 's32[2]{0}', space=sflag, size = 0x8, scoped, tag = 'scoped memory for tpu_custom_call.1']
    #allocation4 [shape = 's32[2]{0}', space=sflag, size = 0x8, scoped, tag = 'scoped memory for tpu_custom_call.1']
    #allocation5 [shape = 'u8[512]{0}', space=smem, size = 0x200, scoped, tag = 'input window, operand 4, single buffered']
    #allocation6 [shape = 's32[1]{0}', space=sflag, size = 0x4, scoped, tag = 'scoped memory for tpu_custom_call.1']
    #allocation7 [shape = 'u8[8192]{0}', space=smem, size = 0x2000, scoped, tag = 'input window, operand 5, single buffered']
    #allocation8 [shape = 'u8[512]{0}', space=smem, size = 0x200, scoped, tag = 'input window, operand 6, single buffered']
    #allocation9 [shape = 's32[1]{0}', space=sflag, size = 0x4, scoped, tag = 'scoped memory for tpu_custom_call.1']
    #allocation10 [shape = 'u8[65536]{0}', space=vmem, size = 0x10000, scoped, tag = 'output window, operand 0']
    %12 = vsyncpa [#allocation4], 0
    %13 = vsyncpa [#allocation6], 0
    %14 = vsyncpa [#allocation9], 0
    %15 = vsyncpa [#allocation3], 0
    %s16 = scalar_lea.sflag [#allocation3], 1
    %17 = vsyncpa %s16, 0
    loop: start=0, step=1, limit=6
    $region2: #{tpu_custom_call.1} parent=1 // loop_pre_header
      _
    $region3: #{tpu_custom_call.1} parent=1 // loop_header
      %s19 = sphi 0, %s23
      %p20 = scmp.ge.s32.totalorder %s19, 6
      %s26 = sphi 0, %s38
      %s27 = sphi 0, %s34
      %s28 = sphi 0, %s26
      %s29 = sphi 0, %s27
      %s30 = sphi 0, %s28
      %s31 = sphi 0, %s29
      %s41 = sphi 0, %s43
      %s44 = sphi 0, %s41
      %s45 = sphi 0, %s44
      %s61 = sphi 0, %s45
      %s65 = sphi 0, %s65
      %s67 = sphi 0, %s65
      %s68 = sphi 0, %s67
      %s82 = sphi 0, %s68
      %s86 = sphi 0, %s86
      %s88 = sphi 0, %s86
      %s89 = sphi 0, %s88
      %s103 = sphi 0, %s89
      %s107 = sphi 0, %s107
      %s109 = sphi 0, %s107
      %s110 = sphi 0, %s109
      %s124 = sphi 0, %s110
      %s128 = sphi 0, %s128
      %s130 = sphi 0, %s128
      %s131 = sphi 0, %s130
      %s145 = sphi 0, %s131
      %s149 = sphi 0, %s149
      %s151 = sphi 0, %s149
      %s152 = sphi 0, %s151
      %s166 = sphi 0, %s152
      %s170 = sphi 0, %s170
      %s172 = sphi 0, %s170
      %s173 = sphi 0, %s172
      %s187 = sphi 0, %s173
      %s195 = sphi 0, %s197
      %s198 = sphi 0, %s195
      %s199 = sphi 0, %s198
      %s215 = sphi 0, %s199
    $region4: #{tpu_custom_call.1} parent=1 // loop_header_branch
      %22 = sbr.rel (%p20) target = $region8
    $region5: #{tpu_custom_call.1} parent=1 // loop_body
      %s24 = ssub.s32 %s19, 1
      %s25 = ssub.s32 %s19, 2
      %s32 = sadd.s32 1, %s27
      %p33 = scmp.ge.s32.totalorder %s32, 2
      %s34 = scalar_select %p33, 0, %s32
      %s35 = sadd.s32 1, %s26
      %s36 = scalar_select %p33, %s35, %s26
      %p37 = scmp.ge.s32.totalorder %s36, 2
      %s38 = scalar_select %p37, 0, %s36
      %s39 = ssub.s32 %s26, %s38
      %p40 = scmp.eq.s32.totalorder %s39, 0
      %s42 = sadd.s32 %s41, 1
      %s43 = scalar_select %p40, %s41, %s42
      %p46 = pneg %p40
      %p47 = scmp.eq.s32.totalorder %s19, 3
      %p48 = por %p46, %p47
      %p49 = scmp.ne.s32.totalorder %s41, %s44
      %p50 = scmp.eq.s32.totalorder %s19, 0
      %p51 = por %p49, %p50
      %p52 = scmp.ne.s32.totalorder %s41, %s44
      %p53 = scmp.eq.s32.totalorder %s24, 3
      %p54 = por %p52, %p53
      %p55 = scmp.ne.s32.totalorder %s44, %s45
      %p56 = scmp.eq.s32.totalorder %s24, 0
      %p57 = por %p55, %p56
      %p58 = scmp.ne.s32.totalorder %s44, %s45
      %p59 = scmp.eq.s32.totalorder %s25, 3
      %p60 = por %p58, %p59
      %p62 = scmp.ne.s32.totalorder %s45, %s61
      %p63 = scmp.eq.s32.totalorder %s25, 0
      %p64 = por %p62, %p63
      %s66 = sadd.s32 %s65, 1
      %p69 = scmp.eq.s32.totalorder %s19, 3
      %p70 = scmp.ne.s32.totalorder %s65, %s67
      %p71 = scmp.eq.s32.totalorder %s19, 0
      %p72 = por %p70, %p71
      %p73 = scmp.ne.s32.totalorder %s65, %s67
      %p74 = scmp.eq.s32.totalorder %s24, 3
      %p75 = por %p73, %p74
      %p76 = scmp.ne.s32.totalorder %s67, %s68
      %p77 = scmp.eq.s32.totalorder %s24, 0
      %p78 = por %p76, %p77
      %p79 = scmp.ne.s32.totalorder %s67, %s68
      %p80 = scmp.eq.s32.totalorder %s25, 3
      %p81 = por %p79, %p80
      %p83 = scmp.ne.s32.totalorder %s68, %s82
      %p84 = scmp.eq.s32.totalorder %s25, 0
      %p85 = por %p83, %p84
      %s87 = sadd.s32 %s86, 1
      %p90 = scmp.eq.s32.totalorder %s19, 3
      %p91 = scmp.ne.s32.totalorder %s86, %s88
      %p92 = scmp.eq.s32.totalorder %s19, 0
      %p93 = por %p91, %p92
      %p94 = scmp.ne.s32.totalorder %s86, %s88
      %p95 = scmp.eq.s32.totalorder %s24, 3
      %p96 = por %p94, %p95
      %p97 = scmp.ne.s32.totalorder %s88, %s89
      %p98 = scmp.eq.s32.totalorder %s24, 0
      %p99 = por %p97, %p98
      %p100 = scmp.ne.s32.totalorder %s88, %s89
      %p101 = scmp.eq.s32.totalorder %s25, 3
      %p102 = por %p100, %p101
      %p104 = scmp.ne.s32.totalorder %s89, %s103
      %p105 = scmp.eq.s32.totalorder %s25, 0
      %p106 = por %p104, %p105
      %s108 = sadd.s32 %s107, 1
      %p111 = scmp.eq.s32.totalorder %s19, 3
      %p112 = scmp.ne.s32.totalorder %s107, %s109
      %p113 = scmp.eq.s32.totalorder %s19, 0
      %p114 = por %p112, %p113
      %p115 = scmp.ne.s32.totalorder %s107, %s109
      %p116 = scmp.eq.s32.totalorder %s24, 3
      %p117 = por %p115, %p116
      %p118 = scmp.ne.s32.totalorder %s109, %s110
      %p119 = scmp.eq.s32.totalorder %s24, 0
      %p120 = por %p118, %p119
      %p121 = scmp.ne.s32.totalorder %s109, %s110
      %p122 = scmp.eq.s32.totalorder %s25, 3
      %p123 = por %p121, %p122
      %p125 = scmp.ne.s32.totalorder %s110, %s124
      %p126 = scmp.eq.s32.totalorder %s25, 0
      %p127 = por %p125, %p126
      %s129 = sadd.s32 %s128, 1
      %p132 = scmp.eq.s32.totalorder %s19, 3
      %p133 = scmp.ne.s32.totalorder %s128, %s130
      %p134 = scmp.eq.s32.totalorder %s19, 0
      %p135 = por %p133, %p134
      %p136 = scmp.ne.s32.totalorder %s128, %s130
      %p137 = scmp.eq.s32.totalorder %s24, 3
      %p138 = por %p136, %p137
      %p139 = scmp.ne.s32.totalorder %s130, %s131
      %p140 = scmp.eq.s32.totalorder %s24, 0
      %p141 = por %p139, %p140
      %p142 = scmp.ne.s32.totalorder %s130, %s131
      %p143 = scmp.eq.s32.totalorder %s25, 3
      %p144 = por %p142, %p143
      %p146 = scmp.ne.s32.totalorder %s131, %s145
      %p147 = scmp.eq.s32.totalorder %s25, 0
      %p148 = por %p146, %p147
      %s150 = sadd.s32 %s149, 1
      %p153 = scmp.eq.s32.totalorder %s19, 3
      %p154 = scmp.ne.s32.totalorder %s149, %s151
      %p155 = scmp.eq.s32.totalorder %s19, 0
      %p156 = por %p154, %p155
      %p157 = scmp.ne.s32.totalorder %s149, %s151
      %p158 = scmp.eq.s32.totalorder %s24, 3
      %p159 = por %p157, %p158
      %p160 = scmp.ne.s32.totalorder %s151, %s152
      %p161 = scmp.eq.s32.totalorder %s24, 0
      %p162 = por %p160, %p161
      %p163 = scmp.ne.s32.totalorder %s151, %s152
      %p164 = scmp.eq.s32.totalorder %s25, 3
      %p165 = por %p163, %p164
      %p167 = scmp.ne.s32.totalorder %s152, %s166
      %p168 = scmp.eq.s32.totalorder %s25, 0
      %p169 = por %p167, %p168
      %s171 = sadd.s32 %s170, 1
      %p174 = scmp.eq.s32.totalorder %s19, 3
      %p175 = scmp.ne.s32.totalorder %s170, %s172
      %p176 = scmp.eq.s32.totalorder %s19, 0
      %p177 = por %p175, %p176
      %p178 = scmp.ne.s32.totalorder %s170, %s172
      %p179 = scmp.eq.s32.totalorder %s24, 3
      %p180 = por %p178, %p179
      %p181 = scmp.ne.s32.totalorder %s172, %s173
      %p182 = scmp.eq.s32.totalorder %s24, 0
      %p183 = por %p181, %p182
      %p184 = scmp.ne.s32.totalorder %s172, %s173
      %p185 = scmp.eq.s32.totalorder %s25, 3
      %p186 = por %p184, %p185
      %p188 = scmp.ne.s32.totalorder %s173, %s187
      %p189 = scmp.eq.s32.totalorder %s25, 0
      %p190 = por %p188, %p189
      %s191 = ssub.s32 %s26, %s38
      %s192 = ssub.s32 %s27, %s34
      %s193 = sor.u32 %s191, %s192
      %p194 = scmp.eq.s32.totalorder %s193, 0
      %s196 = sadd.s32 %s195, 1
      %s197 = scalar_select %p194, %s195, %s196
      %p200 = pneg %p194
      %p201 = scmp.eq.s32.totalorder %s19, 3
      %p202 = por %p200, %p201
      %p203 = scmp.ne.s32.totalorder %s195, %s198
      %p204 = scmp.eq.s32.totalorder %s19, 0
      %p205 = por %p203, %p204
      %p206 = scmp.ne.s32.totalorder %s195, %s198
      %p207 = scmp.eq.s32.totalorder %s24, 3
      %p208 = por %p206, %p207
      %p209 = scmp.ne.s32.totalorder %s198, %s199
      %p210 = scmp.eq.s32.totalorder %s24, 0
      %p211 = por %p209, %p210
      %p212 = scmp.ne.s32.totalorder %s198, %s199
      %p213 = scmp.eq.s32.totalorder %s25, 3
      %p214 = por %p212, %p213
      %p216 = scmp.ne.s32.totalorder %s199, %s215
      %p217 = scmp.eq.s32.totalorder %s25, 0
      %p218 = por %p216, %p217
      %p219 = scmp.le.s32.totalorder 1, %s19
      %p220 = scmp.lt.s32.totalorder %s19, 5
      %p221 = pnand %p219, %p220
      %p222 = pneg %p221
      // Predicated region
      $region9: #{tpu_custom_call.1} parent=5 // pred_check
        _
      $region10: #{tpu_custom_call.1} parent=5 // pred_check_branch
        %224 = sbr.rel (%p221) target = $region12
      $region11: #{tpu_custom_call.1} parent=5 // pred_region
        %s225 = ssub.s32 %s19, 1
        // Predicated region
        $region13: #{tpu_custom_call.1} parent=11 // pred_check
          %p226 = pneg %p78
        $region14: #{tpu_custom_call.1} parent=11 // pred_check_branch
          %228 = sbr.rel (%p226) target = $region16
        $region15: #{tpu_custom_call.1} parent=11 // pred_region
          _
        $region16: #{tpu_custom_call.1} parent=11 // pred_fallthru
          _
        // Predicated region
        $region17: #{tpu_custom_call.1} parent=11 // pred_check
          %p229 = pneg %p99
        $region18: #{tpu_custom_call.1} parent=11 // pred_check_branch
          %231 = sbr.rel (%p229) target = $region20
        $region19: #{tpu_custom_call.1} parent=11 // pred_region
          _
        $region20: #{tpu_custom_call.1} parent=11 // pred_fallthru
          _
        // Predicated region
        $region21: #{tpu_custom_call.1} parent=11 // pred_check
          %p232 = pneg %p120
        $region22: #{tpu_custom_call.1} parent=11 // pred_check_branch
          %234 = sbr.rel (%p232) target = $region24
        $region23: #{tpu_custom_call.1} parent=11 // pred_region
          %236 = vsyncadd [#allocation4], 0
          %s238 = sshll.u32 %s3, 4
          %s239 = int_to_ptr.vmem [resolvable:$true] %s238
          %241 = dma.vmem_to_smem %s239, 64, [#allocation2], [#allocation4]
        $region24: #{tpu_custom_call.1} parent=11 // pred_fallthru
          _
        // Predicated region
        $region25: #{tpu_custom_call.1} parent=11 // pred_check
          %p242 = pneg %p141
        $region26: #{tpu_custom_call.1} parent=11 // pred_check_branch
          %244 = sbr.rel (%p242) target = $region28
        $region27: #{tpu_custom_call.1} parent=11 // pred_region
          %246 = vsyncadd [#allocation6], 0
          %s248 = sshll.u32 %s4, 4
          %s249 = int_to_ptr.vmem [resolvable:$true] %s248
          %251 = dma.vmem_to_smem %s249, 16, [#allocation5], [#allocation6]
        $region28: #{tpu_custom_call.1} parent=11 // pred_fallthru
          _
        // Predicated region
        $region29: #{tpu_custom_call.1} parent=11 // pred_check
          %p252 = pneg %p162
        $region30: #{tpu_custom_call.1} parent=11 // pred_check_branch
          %254 = sbr.rel (%p252) target = $region32
        $region31: #{tpu_custom_call.1} parent=11 // pred_region
          %256 = vsyncadd [#allocation6], 0
          %s257 = sshll.u32 %s5, 4
          %s258 = int_to_ptr.vmem [resolvable:$true] %s257
          %263 = dma.vmem_to_smem %s258, 256, [#allocation7], [#allocation6], 128, 128, 8
        $region32: #{tpu_custom_call.1} parent=11 // pred_fallthru
          _
        // Predicated region
        $region33: #{tpu_custom_call.1} parent=11 // pred_check
          %p264 = pneg %p183
        $region34: #{tpu_custom_call.1} parent=11 // pred_check_branch
          %266 = sbr.rel (%p264) target = $region36
        $region35: #{tpu_custom_call.1} parent=11 // pred_region
          %268 = vsyncadd [#allocation9], 0
          %s270 = sshll.u32 %s6, 4
          %s271 = int_to_ptr.vmem [resolvable:$true] %s270
          %273 = dma.vmem_to_smem %s271, 16, [#allocation8], [#allocation9]
        $region36: #{tpu_custom_call.1} parent=11 // pred_fallthru
          _
      $region12: #{tpu_custom_call.1} parent=5 // pred_fallthru
        _
      %p274 = scmp.lt.s32.totalorder %s19, 4
      // Predicated region
      $region37: #{tpu_custom_call.1} parent=5 // pred_check
        %p275 = pneg %p274
      $region38: #{tpu_custom_call.1} parent=5 // pred_check_branch
        %277 = sbr.rel (%p275) target = $region40
      $region39: #{tpu_custom_call.1} parent=5 // pred_region
        // Predicated region
        $region41: #{tpu_custom_call.1} parent=39 // pred_check
          %p278 = pneg %p51
        $region42: #{tpu_custom_call.1} parent=39 // pred_check_branch
          %280 = sbr.rel (%p278) target = $region44
        $region43: #{tpu_custom_call.1} parent=39 // pred_region
          %p281 = scmp.lt.s32.totalorder %s26, 1
          %s282 = scalar_select %p281, %s26, 1
          %s283 = smul.addr %s282, 12
          %s284 = smul.addr %s283, 8
          %s285 = scalar_lea.vmem %s0, %s284
        $region44: #{tpu_custom_call.1} parent=39 // pred_fallthru
          _
      $region40: #{tpu_custom_call.1} parent=5 // pred_fallthru
        _
      %p286 = scmp.le.s32.totalorder 1, %s19
      %p287 = scmp.lt.s32.totalorder %s19, 5
      %p288 = pnand %p286, %p287
      %p289 = pneg %p288
      // Predicated region
      $region45: #{tpu_custom_call.1} parent=5 // pred_check
        _
      $region46: #{tpu_custom_call.1} parent=5 // pred_check_branch
        %291 = sbr.rel (%p288) target = $region48
      $region47: #{tpu_custom_call.1} parent=5 // pred_region
        %s292 = ssub.s32 %s19, 1
        // Predicated region
        $region49: #{tpu_custom_call.1} parent=47 // pred_check
          %p293 = pneg %p120
        $region50: #{tpu_custom_call.1} parent=47 // pred_check_branch
          %295 = sbr.rel (%p293) target = $region52
        $region51: #{tpu_custom_call.1} parent=47 // pred_region
          %297 = dma.done [#allocation4], 64
        $region52: #{tpu_custom_call.1} parent=47 // pred_fallthru
          _
        // Predicated region
        $region53: #{tpu_custom_call.1} parent=47 // pred_check
          %p298 = pneg %p141
        $region54: #{tpu_custom_call.1} parent=47 // pred_check_branch
          %300 = sbr.rel (%p298) target = $region56
        $region55: #{tpu_custom_call.1} parent=47 // pred_region
          %302 = dma.done [#allocation6], 16
        $region56: #{tpu_custom_call.1} parent=47 // pred_fallthru
          _
        // Predicated region
        $region57: #{tpu_custom_call.1} parent=47 // pred_check
          %p303 = pneg %p162
        $region58: #{tpu_custom_call.1} parent=47 // pred_check_branch
          %305 = sbr.rel (%p303) target = $region60
        $region59: #{tpu_custom_call.1} parent=47 // pred_region
          %307 = dma.done [#allocation6], 256
        $region60: #{tpu_custom_call.1} parent=47 // pred_fallthru
          _
        // Predicated region
        $region61: #{tpu_custom_call.1} parent=47 // pred_check
          %p308 = pneg %p183
        $region62: #{tpu_custom_call.1} parent=47 // pred_check_branch
          %310 = sbr.rel (%p308) target = $region64
        $region63: #{tpu_custom_call.1} parent=47 // pred_region
          %312 = dma.done [#allocation9], 16
        $region64: #{tpu_custom_call.1} parent=47 // pred_fallthru
          _
        %313 = sfence
        %p314 = scmp.lt.s32.totalorder %s28, 1
        %s315 = scalar_select %p314, %s28, 1
        %s316 = smul.addr %s315, 12
        %s317 = smul.addr %s316, 8
        %s318 = scalar_lea.vmem %s0, %s317
        %p319 = pneg %p57
        %p320 = pneg %p54
        %p321 = pneg %p78
        %p322 = pneg %p75
        %p323 = pneg %p99
        %p324 = pneg %p96
        %p325 = pneg %p120
        %p326 = pneg %p117
        %p327 = pneg %p141
        %p328 = pneg %p138
        %p329 = pneg %p162
        %p330 = pneg %p159
        %p331 = pneg %p183
        %p332 = pneg %p180
        %p333 = pneg %p211
        %p334 = pneg %p208
        %s335 = sand.u32 %s198, 1
        %s336 = scalar_lea.sflag [#allocation3], %s335
        %s337 = sand.u32 %s198, 1
        %s338 = smul.addr %s337, 64
        %s339 = scalar_lea.vmem [#allocation10], %s338
        %p340 = scmp.lt.s32.totalorder %s28, 1
        %s341 = scalar_select %p340, %s28, 1
        %s342 = smul.addr %s341, 12
        %s343 = smul.addr %s342, 8
        %s344 = scalar_lea.vmem %s0, %s343
        %s345 = smul.u32 2, %s29
        %s346 = smul.u32 %s29, 8
        %v347 = vlaneseq
        %v348 = vshrl.u32 %v347, 7
        %v349 = vadd.s32 %v348, 8
        %s350 = ssub.s32 %s346, 1
        %v351 = vstv %s350
        %v352 = vadd.s32 %v348, %v351
        %v353 = vadd.s32 %v349, %v351
        %vm354 = vcmp.ge.s32.totalorder %v352, 0
        %vm355 = vcmp.ge.s32.totalorder %v353, 0
        %vm356 = vcmp.lt.s32.totalorder %v352, 16
        %vm357 = vcmp.lt.s32.totalorder %v353, 16
        %vm358 = vmand %vm354, %vm356
        %vm359 = vmand %vm355, %vm357
        %v360 = vld [vmem:[%s1] sm:$0xff]
        %v361 = vld [vmem:[%s1 + $0x8] sm:$0xff]
        %v362 = vld [vmem:[%s1 + $0x10] sm:$0x3]
        %v363 = vld [vmem:[%s2] sm:$0xff]
        %v364 = vld [vmem:[%s2 + $0x8] sm:$0xff]
        %s365 = sld [smem:[#allocation2]]
        %s366 = scalar_lea.vmem %s344, %s346
        %v367 = vld [vmem:[%s366] sm:$0xff]
        %v368 = vld [vmem:[%s366 + $0x8] sm:$0x3]
        %v369 = vstv %s365
        %v370 = vmul.f32 %v369, %v367
        %v371 = vmul.f32 %v369, %v368
        %v372 = vadd.f32 %v370, 0.0
        %v373 = vadd.f32 %v371, 0.0
        %s374 = sld [smem:[#allocation2 + $0x1]]
        %s375 = sadd.s32 %s346, 24
        %s376 = scalar_lea.vmem %s344, %s375
        %v377 = vld [vmem:[%s376] sm:$0xff]
        %v378 = vld [vmem:[%s376 + $0x8] sm:$0x3]
        %v379 = vstv %s374
        %v380 = vmul.f32 %v379, %v377
        %v381 = vmul.f32 %v379, %v378
        %v382 = vadd.f32 %v372, %v380
        %v383 = vadd.f32 %v373, %v381
        %s384 = sld [smem:[#allocation2 + $0x2]]
        %s385 = sadd.s32 %s346, 48
        %s386 = scalar_lea.vmem %s344, %s385
        %v387 = vld [vmem:[%s386] sm:$0xff]
        %v388 = vld [vmem:[%s386 + $0x8] sm:$0x3]
        %v389 = vstv %s384
        %v390 = vmul.f32 %v389, %v387
        %v391 = vmul.f32 %v389, %v388
        %v392 = vadd.f32 %v382, %v390
        %v393 = vadd.f32 %v383, %v391
        %s394 = sld [smem:[#allocation2 + $0x3]]
        %s395 = sadd.s32 %s346, 72
        %s396 = scalar_lea.vmem %s344, %s395
        %v397 = vld [vmem:[%s396] sm:$0xff]
        %v398 = vld [vmem:[%s396 + $0x8] sm:$0x3]
        %v399 = vstv %s394
        %v400 = vmul.f32 %v399, %v397
        %v401 = vmul.f32 %v399, %v398
        %v402 = vadd.f32 %v392, %v400
        %v403 = vadd.f32 %v393, %v401
        %s404 = sld [smem:[#allocation5]]
        %v405 = vstv %s404
        %v406 = vadd.f32 %v402, %v405
        %v407 = vadd.f32 %v403, %v405
        %v408 = vsel %vm358, 1, 0
        %v409 = vsel %vm359, 1, 0
        %vm410 = vcmp.eq.s32.totalorder %v408, 1
        %vm411 = vcmp.eq.s32.totalorder %v409, 1
        %v412 = vsel %vm410, %v406, 0.0
        %v413 = vsel %vm411, %v407, 0.0
        %vm414 = vcmask 80896
        %v416 = vsel %vm414, %v360, 0
        %v419 = vsel %vm414, %v361, 0
        %v422 = vsel %vm414, %v362, 0
        %vm424 = vcmask 1041408
        %v426 = vsel %vm424, %v413, 0
        %428 = vmatpush.msra.mxu0 0.0
        %429 = vmatpush.msra.mxu0 0.0
        %430 = vmatpush.msra.mxu0 0.0
        %431 = vmatpush.msra.mxu0 0.0
        %432 = vmatpush.msra.mxu0 0.0
        %433 = vmatpush.msra.mxu0 0.0
        %434 = vmatpush.msra.mxu0 0.0
        %435 = vmatpush.msra.mxu0 0.0
        %436 = vmatpush.msra.mxu0 0.0
        %437 = vmatpush.msra.mxu0 0.0
        %438 = vmatpush.msra.mxu0 0.0
        %439 = vmatpush.msra.mxu0 0.0
        %440 = vmatpush.msra.mxu0 0.0
        %441 = vmatpush.msra.mxu0 0.0
        %442 = vmatpush.msra.mxu0 %v426
        %443 = vmatpush.msra.mxu0 %v412
        %444 = vmatmul.f32.gmra.mxu0 %v416
        %v445 = vpop.f32.mrf.mxu0
        %v446 = vadd.f32 0.0, %v445
        %447 = vmatmul.f32.gmra.mxu0 %v419
        %v448 = vpop.f32.mrf.mxu0
        %v449 = vadd.f32 0.0, %v448
        %450 = vmatmul.f32.gmra.mxu0 %v422
        %v451 = vpop.f32.mrf.mxu0
        %v452 = vadd.f32 0.0, %v451
        %453 = vdwg.mxu0
        %vm454 = vcmask 130048
        %v456 = vsel %vm454, %v446, 0
        %v459 = vsel %vm454, %v449, 0
        %v462 = vsel %vm454, %v452, 0
        %464 = vmatpush.msra.mxu0 0.0
        %465 = vmatpush.msra.mxu0 0.0
        %466 = vmatpush.msra.mxu0 0.0
        %467 = vmatpush.msra.mxu0 0.0
        %468 = vmatpush.msra.mxu0 0.0
        %469 = vmatpush.msra.mxu0 0.0
        %470 = vmatpush.msra.mxu0 0.0
        %471 = vmatpush.msra.mxu0 0.0
        %472 = vmatpush.msra.mxu0 0.0
        %473 = vmatpush.msra.mxu0 0.0
        %474 = vmatpush.msra.mxu0 0.0
        %475 = vmatpush.msra.mxu0 0.0
        %476 = vmatpush.msra.mxu0 0.0
        %477 = vmatpush.msra.mxu0 0.0
        %478 = vmatpush.msra.mxu0 %v364
        %479 = vmatpush.msra.mxu0 %v363
        %480 = vmatmul.f32.gmra.mxu0 %v456
        %v481 = vpop.f32.mrf.mxu0
        %v482 = vadd.f32 0.0, %v481
        %483 = vmatmul.f32.gmra.mxu0 %v459
        %v484 = vpop.f32.mrf.mxu0
        %v485 = vadd.f32 0.0, %v484
        %486 = vmatmul.f32.gmra.mxu0 %v462
        %v487 = vpop.f32.mrf.mxu0
        %v488 = vadd.f32 0.0, %v487
        %489 = vdwg.mxu0
        %s490 = sld [smem:[#allocation2 + $0x80]]
        %v491 = vstv %s490
        %v492 = vmul.f32 %v491, %v367
        %v493 = vmul.f32 %v491, %v368
        %v494 = vadd.f32 %v492, 0.0
        %v495 = vadd.f32 %v493, 0.0
        %s496 = sld [smem:[#allocation2 + $0x81]]
        %v497 = vstv %s496
        %v498 = vmul.f32 %v497, %v377
        %v499 = vmul.f32 %v497, %v378
        %v500 = vadd.f32 %v494, %v498
        %v501 = vadd.f32 %v495, %v499
        %s502 = sld [smem:[#allocation2 + $0x82]]
        %v503 = vstv %s502
        %v504 = vmul.f32 %v503, %v387
        %v505 = vmul.f32 %v503, %v388
        %v506 = vadd.f32 %v500, %v504
        %v507 = vadd.f32 %v501, %v505
        %s508 = sld [smem:[#allocation2 + $0x83]]
        %v509 = vstv %s508
        %v510 = vmul.f32 %v509, %v397
        %v511 = vmul.f32 %v509, %v398
        %v512 = vadd.f32 %v506, %v510
        %v513 = vadd.f32 %v507, %v511
        %s514 = sld [smem:[#allocation5 + $0x1]]
        %v515 = vstv %s514
        %v516 = vadd.f32 %v512, %v515
        %v517 = vadd.f32 %v513, %v515
        %v518 = vsel %vm410, %v516, 0.0
        %v519 = vsel %vm411, %v517, 0.0
        %v521 = vsel %vm424, %v519, 0
        %523 = vmatpush.msra.mxu0 0.0
        %524 = vmatpush.msra.mxu0 0.0
        %525 = vmatpush.msra.mxu0 0.0
        %526 = vmatpush.msra.mxu0 0.0
        %527 = vmatpush.msra.mxu0 0.0
        %528 = vmatpush.msra.mxu0 0.0
        %529 = vmatpush.msra.mxu0 0.0
        %530 = vmatpush.msra.mxu0 0.0
        %531 = vmatpush.msra.mxu0 0.0
        %532 = vmatpush.msra.mxu0 0.0
        %533 = vmatpush.msra.mxu0 0.0
        %534 = vmatpush.msra.mxu0 0.0
        %535 = vmatpush.msra.mxu0 0.0
        %536 = vmatpush.msra.mxu0 0.0
        %537 = vmatpush.msra.mxu0 %v521
        %538 = vmatpush.msra.mxu0 %v518
        %539 = vmatmul.f32.gmra.mxu0 %v416
        %v540 = vpop.f32.mrf.mxu0
        %v541 = vadd.f32 0.0, %v540
        %542 = vmatmul.f32.gmra.mxu0 %v419
        %v543 = vpop.f32.mrf.mxu0
        %v544 = vadd.f32 0.0, %v543
        %545 = vmatmul.f32.gmra.mxu0 %v422
        %v546 = vpop.f32.mrf.mxu0
        %v547 = vadd.f32 0.0, %v546
        %548 = vdwg.mxu0
        %v550 = vsel %vm454, %v541, 0
        %v553 = vsel %vm454, %v544, 0
        %v556 = vsel %vm454, %v547, 0
        %558 = vmatpush.msra.mxu0 0.0
        %559 = vmatpush.msra.mxu0 0.0
        %560 = vmatpush.msra.mxu0 0.0
        %561 = vmatpush.msra.mxu0 0.0
        %562 = vmatpush.msra.mxu0 0.0
        %563 = vmatpush.msra.mxu0 0.0
        %564 = vmatpush.msra.mxu0 0.0
        %565 = vmatpush.msra.mxu0 0.0
        %566 = vmatpush.msra.mxu0 0.0
        %567 = vmatpush.msra.mxu0 0.0
        %568 = vmatpush.msra.mxu0 0.0
        %569 = vmatpush.msra.mxu0 0.0
        %570 = vmatpush.msra.mxu0 0.0
        %571 = vmatpush.msra.mxu0 0.0
        %572 = vmatpush.msra.mxu0 %v364
        %573 = vmatpush.msra.mxu0 %v363
        %574 = vmatmul.f32.gmra.mxu0 %v550
        %v575 = vpop.f32.mrf.mxu0
        %v576 = vadd.f32 0.0, %v575
        %577 = vmatmul.f32.gmra.mxu0 %v553
        %v578 = vpop.f32.mrf.mxu0
        %v579 = vadd.f32 0.0, %v578
        %580 = vmatmul.f32.gmra.mxu0 %v556
        %v581 = vpop.f32.mrf.mxu0
        %v582 = vadd.f32 0.0, %v581
        %583 = vdwg.mxu0
        %s584 = sld [smem:[#allocation2 + $0x100]]
        %v585 = vstv %s584
        %v586 = vmul.f32 %v585, %v367
        %v587 = vmul.f32 %v585, %v368
        %v588 = vadd.f32 %v586, 0.0
        %v589 = vadd.f32 %v587, 0.0
        %s590 = sld [smem:[#allocation2 + $0x101]]
        %v591 = vstv %s590
        %v592 = vmul.f32 %v591, %v377
        %v593 = vmul.f32 %v591, %v378
        %v594 = vadd.f32 %v588, %v592
        %v595 = vadd.f32 %v589, %v593
        %s596 = sld [smem:[#allocation2 + $0x102]]
        %v597 = vstv %s596
        %v598 = vmul.f32 %v597, %v387
        %v599 = vmul.f32 %v597, %v388
        %v600 = vadd.f32 %v594, %v598
        %v601 = vadd.f32 %v595, %v599
        %s602 = sld [smem:[#allocation2 + $0x103]]
        %v603 = vstv %s602
        %v604 = vmul.f32 %v603, %v397
        %v605 = vmul.f32 %v603, %v398
        %v606 = vadd.f32 %v600, %v604
        %v607 = vadd.f32 %v601, %v605
        %s608 = sld [smem:[#allocation5 + $0x2]]
        %v609 = vstv %s608
        %v610 = vadd.f32 %v606, %v609
        %v611 = vadd.f32 %v607, %v609
        %v612 = vsel %vm410, %v610, 0.0
        %v613 = vsel %vm411, %v611, 0.0
        %v615 = vsel %vm424, %v613, 0
        %617 = vmatpush.msra.mxu0 0.0
        %618 = vmatpush.msra.mxu0 0.0
        %619 = vmatpush.msra.mxu0 0.0
        %620 = vmatpush.msra.mxu0 0.0
        %621 = vmatpush.msra.mxu0 0.0
        %622 = vmatpush.msra.mxu0 0.0
        %623 = vmatpush.msra.mxu0 0.0
        %624 = vmatpush.msra.mxu0 0.0
        %625 = vmatpush.msra.mxu0 0.0
        %626 = vmatpush.msra.mxu0 0.0
        %627 = vmatpush.msra.mxu0 0.0
        %628 = vmatpush.msra.mxu0 0.0
        %629 = vmatpush.msra.mxu0 0.0
        %630 = vmatpush.msra.mxu0 0.0
        %631 = vmatpush.msra.mxu0 %v615
        %632 = vmatpush.msra.mxu0 %v612
        %633 = vmatmul.f32.gmra.mxu0 %v416
        %v634 = vpop.f32.mrf.mxu0
        %v635 = vadd.f32 0.0, %v634
        %636 = vmatmul.f32.gmra.mxu0 %v419
        %v637 = vpop.f32.mrf.mxu0
        %v638 = vadd.f32 0.0, %v637
        %639 = vmatmul.f32.gmra.mxu0 %v422
        %v640 = vpop.f32.mrf.mxu0
        %v641 = vadd.f32 0.0, %v640
        %642 = vdwg.mxu0
        %v644 = vsel %vm454, %v635, 0
        %v647 = vsel %vm454, %v638, 0
        %v650 = vsel %vm454, %v641, 0
        %652 = vmatpush.msra.mxu0 0.0
        %653 = vmatpush.msra.mxu0 0.0
        %654 = vmatpush.msra.mxu0 0.0
        %655 = vmatpush.msra.mxu0 0.0
        %656 = vmatpush.msra.mxu0 0.0
        %657 = vmatpush.msra.mxu0 0.0
        %658 = vmatpush.msra.mxu0 0.0
        %659 = vmatpush.msra.mxu0 0.0
        %660 = vmatpush.msra.mxu0 0.0
        %661 = vmatpush.msra.mxu0 0.0
        %662 = vmatpush.msra.mxu0 0.0
        %663 = vmatpush.msra.mxu0 0.0
        %664 = vmatpush.msra.mxu0 0.0
        %665 = vmatpush.msra.mxu0 0.0
        %666 = vmatpush.msra.mxu0 %v364
        %667 = vmatpush.msra.mxu0 %v363
        %668 = vmatmul.f32.gmra.mxu0 %v644
        %v669 = vpop.f32.mrf.mxu0
        %v670 = vadd.f32 0.0, %v669
        %671 = vmatmul.f32.gmra.mxu0 %v647
        %v672 = vpop.f32.mrf.mxu0
        %v673 = vadd.f32 0.0, %v672
        %674 = vmatmul.f32.gmra.mxu0 %v650
        %v675 = vpop.f32.mrf.mxu0
        %v676 = vadd.f32 0.0, %v675
        %677 = vdwg.mxu0
        %s678 = sld [smem:[#allocation2 + $0x180]]
        %v679 = vstv %s678
        %v680 = vmul.f32 %v679, %v367
        %v681 = vmul.f32 %v679, %v368
        %v682 = vadd.f32 %v680, 0.0
        %v683 = vadd.f32 %v681, 0.0
        %s684 = sld [smem:[#allocation2 + $0x181]]
        %v685 = vstv %s684
        %v686 = vmul.f32 %v685, %v377
        %v687 = vmul.f32 %v685, %v378
        %v688 = vadd.f32 %v682, %v686
        %v689 = vadd.f32 %v683, %v687
        %s690 = sld [smem:[#allocation2 + $0x182]]
        %v691 = vstv %s690
        %v692 = vmul.f32 %v691, %v387
        %v693 = vmul.f32 %v691, %v388
        %v694 = vadd.f32 %v688, %v692
        %v695 = vadd.f32 %v689, %v693
        %s696 = sld [smem:[#allocation2 + $0x183]]
        %v697 = vstv %s696
        %v698 = vmul.f32 %v697, %v397
        %v699 = vmul.f32 %v697, %v398
        %v700 = vadd.f32 %v694, %v698
        %v701 = vadd.f32 %v695, %v699
        %s702 = sld [smem:[#allocation5 + $0x3]]
        %v703 = vstv %s702
        %v704 = vadd.f32 %v700, %v703
        %v705 = vadd.f32 %v701, %v703
        %v706 = vsel %vm410, %v704, 0.0
        %v707 = vsel %vm411, %v705, 0.0
        %v709 = vsel %vm424, %v707, 0
        %711 = vmatpush.msra.mxu0 0.0
        %712 = vmatpush.msra.mxu0 0.0
        %713 = vmatpush.msra.mxu0 0.0
        %714 = vmatpush.msra.mxu0 0.0
        %715 = vmatpush.msra.mxu0 0.0
        %716 = vmatpush.msra.mxu0 0.0
        %717 = vmatpush.msra.mxu0 0.0
        %718 = vmatpush.msra.mxu0 0.0
        %719 = vmatpush.msra.mxu0 0.0
        %720 = vmatpush.msra.mxu0 0.0
        %721 = vmatpush.msra.mxu0 0.0
        %722 = vmatpush.msra.mxu0 0.0
        %723 = vmatpush.msra.mxu0 0.0
        %724 = vmatpush.msra.mxu0 0.0
        %725 = vmatpush.msra.mxu0 %v709
        %726 = vmatpush.msra.mxu0 %v706
        %727 = vmatmul.f32.gmra.mxu0 %v416
        %v728 = vpop.f32.mrf.mxu0
        %v729 = vadd.f32 0.0, %v728
        %730 = vmatmul.f32.gmra.mxu0 %v419
        %v731 = vpop.f32.mrf.mxu0
        %v732 = vadd.f32 0.0, %v731
        %733 = vmatmul.f32.gmra.mxu0 %v422
        %v734 = vpop.f32.mrf.mxu0
        %v735 = vadd.f32 0.0, %v734
        %736 = vdwg.mxu0
        %v738 = vsel %vm454, %v729, 0
        %v741 = vsel %vm454, %v732, 0
        %v744 = vsel %vm454, %v735, 0
        %746 = vmatpush.msra.mxu0 0.0
        %747 = vmatpush.msra.mxu0 0.0
        %748 = vmatpush.msra.mxu0 0.0
        %749 = vmatpush.msra.mxu0 0.0
        %750 = vmatpush.msra.mxu0 0.0
        %751 = vmatpush.msra.mxu0 0.0
        %752 = vmatpush.msra.mxu0 0.0
        %753 = vmatpush.msra.mxu0 0.0
        %754 = vmatpush.msra.mxu0 0.0
        %755 = vmatpush.msra.mxu0 0.0
        %756 = vmatpush.msra.mxu0 0.0
        %757 = vmatpush.msra.mxu0 0.0
        %758 = vmatpush.msra.mxu0 0.0
        %759 = vmatpush.msra.mxu0 0.0
        %760 = vmatpush.msra.mxu0 %v364
        %761 = vmatpush.msra.mxu0 %v363
        %762 = vmatmul.f32.gmra.mxu0 %v738
        %v763 = vpop.f32.mrf.mxu0
        %v764 = vadd.f32 0.0, %v763
        %765 = vmatmul.f32.gmra.mxu0 %v741
        %v766 = vpop.f32.mrf.mxu0
        %v767 = vadd.f32 0.0, %v766
        %768 = vmatmul.f32.gmra.mxu0 %v744
        %v769 = vpop.f32.mrf.mxu0
        %v770 = vadd.f32 0.0, %v769
        %771 = vdwg.mxu0
        %s772 = sld [smem:[#allocation7]]
        %v773 = vstv %s772
        %v774 = vmul.f32 %v773, %v482
        %v775 = vmul.f32 %v773, %v485
        %v776 = vadd.f32 %v774, 0.0
        %v777 = vadd.f32 %v775, 0.0
        %s778 = sld [smem:[#allocation7 + $0x200]]
        %v779 = vstv %s778
        %v780 = vmul.f32 %v779, %v482
        %v781 = vmul.f32 %v779, %v485
        %v782 = vadd.f32 %v780, 0.0
        %v783 = vadd.f32 %v781, 0.0
        %s784 = sld [smem:[#allocation7 + $0x400]]
        %v785 = vstv %s784
        %v786 = vmul.f32 %v785, %v482
        %v787 = vmul.f32 %v785, %v485
        %v788 = vadd.f32 %v786, 0.0
        %v789 = vadd.f32 %v787, 0.0
        %s790 = sld [smem:[#allocation7 + $0x600]]
        %v791 = vstv %s790
        %v792 = vmul.f32 %v791, %v482
        %v793 = vmul.f32 %v791, %v485
        %v794 = vadd.f32 %v792, 0.0
        %v795 = vadd.f32 %v793, 0.0
        %s796 = sld [smem:[#allocation7 + $0x1]]
        %v797 = vstv %s796
        %v798 = vmul.f32 %v797, %v482
        %v799 = vmul.f32 %v797, %v485
        %802 = vrot.lane.b32.xlu0 %v798, 127
        %v803 = vpop.permute.xlu0 %802
        %804 = vrot.lane.b32.xlu0 %v799, 127
        %v805 = vpop.permute.xlu0 %804
        %v808 = vadd.f32 %v776, %v803
        %v809 = vadd.f32 %v777, %v805
        %s810 = sld [smem:[#allocation7 + $0x201]]
        %v811 = vstv %s810
        %v812 = vmul.f32 %v811, %v482
        %v813 = vmul.f32 %v811, %v485
        %816 = vrot.lane.b32.xlu0 %v812, 127
        %v817 = vpop.permute.xlu0 %816
        %818 = vrot.lane.b32.xlu0 %v813, 127
        %v819 = vpop.permute.xlu0 %818
        %v822 = vadd.f32 %v782, %v817
        %v823 = vadd.f32 %v783, %v819
        %s824 = sld [smem:[#allocation7 + $0x401]]
        %v825 = vstv %s824
        %v826 = vmul.f32 %v825, %v482
        %v827 = vmul.f32 %v825, %v485
        %830 = vrot.lane.b32.xlu0 %v826, 127
        %v831 = vpop.permute.xlu0 %830
        %832 = vrot.lane.b32.xlu0 %v827, 127
        %v833 = vpop.permute.xlu0 %832
        %v836 = vadd.f32 %v788, %v831
        %v837 = vadd.f32 %v789, %v833
        %s838 = sld [smem:[#allocation7 + $0x601]]
        %v839 = vstv %s838
        %v840 = vmul.f32 %v839, %v482
        %v841 = vmul.f32 %v839, %v485
        %844 = vrot.lane.b32.xlu0 %v840, 127
        %v845 = vpop.permute.xlu0 %844
        %846 = vrot.lane.b32.xlu0 %v841, 127
        %v847 = vpop.permute.xlu0 %846
        %v850 = vadd.f32 %v794, %v845
        %v851 = vadd.f32 %v795, %v847
        %s852 = sld [smem:[#allocation7 + $0x2]]
        %v853 = vstv %s852
        %v854 = vmul.f32 %v853, %v482
        %v855 = vmul.f32 %v853, %v485
        %858 = vrot.lane.b32.xlu0 %v854, 126
        %v859 = vpop.permute.xlu0 %858
        %860 = vrot.lane.b32.xlu0 %v855, 126
        %v861 = vpop.permute.xlu0 %860
        %v864 = vadd.f32 %v808, %v859
        %v865 = vadd.f32 %v809, %v861
        %s866 = sld [smem:[#allocation7 + $0x202]]
        %v867 = vstv %s866
        %v868 = vmul.f32 %v867, %v482
        %v869 = vmul.f32 %v867, %v485
        %872 = vrot.lane.b32.xlu0 %v868, 126
        %v873 = vpop.permute.xlu0 %872
        %874 = vrot.lane.b32.xlu0 %v869, 126
        %v875 = vpop.permute.xlu0 %874
        %v878 = vadd.f32 %v822, %v873
        %v879 = vadd.f32 %v823, %v875
        %s880 = sld [smem:[#allocation7 + $0x402]]
        %v881 = vstv %s880
        %v882 = vmul.f32 %v881, %v482
        %v883 = vmul.f32 %v881, %v485
        %886 = vrot.lane.b32.xlu0 %v882, 126
        %v887 = vpop.permute.xlu0 %886
        %888 = vrot.lane.b32.xlu0 %v883, 126
        %v889 = vpop.permute.xlu0 %888
        %v892 = vadd.f32 %v836, %v887
        %v893 = vadd.f32 %v837, %v889
        %s894 = sld [smem:[#allocation7 + $0x602]]
        %v895 = vstv %s894
        %v896 = vmul.f32 %v895, %v482
        %v897 = vmul.f32 %v895, %v485
        %900 = vrot.lane.b32.xlu0 %v896, 126
        %v901 = vpop.permute.xlu0 %900
        %902 = vrot.lane.b32.xlu0 %v897, 126
        %v903 = vpop.permute.xlu0 %902
        %v906 = vadd.f32 %v850, %v901
        %v907 = vadd.f32 %v851, %v903
        %s908 = sld [smem:[#allocation7 + $0x3]]
        %v909 = vstv %s908
        %v910 = vmul.f32 %v909, %v482
        %v911 = vmul.f32 %v909, %v485
        %v912 = vmul.f32 %v909, %v488
        %vm916 = vcmask 1046528
        %v917 = vrot.slane %v910, 1
        %v918 = vrot.slane %v911, 1
        %v919 = vsel %vm916, %v917, %v918
        %v920 = vrot.slane %v912, 1
        %v921 = vsel %vm916, %v918, %v920
        %v924 = vadd.f32 %v864, %v919
        %v925 = vadd.f32 %v865, %v921
        %s926 = sld [smem:[#allocation7 + $0x203]]
        %v927 = vstv %s926
        %v928 = vmul.f32 %v927, %v482
        %v929 = vmul.f32 %v927, %v485
        %v930 = vmul.f32 %v927, %v488
        %v934 = vrot.slane %v928, 1
        %v935 = vrot.slane %v929, 1
        %v936 = vsel %vm916, %v934, %v935
        %v937 = vrot.slane %v930, 1
        %v938 = vsel %vm916, %v935, %v937
        %v941 = vadd.f32 %v878, %v936
        %v942 = vadd.f32 %v879, %v938
        %s943 = sld [smem:[#allocation7 + $0x403]]
        %v944 = vstv %s943
        %v945 = vmul.f32 %v944, %v482
        %v946 = vmul.f32 %v944, %v485
        %v947 = vmul.f32 %v944, %v488
        %v951 = vrot.slane %v945, 1
        %v952 = vrot.slane %v946, 1
        %v953 = vsel %vm916, %v951, %v952
        %v954 = vrot.slane %v947, 1
        %v955 = vsel %vm916, %v952, %v954
        %v958 = vadd.f32 %v892, %v953
        %v959 = vadd.f32 %v893, %v955
        %s960 = sld [smem:[#allocation7 + $0x603]]
        %v961 = vstv %s960
        %v962 = vmul.f32 %v961, %v482
        %v963 = vmul.f32 %v961, %v485
        %v964 = vmul.f32 %v961, %v488
        %v968 = vrot.slane %v962, 1
        %v969 = vrot.slane %v963, 1
        %v970 = vsel %vm916, %v968, %v969
        %v971 = vrot.slane %v964, 1
        %v972 = vsel %vm916, %v969, %v971
        %v975 = vadd.f32 %v906, %v970
        %v976 = vadd.f32 %v907, %v972
        %s977 = sld [smem:[#allocation7 + $0x4]]
        %v978 = vstv %s977
        %v979 = vmul.f32 %v978, %v482
        %v980 = vmul.f32 %v978, %v485
        %v981 = vmul.f32 %v978, %v488
        %v985 = vrot.slane %v979, 1
        %v986 = vrot.slane %v980, 1
        %v987 = vsel %vm916, %v985, %v986
        %v988 = vrot.slane %v981, 1
        %v989 = vsel %vm916, %v986, %v988
        %990 = vrot.lane.b32.xlu0 %v987, 127
        %v991 = vpop.permute.xlu0 %990
        %992 = vrot.lane.b32.xlu0 %v989, 127
        %v993 = vpop.permute.xlu0 %992
        %v996 = vadd.f32 %v924, %v991
        %v997 = vadd.f32 %v925, %v993
        %s998 = sld [smem:[#allocation7 + $0x204]]
        %v999 = vstv %s998
        %v1000 = vmul.f32 %v999, %v482
        %v1001 = vmul.f32 %v999, %v485
        %v1002 = vmul.f32 %v999, %v488
        %v1006 = vrot.slane %v1000, 1
        %v1007 = vrot.slane %v1001, 1
        %v1008 = vsel %vm916, %v1006, %v1007
        %v1009 = vrot.slane %v1002, 1
        %v1010 = vsel %vm916, %v1007, %v1009
        %1011 = vrot.lane.b32.xlu0 %v1008, 127
        %v1012 = vpop.permute.xlu0 %1011
        %1013 = vrot.lane.b32.xlu0 %v1010, 127
        %v1014 = vpop.permute.xlu0 %1013
        %v1017 = vadd.f32 %v941, %v1012
        %v1018 = vadd.f32 %v942, %v1014
        %s1019 = sld [smem:[#allocation7 + $0x404]]
        %v1020 = vstv %s1019
        %v1021 = vmul.f32 %v1020, %v482
        %v1022 = vmul.f32 %v1020, %v485
        %v1023 = vmul.f32 %v1020, %v488
        %v1027 = vrot.slane %v1021, 1
        %v1028 = vrot.slane %v1022, 1
        %v1029 = vsel %vm916, %v1027, %v1028
        %v1030 = vrot.slane %v1023, 1
        %v1031 = vsel %vm916, %v1028, %v1030
        %1032 = vrot.lane.b32.xlu0 %v1029, 127
        %v1033 = vpop.permute.xlu0 %1032
        %1034 = vrot.lane.b32.xlu0 %v1031, 127
        %v1035 = vpop.permute.xlu0 %1034
        %v1038 = vadd.f32 %v958, %v1033
        %v1039 = vadd.f32 %v959, %v1035
        %s1040 = sld [smem:[#allocation7 + $0x604]]
        %v1041 = vstv %s1040
        %v1042 = vmul.f32 %v1041, %v482
        %v1043 = vmul.f32 %v1041, %v485
        %v1044 = vmul.f32 %v1041, %v488
        %v1048 = vrot.slane %v1042, 1
        %v1049 = vrot.slane %v1043, 1
        %v1050 = vsel %vm916, %v1048, %v1049
        %v1051 = vrot.slane %v1044, 1
        %v1052 = vsel %vm916, %v1049, %v1051
        %1053 = vrot.lane.b32.xlu0 %v1050, 127
        %v1054 = vpop.permute.xlu0 %1053
        %1055 = vrot.lane.b32.xlu0 %v1052, 127
        %v1056 = vpop.permute.xlu0 %1055
        %v1059 = vadd.f32 %v975, %v1054
        %v1060 = vadd.f32 %v976, %v1056
        %s1061 = sld [smem:[#allocation7 + $0x5]]
        %v1062 = vstv %s1061
        %v1063 = vmul.f32 %v1062, %v482
        %v1064 = vmul.f32 %v1062, %v485
        %v1065 = vmul.f32 %v1062, %v488
        %v1069 = vrot.slane %v1063, 1
        %v1070 = vrot.slane %v1064, 1
        %v1071 = vsel %vm916, %v1069, %v1070
        %v1072 = vrot.slane %v1065, 1
        %v1073 = vsel %vm916, %v1070, %v1072
        %1074 = vrot.lane.b32.xlu0 %v1071, 126
        %v1075 = vpop.permute.xlu0 %1074
        %1076 = vrot.lane.b32.xlu0 %v1073, 126
        %v1077 = vpop.permute.xlu0 %1076
        %v1080 = vadd.f32 %v996, %v1075
        %v1081 = vadd.f32 %v997, %v1077
        %s1082 = sld [smem:[#allocation7 + $0x205]]
        %v1083 = vstv %s1082
        %v1084 = vmul.f32 %v1083, %v482
        %v1085 = vmul.f32 %v1083, %v485
        %v1086 = vmul.f32 %v1083, %v488
        %v1090 = vrot.slane %v1084, 1
        %v1091 = vrot.slane %v1085, 1
        %v1092 = vsel %vm916, %v1090, %v1091
        %v1093 = vrot.slane %v1086, 1
        %v1094 = vsel %vm916, %v1091, %v1093
        %1095 = vrot.lane.b32.xlu0 %v1092, 126
        %v1096 = vpop.permute.xlu0 %1095
        %1097 = vrot.lane.b32.xlu0 %v1094, 126
        %v1098 = vpop.permute.xlu0 %1097
        %v1101 = vadd.f32 %v1017, %v1096
        %v1102 = vadd.f32 %v1018, %v1098
        %s1103 = sld [smem:[#allocation7 + $0x405]]
        %v1104 = vstv %s1103
        %v1105 = vmul.f32 %v1104, %v482
        %v1106 = vmul.f32 %v1104, %v485
        %v1107 = vmul.f32 %v1104, %v488
        %v1111 = vrot.slane %v1105, 1
        %v1112 = vrot.slane %v1106, 1
        %v1113 = vsel %vm916, %v1111, %v1112
        %v1114 = vrot.slane %v1107, 1
        %v1115 = vsel %vm916, %v1112, %v1114
        %1116 = vrot.lane.b32.xlu0 %v1113, 126
        %v1117 = vpop.permute.xlu0 %1116
        %1118 = vrot.lane.b32.xlu0 %v1115, 126
        %v1119 = vpop.permute.xlu0 %1118
        %v1122 = vadd.f32 %v1038, %v1117
        %v1123 = vadd.f32 %v1039, %v1119
        %s1124 = sld [smem:[#allocation7 + $0x605]]
        %v1125 = vstv %s1124
        %v1126 = vmul.f32 %v1125, %v482
        %v1127 = vmul.f32 %v1125, %v485
        %v1128 = vmul.f32 %v1125, %v488
        %v1132 = vrot.slane %v1126, 1
        %v1133 = vrot.slane %v1127, 1
        %v1134 = vsel %vm916, %v1132, %v1133
        %v1135 = vrot.slane %v1128, 1
        %v1136 = vsel %vm916, %v1133, %v1135
        %1137 = vrot.lane.b32.xlu0 %v1134, 126
        %v1138 = vpop.permute.xlu0 %1137
        %1139 = vrot.lane.b32.xlu0 %v1136, 126
        %v1140 = vpop.permute.xlu0 %1139
        %v1143 = vadd.f32 %v1059, %v1138
        %v1144 = vadd.f32 %v1060, %v1140
        %s1145 = sld [smem:[#allocation7 + $0x6]]
        %v1146 = vstv %s1145
        %v1147 = vmul.f32 %v1146, %v482
        %v1148 = vmul.f32 %v1146, %v485
        %v1149 = vmul.f32 %v1146, %v488
        %vm1153 = vcmask 1045504
        %v1154 = vrot.slane %v1147, 2
        %v1155 = vrot.slane %v1148, 2
        %v1156 = vsel %vm1153, %v1154, %v1155
        %v1157 = vrot.slane %v1149, 2
        %v1158 = vsel %vm1153, %v1155, %v1157
        %v1161 = vadd.f32 %v1080, %v1156
        %v1162 = vadd.f32 %v1081, %v1158
        %s1163 = sld [smem:[#allocation7 + $0x206]]
        %v1164 = vstv %s1163
        %v1165 = vmul.f32 %v1164, %v482
        %v1166 = vmul.f32 %v1164, %v485
        %v1167 = vmul.f32 %v1164, %v488
        %v1171 = vrot.slane %v1165, 2
        %v1172 = vrot.slane %v1166, 2
        %v1173 = vsel %vm1153, %v1171, %v1172
        %v1174 = vrot.slane %v1167, 2
        %v1175 = vsel %vm1153, %v1172, %v1174
        %v1178 = vadd.f32 %v1101, %v1173
        %v1179 = vadd.f32 %v1102, %v1175
        %s1180 = sld [smem:[#allocation7 + $0x406]]
        %v1181 = vstv %s1180
        %v1182 = vmul.f32 %v1181, %v482
        %v1183 = vmul.f32 %v1181, %v485
        %v1184 = vmul.f32 %v1181, %v488
        %v1188 = vrot.slane %v1182, 2
        %v1189 = vrot.slane %v1183, 2
        %v1190 = vsel %vm1153, %v1188, %v1189
        %v1191 = vrot.slane %v1184, 2
        %v1192 = vsel %vm1153, %v1189, %v1191
        %v1195 = vadd.f32 %v1122, %v1190
        %v1196 = vadd.f32 %v1123, %v1192
        %s1197 = sld [smem:[#allocation7 + $0x606]]
        %v1198 = vstv %s1197
        %v1199 = vmul.f32 %v1198, %v482
        %v1200 = vmul.f32 %v1198, %v485
        %v1201 = vmul.f32 %v1198, %v488
        %v1205 = vrot.slane %v1199, 2
        %v1206 = vrot.slane %v1200, 2
        %v1207 = vsel %vm1153, %v1205, %v1206
        %v1208 = vrot.slane %v1201, 2
        %v1209 = vsel %vm1153, %v1206, %v1208
        %v1212 = vadd.f32 %v1143, %v1207
        %v1213 = vadd.f32 %v1144, %v1209
        %s1214 = sld [smem:[#allocation7 + $0x7]]
        %v1215 = vstv %s1214
        %v1216 = vmul.f32 %v1215, %v482
        %v1217 = vmul.f32 %v1215, %v485
        %v1218 = vmul.f32 %v1215, %v488
        %v1222 = vrot.slane %v1216, 2
        %v1223 = vrot.slane %v1217, 2
        %v1224 = vsel %vm1153, %v1222, %v1223
        %v1225 = vrot.slane %v1218, 2
        %v1226 = vsel %vm1153, %v1223, %v1225
        %1227 = vrot.lane.b32.xlu0 %v1224, 127
        %v1228 = vpop.permute.xlu0 %1227
        %1229 = vrot.lane.b32.xlu0 %v1226, 127
        %v1230 = vpop.permute.xlu0 %1229
        %v1233 = vadd.f32 %v1161, %v1228
        %v1234 = vadd.f32 %v1162, %v1230
        %s1235 = sld [smem:[#allocation7 + $0x207]]
        %v1236 = vstv %s1235
        %v1237 = vmul.f32 %v1236, %v482
        %v1238 = vmul.f32 %v1236, %v485
        %v1239 = vmul.f32 %v1236, %v488
        %v1243 = vrot.slane %v1237, 2
        %v1244 = vrot.slane %v1238, 2
        %v1245 = vsel %vm1153, %v1243, %v1244
        %v1246 = vrot.slane %v1239, 2
        %v1247 = vsel %vm1153, %v1244, %v1246
        %1248 = vrot.lane.b32.xlu0 %v1245, 127
        %v1249 = vpop.permute.xlu0 %1248
        %1250 = vrot.lane.b32.xlu0 %v1247, 127
        %v1251 = vpop.permute.xlu0 %1250
        %v1254 = vadd.f32 %v1178, %v1249
        %v1255 = vadd.f32 %v1179, %v1251
        %s1256 = sld [smem:[#allocation7 + $0x407]]
        %v1257 = vstv %s1256
        %v1258 = vmul.f32 %v1257, %v482
        %v1259 = vmul.f32 %v1257, %v485
        %v1260 = vmul.f32 %v1257, %v488
        %v1264 = vrot.slane %v1258, 2
        %v1265 = vrot.slane %v1259, 2
        %v1266 = vsel %vm1153, %v1264, %v1265
        %v1267 = vrot.slane %v1260, 2
        %v1268 = vsel %vm1153, %v1265, %v1267
        %1269 = vrot.lane.b32.xlu0 %v1266, 127
        %v1270 = vpop.permute.xlu0 %1269
        %1271 = vrot.lane.b32.xlu0 %v1268, 127
        %v1272 = vpop.permute.xlu0 %1271
        %v1275 = vadd.f32 %v1195, %v1270
        %v1276 = vadd.f32 %v1196, %v1272
        %s1277 = sld [smem:[#allocation7 + $0x607]]
        %v1278 = vstv %s1277
        %v1279 = vmul.f32 %v1278, %v482
        %v1280 = vmul.f32 %v1278, %v485
        %v1281 = vmul.f32 %v1278, %v488
        %v1285 = vrot.slane %v1279, 2
        %v1286 = vrot.slane %v1280, 2
        %v1287 = vsel %vm1153, %v1285, %v1286
        %v1288 = vrot.slane %v1281, 2
        %v1289 = vsel %vm1153, %v1286, %v1288
        %1290 = vrot.lane.b32.xlu0 %v1287, 127
        %v1291 = vpop.permute.xlu0 %1290
        %1292 = vrot.lane.b32.xlu0 %v1289, 127
        %v1293 = vpop.permute.xlu0 %1292
        %v1296 = vadd.f32 %v1212, %v1291
        %v1297 = vadd.f32 %v1213, %v1293
        %s1298 = sld [smem:[#allocation7 + $0x8]]
        %v1299 = vstv %s1298
        %v1300 = vmul.f32 %v1299, %v482
        %v1301 = vmul.f32 %v1299, %v485
        %v1302 = vmul.f32 %v1299, %v488
        %v1306 = vrot.slane %v1300, 2
        %v1307 = vrot.slane %v1301, 2
        %v1308 = vsel %vm1153, %v1306, %v1307
        %v1309 = vrot.slane %v1302, 2
        %v1310 = vsel %vm1153, %v1307, %v1309
        %1311 = vrot.lane.b32.xlu0 %v1308, 126
        %v1312 = vpop.permute.xlu0 %1311
        %1313 = vrot.lane.b32.xlu0 %v1310, 126
        %v1314 = vpop.permute.xlu0 %1313
        %v1317 = vadd.f32 %v1233, %v1312
        %v1318 = vadd.f32 %v1234, %v1314
        %s1319 = sld [smem:[#allocation7 + $0x208]]
        %v1320 = vstv %s1319
        %v1321 = vmul.f32 %v1320, %v482
        %v1322 = vmul.f32 %v1320, %v485
        %v1323 = vmul.f32 %v1320, %v488
        %v1327 = vrot.slane %v1321, 2
        %v1328 = vrot.slane %v1322, 2
        %v1329 = vsel %vm1153, %v1327, %v1328
        %v1330 = vrot.slane %v1323, 2
        %v1331 = vsel %vm1153, %v1328, %v1330
        %1332 = vrot.lane.b32.xlu0 %v1329, 126
        %v1333 = vpop.permute.xlu0 %1332
        %1334 = vrot.lane.b32.xlu0 %v1331, 126
        %v1335 = vpop.permute.xlu0 %1334
        %v1338 = vadd.f32 %v1254, %v1333
        %v1339 = vadd.f32 %v1255, %v1335
        %s1340 = sld [smem:[#allocation7 + $0x408]]
        %v1341 = vstv %s1340
        %v1342 = vmul.f32 %v1341, %v482
        %v1343 = vmul.f32 %v1341, %v485
        %v1344 = vmul.f32 %v1341, %v488
        %v1348 = vrot.slane %v1342, 2
        %v1349 = vrot.slane %v1343, 2
        %v1350 = vsel %vm1153, %v1348, %v1349
        %v1351 = vrot.slane %v1344, 2
        %v1352 = vsel %vm1153, %v1349, %v1351
        %1353 = vrot.lane.b32.xlu0 %v1350, 126
        %v1354 = vpop.permute.xlu0 %1353
        %1355 = vrot.lane.b32.xlu0 %v1352, 126
        %v1356 = vpop.permute.xlu0 %1355
        %v1359 = vadd.f32 %v1275, %v1354
        %v1360 = vadd.f32 %v1276, %v1356
        %s1361 = sld [smem:[#allocation7 + $0x608]]
        %v1362 = vstv %s1361
        %v1363 = vmul.f32 %v1362, %v482
        %v1364 = vmul.f32 %v1362, %v485
        %v1365 = vmul.f32 %v1362, %v488
        %v1369 = vrot.slane %v1363, 2
        %v1370 = vrot.slane %v1364, 2
        %v1371 = vsel %vm1153, %v1369, %v1370
        %v1372 = vrot.slane %v1365, 2
        %v1373 = vsel %vm1153, %v1370, %v1372
        %1374 = vrot.lane.b32.xlu0 %v1371, 126
        %v1375 = vpop.permute.xlu0 %1374
        %1376 = vrot.lane.b32.xlu0 %v1373, 126
        %v1377 = vpop.permute.xlu0 %1376
        %v1380 = vadd.f32 %v1296, %v1375
        %v1381 = vadd.f32 %v1297, %v1377
        %s1382 = sld [smem:[#allocation7 + $0x80]]
        %v1383 = vstv %s1382
        %v1384 = vmul.f32 %v1383, %v576
        %v1385 = vmul.f32 %v1383, %v579
        %v1386 = vadd.f32 %v1317, %v1384
        %v1387 = vadd.f32 %v1318, %v1385
        %s1388 = sld [smem:[#allocation7 + $0x280]]
        %v1389 = vstv %s1388
        %v1390 = vmul.f32 %v1389, %v576
        %v1391 = vmul.f32 %v1389, %v579
        %v1392 = vadd.f32 %v1338, %v1390
        %v1393 = vadd.f32 %v1339, %v1391
        %s1394 = sld [smem:[#allocation7 + $0x480]]
        %v1395 = vstv %s1394
        %v1396 = vmul.f32 %v1395, %v576
        %v1397 = vmul.f32 %v1395, %v579
        %v1398 = vadd.f32 %v1359, %v1396
        %v1399 = vadd.f32 %v1360, %v1397
        %s1400 = sld [smem:[#allocation7 + $0x680]]
        %v1401 = vstv %s1400
        %v1402 = vmul.f32 %v1401, %v576
        %v1403 = vmul.f32 %v1401, %v579
        %v1404 = vadd.f32 %v1380, %v1402
        %v1405 = vadd.f32 %v1381, %v1403
        %s1406 = sld [smem:[#allocation7 + $0x81]]
        %v1407 = vstv %s1406
        %v1408 = vmul.f32 %v1407, %v576
        %v1409 = vmul.f32 %v1407, %v579
        %1412 = vrot.lane.b32.xlu0 %v1408, 127
        %v1413 = vpop.permute.xlu0 %1412
        %1414 = vrot.lane.b32.xlu0 %v1409, 127
        %v1415 = vpop.permute.xlu0 %1414
        %v1418 = vadd.f32 %v1386, %v1413
        %v1419 = vadd.f32 %v1387, %v1415
        %s1420 = sld [smem:[#allocation7 + $0x281]]
        %v1421 = vstv %s1420
        %v1422 = vmul.f32 %v1421, %v576
        %v1423 = vmul.f32 %v1421, %v579
        %1426 = vrot.lane.b32.xlu0 %v1422, 127
        %v1427 = vpop.permute.xlu0 %1426
        %1428 = vrot.lane.b32.xlu0 %v1423, 127
        %v1429 = vpop.permute.xlu0 %1428
        %v1432 = vadd.f32 %v1392, %v1427
        %v1433 = vadd.f32 %v1393, %v1429
        %s1434 = sld [smem:[#allocation7 + $0x481]]
        %v1435 = vstv %s1434
        %v1436 = vmul.f32 %v1435, %v576
        %v1437 = vmul.f32 %v1435, %v579
        %1440 = vrot.lane.b32.xlu0 %v1436, 127
        %v1441 = vpop.permute.xlu0 %1440
        %1442 = vrot.lane.b32.xlu0 %v1437, 127
        %v1443 = vpop.permute.xlu0 %1442
        %v1446 = vadd.f32 %v1398, %v1441
        %v1447 = vadd.f32 %v1399, %v1443
        %s1448 = sld [smem:[#allocation7 + $0x681]]
        %v1449 = vstv %s1448
        %v1450 = vmul.f32 %v1449, %v576
        %v1451 = vmul.f32 %v1449, %v579
        %1454 = vrot.lane.b32.xlu0 %v1450, 127
        %v1455 = vpop.permute.xlu0 %1454
        %1456 = vrot.lane.b32.xlu0 %v1451, 127
        %v1457 = vpop.permute.xlu0 %1456
        %v1460 = vadd.f32 %v1404, %v1455
        %v1461 = vadd.f32 %v1405, %v1457
        %s1462 = sld [smem:[#allocation7 + $0x82]]
        %v1463 = vstv %s1462
        %v1464 = vmul.f32 %v1463, %v576
        %v1465 = vmul.f32 %v1463, %v579
        %1468 = vrot.lane.b32.xlu0 %v1464, 126
        %v1469 = vpop.permute.xlu0 %1468
        %1470 = vrot.lane.b32.xlu0 %v1465, 126
        %v1471 = vpop.permute.xlu0 %1470
        %v1474 = vadd.f32 %v1418, %v1469
        %v1475 = vadd.f32 %v1419, %v1471
        %s1476 = sld [smem:[#allocation7 + $0x282]]
        %v1477 = vstv %s1476
        %v1478 = vmul.f32 %v1477, %v576
        %v1479 = vmul.f32 %v1477, %v579
        %1482 = vrot.lane.b32.xlu0 %v1478, 126
        %v1483 = vpop.permute.xlu0 %1482
        %1484 = vrot.lane.b32.xlu0 %v1479, 126
        %v1485 = vpop.permute.xlu0 %1484
        %v1488 = vadd.f32 %v1432, %v1483
        %v1489 = vadd.f32 %v1433, %v1485
        %s1490 = sld [smem:[#allocation7 + $0x482]]
        %v1491 = vstv %s1490
        %v1492 = vmul.f32 %v1491, %v576
        %v1493 = vmul.f32 %v1491, %v579
        %1496 = vrot.lane.b32.xlu0 %v1492, 126
        %v1497 = vpop.permute.xlu0 %1496
        %1498 = vrot.lane.b32.xlu0 %v1493, 126
        %v1499 = vpop.permute.xlu0 %1498
        %v1502 = vadd.f32 %v1446, %v1497
        %v1503 = vadd.f32 %v1447, %v1499
        %s1504 = sld [smem:[#allocation7 + $0x682]]
        %v1505 = vstv %s1504
        %v1506 = vmul.f32 %v1505, %v576
        %v1507 = vmul.f32 %v1505, %v579
        %1510 = vrot.lane.b32.xlu0 %v1506, 126
        %v1511 = vpop.permute.xlu0 %1510
        %1512 = vrot.lane.b32.xlu0 %v1507, 126
        %v1513 = vpop.permute.xlu0 %1512
        %v1516 = vadd.f32 %v1460, %v1511
        %v1517 = vadd.f32 %v1461, %v1513
        %s1518 = sld [smem:[#allocation7 + $0x83]]
        %v1519 = vstv %s1518
        %v1520 = vmul.f32 %v1519, %v576
        %v1521 = vmul.f32 %v1519, %v579
        %v1522 = vmul.f32 %v1519, %v582
        %v1526 = vrot.slane %v1520, 1
        %v1527 = vrot.slane %v1521, 1
        %v1528 = vsel %vm916, %v1526, %v1527
        %v1529 = vrot.slane %v1522, 1
        %v1530 = vsel %vm916, %v1527, %v1529
        %v1533 = vadd.f32 %v1474, %v1528
        %v1534 = vadd.f32 %v1475, %v1530
        %s1535 = sld [smem:[#allocation7 + $0x283]]
        %v1536 = vstv %s1535
        %v1537 = vmul.f32 %v1536, %v576
        %v1538 = vmul.f32 %v1536, %v579
        %v1539 = vmul.f32 %v1536, %v582
        %v1543 = vrot.slane %v1537, 1
        %v1544 = vrot.slane %v1538, 1
        %v1545 = vsel %vm916, %v1543, %v1544
        %v1546 = vrot.slane %v1539, 1
        %v1547 = vsel %vm916, %v1544, %v1546
        %v1550 = vadd.f32 %v1488, %v1545
        %v1551 = vadd.f32 %v1489, %v1547
        %s1552 = sld [smem:[#allocation7 + $0x483]]
        %v1553 = vstv %s1552
        %v1554 = vmul.f32 %v1553, %v576
        %v1555 = vmul.f32 %v1553, %v579
        %v1556 = vmul.f32 %v1553, %v582
        %v1560 = vrot.slane %v1554, 1
        %v1561 = vrot.slane %v1555, 1
        %v1562 = vsel %vm916, %v1560, %v1561
        %v1563 = vrot.slane %v1556, 1
        %v1564 = vsel %vm916, %v1561, %v1563
        %v1567 = vadd.f32 %v1502, %v1562
        %v1568 = vadd.f32 %v1503, %v1564
        %s1569 = sld [smem:[#allocation7 + $0x683]]
        %v1570 = vstv %s1569
        %v1571 = vmul.f32 %v1570, %v576
        %v1572 = vmul.f32 %v1570, %v579
        %v1573 = vmul.f32 %v1570, %v582
        %v1577 = vrot.slane %v1571, 1
        %v1578 = vrot.slane %v1572, 1
        %v1579 = vsel %vm916, %v1577, %v1578
        %v1580 = vrot.slane %v1573, 1
        %v1581 = vsel %vm916, %v1578, %v1580
        %v1584 = vadd.f32 %v1516, %v1579
        %v1585 = vadd.f32 %v1517, %v1581
        %s1586 = sld [smem:[#allocation7 + $0x84]]
        %v1587 = vstv %s1586
        %v1588 = vmul.f32 %v1587, %v576
        %v1589 = vmul.f32 %v1587, %v579
        %v1590 = vmul.f32 %v1587, %v582
        %v1594 = vrot.slane %v1588, 1
        %v1595 = vrot.slane %v1589, 1
        %v1596 = vsel %vm916, %v1594, %v1595
        %v1597 = vrot.slane %v1590, 1
        %v1598 = vsel %vm916, %v1595, %v1597
        %1599 = vrot.lane.b32.xlu0 %v1596, 127
        %v1600 = vpop.permute.xlu0 %1599
        %1601 = vrot.lane.b32.xlu0 %v1598, 127
        %v1602 = vpop.permute.xlu0 %1601
        %v1605 = vadd.f32 %v1533, %v1600
        %v1606 = vadd.f32 %v1534, %v1602
        %s1607 = sld [smem:[#allocation7 + $0x284]]
        %v1608 = vstv %s1607
        %v1609 = vmul.f32 %v1608, %v576
        %v1610 = vmul.f32 %v1608, %v579
        %v1611 = vmul.f32 %v1608, %v582
        %v1615 = vrot.slane %v1609, 1
        %v1616 = vrot.slane %v1610, 1
        %v1617 = vsel %vm916, %v1615, %v1616
        %v1618 = vrot.slane %v1611, 1
        %v1619 = vsel %vm916, %v1616, %v1618
        %1620 = vrot.lane.b32.xlu0 %v1617, 127
        %v1621 = vpop.permute.xlu0 %1620
        %1622 = vrot.lane.b32.xlu0 %v1619, 127
        %v1623 = vpop.permute.xlu0 %1622
        %v1626 = vadd.f32 %v1550, %v1621
        %v1627 = vadd.f32 %v1551, %v1623
        %s1628 = sld [smem:[#allocation7 + $0x484]]
        %v1629 = vstv %s1628
        %v1630 = vmul.f32 %v1629, %v576
        %v1631 = vmul.f32 %v1629, %v579
        %v1632 = vmul.f32 %v1629, %v582
        %v1636 = vrot.slane %v1630, 1
        %v1637 = vrot.slane %v1631, 1
        %v1638 = vsel %vm916, %v1636, %v1637
        %v1639 = vrot.slane %v1632, 1
        %v1640 = vsel %vm916, %v1637, %v1639
        %1641 = vrot.lane.b32.xlu0 %v1638, 127
        %v1642 = vpop.permute.xlu0 %1641
        %1643 = vrot.lane.b32.xlu0 %v1640, 127
        %v1644 = vpop.permute.xlu0 %1643
        %v1647 = vadd.f32 %v1567, %v1642
        %v1648 = vadd.f32 %v1568, %v1644
        %s1649 = sld [smem:[#allocation7 + $0x684]]
        %v1650 = vstv %s1649
        %v1651 = vmul.f32 %v1650, %v576
        %v1652 = vmul.f32 %v1650, %v579
        %v1653 = vmul.f32 %v1650, %v582
        %v1657 = vrot.slane %v1651, 1
        %v1658 = vrot.slane %v1652, 1
        %v1659 = vsel %vm916, %v1657, %v1658
        %v1660 = vrot.slane %v1653, 1
        %v1661 = vsel %vm916, %v1658, %v1660
        %1662 = vrot.lane.b32.xlu0 %v1659, 127
        %v1663 = vpop.permute.xlu0 %1662
        %1664 = vrot.lane.b32.xlu0 %v1661, 127
        %v1665 = vpop.permute.xlu0 %1664
        %v1668 = vadd.f32 %v1584, %v1663
        %v1669 = vadd.f32 %v1585, %v1665
        %s1670 = sld [smem:[#allocation7 + $0x85]]
        %v1671 = vstv %s1670
        %v1672 = vmul.f32 %v1671, %v576
        %v1673 = vmul.f32 %v1671, %v579
        %v1674 = vmul.f32 %v1671, %v582
        %v1678 = vrot.slane %v1672, 1
        %v1679 = vrot.slane %v1673, 1
        %v1680 = vsel %vm916, %v1678, %v1679
        %v1681 = vrot.slane %v1674, 1
        %v1682 = vsel %vm916, %v1679, %v1681
        %1683 = vrot.lane.b32.xlu0 %v1680, 126
        %v1684 = vpop.permute.xlu0 %1683
        %1685 = vrot.lane.b32.xlu0 %v1682, 126
        %v1686 = vpop.permute.xlu0 %1685
        %v1689 = vadd.f32 %v1605, %v1684
        %v1690 = vadd.f32 %v1606, %v1686
        %s1691 = sld [smem:[#allocation7 + $0x285]]
        %v1692 = vstv %s1691
        %v1693 = vmul.f32 %v1692, %v576
        %v1694 = vmul.f32 %v1692, %v579
        %v1695 = vmul.f32 %v1692, %v582
        %v1699 = vrot.slane %v1693, 1
        %v1700 = vrot.slane %v1694, 1
        %v1701 = vsel %vm916, %v1699, %v1700
        %v1702 = vrot.slane %v1695, 1
        %v1703 = vsel %vm916, %v1700, %v1702
        %1704 = vrot.lane.b32.xlu0 %v1701, 126
        %v1705 = vpop.permute.xlu0 %1704
        %1706 = vrot.lane.b32.xlu0 %v1703, 126
        %v1707 = vpop.permute.xlu0 %1706
        %v1710 = vadd.f32 %v1626, %v1705
        %v1711 = vadd.f32 %v1627, %v1707
        %s1712 = sld [smem:[#allocation7 + $0x485]]
        %v1713 = vstv %s1712
        %v1714 = vmul.f32 %v1713, %v576
        %v1715 = vmul.f32 %v1713, %v579
        %v1716 = vmul.f32 %v1713, %v582
        %v1720 = vrot.slane %v1714, 1
        %v1721 = vrot.slane %v1715, 1
        %v1722 = vsel %vm916, %v1720, %v1721
        %v1723 = vrot.slane %v1716, 1
        %v1724 = vsel %vm916, %v1721, %v1723
        %1725 = vrot.lane.b32.xlu0 %v1722, 126
        %v1726 = vpop.permute.xlu0 %1725
        %1727 = vrot.lane.b32.xlu0 %v1724, 126
        %v1728 = vpop.permute.xlu0 %1727
        %v1731 = vadd.f32 %v1647, %v1726
        %v1732 = vadd.f32 %v1648, %v1728
        %s1733 = sld [smem:[#allocation7 + $0x685]]
        %v1734 = vstv %s1733
        %v1735 = vmul.f32 %v1734, %v576
        %v1736 = vmul.f32 %v1734, %v579
        %v1737 = vmul.f32 %v1734, %v582
        %v1741 = vrot.slane %v1735, 1
        %v1742 = vrot.slane %v1736, 1
        %v1743 = vsel %vm916, %v1741, %v1742
        %v1744 = vrot.slane %v1737, 1
        %v1745 = vsel %vm916, %v1742, %v1744
        %1746 = vrot.lane.b32.xlu0 %v1743, 126
        %v1747 = vpop.permute.xlu0 %1746
        %1748 = vrot.lane.b32.xlu0 %v1745, 126
        %v1749 = vpop.permute.xlu0 %1748
        %v1752 = vadd.f32 %v1668, %v1747
        %v1753 = vadd.f32 %v1669, %v1749
        %s1754 = sld [smem:[#allocation7 + $0x86]]
        %v1755 = vstv %s1754
        %v1756 = vmul.f32 %v1755, %v576
        %v1757 = vmul.f32 %v1755, %v579
        %v1758 = vmul.f32 %v1755, %v582
        %v1762 = vrot.slane %v1756, 2
        %v1763 = vrot.slane %v1757, 2
        %v1764 = vsel %vm1153, %v1762, %v1763
        %v1765 = vrot.slane %v1758, 2
        %v1766 = vsel %vm1153, %v1763, %v1765
        %v1769 = vadd.f32 %v1689, %v1764
        %v1770 = vadd.f32 %v1690, %v1766
        %s1771 = sld [smem:[#allocation7 + $0x286]]
        %v1772 = vstv %s1771
        %v1773 = vmul.f32 %v1772, %v576
        %v1774 = vmul.f32 %v1772, %v579
        %v1775 = vmul.f32 %v1772, %v582
        %v1779 = vrot.slane %v1773, 2
        %v1780 = vrot.slane %v1774, 2
        %v1781 = vsel %vm1153, %v1779, %v1780
        %v1782 = vrot.slane %v1775, 2
        %v1783 = vsel %vm1153, %v1780, %v1782
        %v1786 = vadd.f32 %v1710, %v1781
        %v1787 = vadd.f32 %v1711, %v1783
        %s1788 = sld [smem:[#allocation7 + $0x486]]
        %v1789 = vstv %s1788
        %v1790 = vmul.f32 %v1789, %v576
        %v1791 = vmul.f32 %v1789, %v579
        %v1792 = vmul.f32 %v1789, %v582
        %v1796 = vrot.slane %v1790, 2
        %v1797 = vrot.slane %v1791, 2
        %v1798 = vsel %vm1153, %v1796, %v1797
        %v1799 = vrot.slane %v1792, 2
        %v1800 = vsel %vm1153, %v1797, %v1799
        %v1803 = vadd.f32 %v1731, %v1798
        %v1804 = vadd.f32 %v1732, %v1800
        %s1805 = sld [smem:[#allocation7 + $0x686]]
        %v1806 = vstv %s1805
        %v1807 = vmul.f32 %v1806, %v576
        %v1808 = vmul.f32 %v1806, %v579
        %v1809 = vmul.f32 %v1806, %v582
        %v1813 = vrot.slane %v1807, 2
        %v1814 = vrot.slane %v1808, 2
        %v1815 = vsel %vm1153, %v1813, %v1814
        %v1816 = vrot.slane %v1809, 2
        %v1817 = vsel %vm1153, %v1814, %v1816
        %v1820 = vadd.f32 %v1752, %v1815
        %v1821 = vadd.f32 %v1753, %v1817
        %s1822 = sld [smem:[#allocation7 + $0x87]]
        %v1823 = vstv %s1822
        %v1824 = vmul.f32 %v1823, %v576
        %v1825 = vmul.f32 %v1823, %v579
        %v1826 = vmul.f32 %v1823, %v582
        %v1830 = vrot.slane %v1824, 2
        %v1831 = vrot.slane %v1825, 2
        %v1832 = vsel %vm1153, %v1830, %v1831
        %v1833 = vrot.slane %v1826, 2
        %v1834 = vsel %vm1153, %v1831, %v1833
        %1835 = vrot.lane.b32.xlu0 %v1832, 127
        %v1836 = vpop.permute.xlu0 %1835
        %1837 = vrot.lane.b32.xlu0 %v1834, 127
        %v1838 = vpop.permute.xlu0 %1837
        %v1841 = vadd.f32 %v1769, %v1836
        %v1842 = vadd.f32 %v1770, %v1838
        %s1843 = sld [smem:[#allocation7 + $0x287]]
        %v1844 = vstv %s1843
        %v1845 = vmul.f32 %v1844, %v576
        %v1846 = vmul.f32 %v1844, %v579
        %v1847 = vmul.f32 %v1844, %v582
        %v1851 = vrot.slane %v1845, 2
        %v1852 = vrot.slane %v1846, 2
        %v1853 = vsel %vm1153, %v1851, %v1852
        %v1854 = vrot.slane %v1847, 2
        %v1855 = vsel %vm1153, %v1852, %v1854
        %1856 = vrot.lane.b32.xlu0 %v1853, 127
        %v1857 = vpop.permute.xlu0 %1856
        %1858 = vrot.lane.b32.xlu0 %v1855, 127
        %v1859 = vpop.permute.xlu0 %1858
        %v1862 = vadd.f32 %v1786, %v1857
        %v1863 = vadd.f32 %v1787, %v1859
        %s1864 = sld [smem:[#allocation7 + $0x487]]
        %v1865 = vstv %s1864
        %v1866 = vmul.f32 %v1865, %v576
        %v1867 = vmul.f32 %v1865, %v579
        %v1868 = vmul.f32 %v1865, %v582
        %v1872 = vrot.slane %v1866, 2
        %v1873 = vrot.slane %v1867, 2
        %v1874 = vsel %vm1153, %v1872, %v1873
        %v1875 = vrot.slane %v1868, 2
        %v1876 = vsel %vm1153, %v1873, %v1875
        %1877 = vrot.lane.b32.xlu0 %v1874, 127
        %v1878 = vpop.permute.xlu0 %1877
        %1879 = vrot.lane.b32.xlu0 %v1876, 127
        %v1880 = vpop.permute.xlu0 %1879
        %v1883 = vadd.f32 %v1803, %v1878
        %v1884 = vadd.f32 %v1804, %v1880
        %s1885 = sld [smem:[#allocation7 + $0x687]]
        %v1886 = vstv %s1885
        %v1887 = vmul.f32 %v1886, %v576
        %v1888 = vmul.f32 %v1886, %v579
        %v1889 = vmul.f32 %v1886, %v582
        %v1893 = vrot.slane %v1887, 2
        %v1894 = vrot.slane %v1888, 2
        %v1895 = vsel %vm1153, %v1893, %v1894
        %v1896 = vrot.slane %v1889, 2
        %v1897 = vsel %vm1153, %v1894, %v1896
        %1898 = vrot.lane.b32.xlu0 %v1895, 127
        %v1899 = vpop.permute.xlu0 %1898
        %1900 = vrot.lane.b32.xlu0 %v1897, 127
        %v1901 = vpop.permute.xlu0 %1900
        %v1904 = vadd.f32 %v1820, %v1899
        %v1905 = vadd.f32 %v1821, %v1901
        %s1906 = sld [smem:[#allocation7 + $0x88]]
        %v1907 = vstv %s1906
        %v1908 = vmul.f32 %v1907, %v576
        %v1909 = vmul.f32 %v1907, %v579
        %v1910 = vmul.f32 %v1907, %v582
        %v1914 = vrot.slane %v1908, 2
        %v1915 = vrot.slane %v1909, 2
        %v1916 = vsel %vm1153, %v1914, %v1915
        %v1917 = vrot.slane %v1910, 2
        %v1918 = vsel %vm1153, %v1915, %v1917
        %1919 = vrot.lane.b32.xlu0 %v1916, 126
        %v1920 = vpop.permute.xlu0 %1919
        %1921 = vrot.lane.b32.xlu0 %v1918, 126
        %v1922 = vpop.permute.xlu0 %1921
        %v1925 = vadd.f32 %v1841, %v1920
        %v1926 = vadd.f32 %v1842, %v1922
        %s1927 = sld [smem:[#allocation7 + $0x288]]
        %v1928 = vstv %s1927
        %v1929 = vmul.f32 %v1928, %v576
        %v1930 = vmul.f32 %v1928, %v579
        %v1931 = vmul.f32 %v1928, %v582
        %v1935 = vrot.slane %v1929, 2
        %v1936 = vrot.slane %v1930, 2
        %v1937 = vsel %vm1153, %v1935, %v1936
        %v1938 = vrot.slane %v1931, 2
        %v1939 = vsel %vm1153, %v1936, %v1938
        %1940 = vrot.lane.b32.xlu0 %v1937, 126
        %v1941 = vpop.permute.xlu0 %1940
        %1942 = vrot.lane.b32.xlu0 %v1939, 126
        %v1943 = vpop.permute.xlu0 %1942
        %v1946 = vadd.f32 %v1862, %v1941
        %v1947 = vadd.f32 %v1863, %v1943
        %s1948 = sld [smem:[#allocation7 + $0x488]]
        %v1949 = vstv %s1948
        %v1950 = vmul.f32 %v1949, %v576
        %v1951 = vmul.f32 %v1949, %v579
        %v1952 = vmul.f32 %v1949, %v582
        %v1956 = vrot.slane %v1950, 2
        %v1957 = vrot.slane %v1951, 2
        %v1958 = vsel %vm1153, %v1956, %v1957
        %v1959 = vrot.slane %v1952, 2
        %v1960 = vsel %vm1153, %v1957, %v1959
        %1961 = vrot.lane.b32.xlu0 %v1958, 126
        %v1962 = vpop.permute.xlu0 %1961
        %1963 = vrot.lane.b32.xlu0 %v1960, 126
        %v1964 = vpop.permute.xlu0 %1963
        %v1967 = vadd.f32 %v1883, %v1962
        %v1968 = vadd.f32 %v1884, %v1964
        %s1969 = sld [smem:[#allocation7 + $0x688]]
        %v1970 = vstv %s1969
        %v1971 = vmul.f32 %v1970, %v576
        %v1972 = vmul.f32 %v1970, %v579
        %v1973 = vmul.f32 %v1970, %v582
        %v1977 = vrot.slane %v1971, 2
        %v1978 = vrot.slane %v1972, 2
        %v1979 = vsel %vm1153, %v1977, %v1978
        %v1980 = vrot.slane %v1973, 2
        %v1981 = vsel %vm1153, %v1978, %v1980
        %1982 = vrot.lane.b32.xlu0 %v1979, 126
        %v1983 = vpop.permute.xlu0 %1982
        %1984 = vrot.lane.b32.xlu0 %v1981, 126
        %v1985 = vpop.permute.xlu0 %1984
        %v1988 = vadd.f32 %v1904, %v1983
        %v1989 = vadd.f32 %v1905, %v1985
        %s1990 = sld [smem:[#allocation7 + $0x100]]
        %v1991 = vstv %s1990
        %v1992 = vmul.f32 %v1991, %v670
        %v1993 = vmul.f32 %v1991, %v673
        %v1994 = vadd.f32 %v1925, %v1992
        %v1995 = vadd.f32 %v1926, %v1993
        %s1996 = sld [smem:[#allocation7 + $0x300]]
        %v1997 = vstv %s1996
        %v1998 = vmul.f32 %v1997, %v670
        %v1999 = vmul.f32 %v1997, %v673
        %v2000 = vadd.f32 %v1946, %v1998
        %v2001 = vadd.f32 %v1947, %v1999
        %s2002 = sld [smem:[#allocation7 + $0x500]]
        %v2003 = vstv %s2002
        %v2004 = vmul.f32 %v2003, %v670
        %v2005 = vmul.f32 %v2003, %v673
        %v2006 = vadd.f32 %v1967, %v2004
        %v2007 = vadd.f32 %v1968, %v2005
        %s2008 = sld [smem:[#allocation7 + $0x700]]
        %v2009 = vstv %s2008
        %v2010 = vmul.f32 %v2009, %v670
        %v2011 = vmul.f32 %v2009, %v673
        %v2012 = vadd.f32 %v1988, %v2010
        %v2013 = vadd.f32 %v1989, %v2011
        %s2014 = sld [smem:[#allocation7 + $0x101]]
        %v2015 = vstv %s2014
        %v2016 = vmul.f32 %v2015, %v670
        %v2017 = vmul.f32 %v2015, %v673
        %2020 = vrot.lane.b32.xlu0 %v2016, 127
        %v2021 = vpop.permute.xlu0 %2020
        %2022 = vrot.lane.b32.xlu0 %v2017, 127
        %v2023 = vpop.permute.xlu0 %2022
        %v2026 = vadd.f32 %v1994, %v2021
        %v2027 = vadd.f32 %v1995, %v2023
        %s2028 = sld [smem:[#allocation7 + $0x301]]
        %v2029 = vstv %s2028
        %v2030 = vmul.f32 %v2029, %v670
        %v2031 = vmul.f32 %v2029, %v673
        %2034 = vrot.lane.b32.xlu0 %v2030, 127
        %v2035 = vpop.permute.xlu0 %2034
        %2036 = vrot.lane.b32.xlu0 %v2031, 127
        %v2037 = vpop.permute.xlu0 %2036
        %v2040 = vadd.f32 %v2000, %v2035
        %v2041 = vadd.f32 %v2001, %v2037
        %s2042 = sld [smem:[#allocation7 + $0x501]]
        %v2043 = vstv %s2042
        %v2044 = vmul.f32 %v2043, %v670
        %v2045 = vmul.f32 %v2043, %v673
        %2048 = vrot.lane.b32.xlu0 %v2044, 127
        %v2049 = vpop.permute.xlu0 %2048
        %2050 = vrot.lane.b32.xlu0 %v2045, 127
        %v2051 = vpop.permute.xlu0 %2050
        %v2054 = vadd.f32 %v2006, %v2049
        %v2055 = vadd.f32 %v2007, %v2051
        %s2056 = sld [smem:[#allocation7 + $0x701]]
        %v2057 = vstv %s2056
        %v2058 = vmul.f32 %v2057, %v670
        %v2059 = vmul.f32 %v2057, %v673
        %2062 = vrot.lane.b32.xlu0 %v2058, 127
        %v2063 = vpop.permute.xlu0 %2062
        %2064 = vrot.lane.b32.xlu0 %v2059, 127
        %v2065 = vpop.permute.xlu0 %2064
        %v2068 = vadd.f32 %v2012, %v2063
        %v2069 = vadd.f32 %v2013, %v2065
        %s2070 = sld [smem:[#allocation7 + $0x102]]
        %v2071 = vstv %s2070
        %v2072 = vmul.f32 %v2071, %v670
        %v2073 = vmul.f32 %v2071, %v673
        %2076 = vrot.lane.b32.xlu0 %v2072, 126
        %v2077 = vpop.permute.xlu0 %2076
        %2078 = vrot.lane.b32.xlu0 %v2073, 126
        %v2079 = vpop.permute.xlu0 %2078
        %v2082 = vadd.f32 %v2026, %v2077
        %v2083 = vadd.f32 %v2027, %v2079
        %s2084 = sld [smem:[#allocation7 + $0x302]]
        %v2085 = vstv %s2084
        %v2086 = vmul.f32 %v2085, %v670
        %v2087 = vmul.f32 %v2085, %v673
        %2090 = vrot.lane.b32.xlu0 %v2086, 126
        %v2091 = vpop.permute.xlu0 %2090
        %2092 = vrot.lane.b32.xlu0 %v2087, 126
        %v2093 = vpop.permute.xlu0 %2092
        %v2096 = vadd.f32 %v2040, %v2091
        %v2097 = vadd.f32 %v2041, %v2093
        %s2098 = sld [smem:[#allocation7 + $0x502]]
        %v2099 = vstv %s2098
        %v2100 = vmul.f32 %v2099, %v670
        %v2101 = vmul.f32 %v2099, %v673
        %2104 = vrot.lane.b32.xlu0 %v2100, 126
        %v2105 = vpop.permute.xlu0 %2104
        %2106 = vrot.lane.b32.xlu0 %v2101, 126
        %v2107 = vpop.permute.xlu0 %2106
        %v2110 = vadd.f32 %v2054, %v2105
        %v2111 = vadd.f32 %v2055, %v2107
        %s2112 = sld [smem:[#allocation7 + $0x702]]
        %v2113 = vstv %s2112
        %v2114 = vmul.f32 %v2113, %v670
        %v2115 = vmul.f32 %v2113, %v673
        %2118 = vrot.lane.b32.xlu0 %v2114, 126
        %v2119 = vpop.permute.xlu0 %2118
        %2120 = vrot.lane.b32.xlu0 %v2115, 126
        %v2121 = vpop.permute.xlu0 %2120
        %v2124 = vadd.f32 %v2068, %v2119
        %v2125 = vadd.f32 %v2069, %v2121
        %s2126 = sld [smem:[#allocation7 + $0x103]]
        %v2127 = vstv %s2126
        %v2128 = vmul.f32 %v2127, %v670
        %v2129 = vmul.f32 %v2127, %v673
        %v2130 = vmul.f32 %v2127, %v676
        %v2134 = vrot.slane %v2128, 1
        %v2135 = vrot.slane %v2129, 1
        %v2136 = vsel %vm916, %v2134, %v2135
        %v2137 = vrot.slane %v2130, 1
        %v2138 = vsel %vm916, %v2135, %v2137
        %v2141 = vadd.f32 %v2082, %v2136
        %v2142 = vadd.f32 %v2083, %v2138
        %s2143 = sld [smem:[#allocation7 + $0x303]]
        %v2144 = vstv %s2143
        %v2145 = vmul.f32 %v2144, %v670
        %v2146 = vmul.f32 %v2144, %v673
        %v2147 = vmul.f32 %v2144, %v676
        %v2151 = vrot.slane %v2145, 1
        %v2152 = vrot.slane %v2146, 1
        %v2153 = vsel %vm916, %v2151, %v2152
        %v2154 = vrot.slane %v2147, 1
        %v2155 = vsel %vm916, %v2152, %v2154
        %v2158 = vadd.f32 %v2096, %v2153
        %v2159 = vadd.f32 %v2097, %v2155
        %s2160 = sld [smem:[#allocation7 + $0x503]]
        %v2161 = vstv %s2160
        %v2162 = vmul.f32 %v2161, %v670
        %v2163 = vmul.f32 %v2161, %v673
        %v2164 = vmul.f32 %v2161, %v676
        %v2168 = vrot.slane %v2162, 1
        %v2169 = vrot.slane %v2163, 1
        %v2170 = vsel %vm916, %v2168, %v2169
        %v2171 = vrot.slane %v2164, 1
        %v2172 = vsel %vm916, %v2169, %v2171
        %v2175 = vadd.f32 %v2110, %v2170
        %v2176 = vadd.f32 %v2111, %v2172
        %s2177 = sld [smem:[#allocation7 + $0x703]]
        %v2178 = vstv %s2177
        %v2179 = vmul.f32 %v2178, %v670
        %v2180 = vmul.f32 %v2178, %v673
        %v2181 = vmul.f32 %v2178, %v676
        %v2185 = vrot.slane %v2179, 1
        %v2186 = vrot.slane %v2180, 1
        %v2187 = vsel %vm916, %v2185, %v2186
        %v2188 = vrot.slane %v2181, 1
        %v2189 = vsel %vm916, %v2186, %v2188
        %v2192 = vadd.f32 %v2124, %v2187
        %v2193 = vadd.f32 %v2125, %v2189
        %s2194 = sld [smem:[#allocation7 + $0x104]]
        %v2195 = vstv %s2194
        %v2196 = vmul.f32 %v2195, %v670
        %v2197 = vmul.f32 %v2195, %v673
        %v2198 = vmul.f32 %v2195, %v676
        %v2202 = vrot.slane %v2196, 1
        %v2203 = vrot.slane %v2197, 1
        %v2204 = vsel %vm916, %v2202, %v2203
        %v2205 = vrot.slane %v2198, 1
        %v2206 = vsel %vm916, %v2203, %v2205
        %2207 = vrot.lane.b32.xlu0 %v2204, 127
        %v2208 = vpop.permute.xlu0 %2207
        %2209 = vrot.lane.b32.xlu0 %v2206, 127
        %v2210 = vpop.permute.xlu0 %2209
        %v2213 = vadd.f32 %v2141, %v2208
        %v2214 = vadd.f32 %v2142, %v2210
        %s2215 = sld [smem:[#allocation7 + $0x304]]
        %v2216 = vstv %s2215
        %v2217 = vmul.f32 %v2216, %v670
        %v2218 = vmul.f32 %v2216, %v673
        %v2219 = vmul.f32 %v2216, %v676
        %v2223 = vrot.slane %v2217, 1
        %v2224 = vrot.slane %v2218, 1
        %v2225 = vsel %vm916, %v2223, %v2224
        %v2226 = vrot.slane %v2219, 1
        %v2227 = vsel %vm916, %v2224, %v2226
        %2228 = vrot.lane.b32.xlu0 %v2225, 127
        %v2229 = vpop.permute.xlu0 %2228
        %2230 = vrot.lane.b32.xlu0 %v2227, 127
        %v2231 = vpop.permute.xlu0 %2230
        %v2234 = vadd.f32 %v2158, %v2229
        %v2235 = vadd.f32 %v2159, %v2231
        %s2236 = sld [smem:[#allocation7 + $0x504]]
        %v2237 = vstv %s2236
        %v2238 = vmul.f32 %v2237, %v670
        %v2239 = vmul.f32 %v2237, %v673
        %v2240 = vmul.f32 %v2237, %v676
        %v2244 = vrot.slane %v2238, 1
        %v2245 = vrot.slane %v2239, 1
        %v2246 = vsel %vm916, %v2244, %v2245
        %v2247 = vrot.slane %v2240, 1
        %v2248 = vsel %vm916, %v2245, %v2247
        %2249 = vrot.lane.b32.xlu0 %v2246, 127
        %v2250 = vpop.permute.xlu0 %2249
        %2251 = vrot.lane.b32.xlu0 %v2248, 127
        %v2252 = vpop.permute.xlu0 %2251
        %v2255 = vadd.f32 %v2175, %v2250
        %v2256 = vadd.f32 %v2176, %v2252
        %s2257 = sld [smem:[#allocation7 + $0x704]]
        %v2258 = vstv %s2257
        %v2259 = vmul.f32 %v2258, %v670
        %v2260 = vmul.f32 %v2258, %v673
        %v2261 = vmul.f32 %v2258, %v676
        %v2265 = vrot.slane %v2259, 1
        %v2266 = vrot.slane %v2260, 1
        %v2267 = vsel %vm916, %v2265, %v2266
        %v2268 = vrot.slane %v2261, 1
        %v2269 = vsel %vm916, %v2266, %v2268
        %2270 = vrot.lane.b32.xlu0 %v2267, 127
        %v2271 = vpop.permute.xlu0 %2270
        %2272 = vrot.lane.b32.xlu0 %v2269, 127
        %v2273 = vpop.permute.xlu0 %2272
        %v2276 = vadd.f32 %v2192, %v2271
        %v2277 = vadd.f32 %v2193, %v2273
        %s2278 = sld [smem:[#allocation7 + $0x105]]
        %v2279 = vstv %s2278
        %v2280 = vmul.f32 %v2279, %v670
        %v2281 = vmul.f32 %v2279, %v673
        %v2282 = vmul.f32 %v2279, %v676
        %v2286 = vrot.slane %v2280, 1
        %v2287 = vrot.slane %v2281, 1
        %v2288 = vsel %vm916, %v2286, %v2287
        %v2289 = vrot.slane %v2282, 1
        %v2290 = vsel %vm916, %v2287, %v2289
        %2291 = vrot.lane.b32.xlu0 %v2288, 126
        %v2292 = vpop.permute.xlu0 %2291
        %2293 = vrot.lane.b32.xlu0 %v2290, 126
        %v2294 = vpop.permute.xlu0 %2293
        %v2297 = vadd.f32 %v2213, %v2292
        %v2298 = vadd.f32 %v2214, %v2294
        %s2299 = sld [smem:[#allocation7 + $0x305]]
        %v2300 = vstv %s2299
        %v2301 = vmul.f32 %v2300, %v670
        %v2302 = vmul.f32 %v2300, %v673
        %v2303 = vmul.f32 %v2300, %v676
        %v2307 = vrot.slane %v2301, 1
        %v2308 = vrot.slane %v2302, 1
        %v2309 = vsel %vm916, %v2307, %v2308
        %v2310 = vrot.slane %v2303, 1
        %v2311 = vsel %vm916, %v2308, %v2310
        %2312 = vrot.lane.b32.xlu0 %v2309, 126
        %v2313 = vpop.permute.xlu0 %2312
        %2314 = vrot.lane.b32.xlu0 %v2311, 126
        %v2315 = vpop.permute.xlu0 %2314
        %v2318 = vadd.f32 %v2234, %v2313
        %v2319 = vadd.f32 %v2235, %v2315
        %s2320 = sld [smem:[#allocation7 + $0x505]]
        %v2321 = vstv %s2320
        %v2322 = vmul.f32 %v2321, %v670
        %v2323 = vmul.f32 %v2321, %v673
        %v2324 = vmul.f32 %v2321, %v676
        %v2328 = vrot.slane %v2322, 1
        %v2329 = vrot.slane %v2323, 1
        %v2330 = vsel %vm916, %v2328, %v2329
        %v2331 = vrot.slane %v2324, 1
        %v2332 = vsel %vm916, %v2329, %v2331
        %2333 = vrot.lane.b32.xlu0 %v2330, 126
        %v2334 = vpop.permute.xlu0 %2333
        %2335 = vrot.lane.b32.xlu0 %v2332, 126
        %v2336 = vpop.permute.xlu0 %2335
        %v2339 = vadd.f32 %v2255, %v2334
        %v2340 = vadd.f32 %v2256, %v2336
        %s2341 = sld [smem:[#allocation7 + $0x705]]
        %v2342 = vstv %s2341
        %v2343 = vmul.f32 %v2342, %v670
        %v2344 = vmul.f32 %v2342, %v673
        %v2345 = vmul.f32 %v2342, %v676
        %v2349 = vrot.slane %v2343, 1
        %v2350 = vrot.slane %v2344, 1
        %v2351 = vsel %vm916, %v2349, %v2350
        %v2352 = vrot.slane %v2345, 1
        %v2353 = vsel %vm916, %v2350, %v2352
        %2354 = vrot.lane.b32.xlu0 %v2351, 126
        %v2355 = vpop.permute.xlu0 %2354
        %2356 = vrot.lane.b32.xlu0 %v2353, 126
        %v2357 = vpop.permute.xlu0 %2356
        %v2360 = vadd.f32 %v2276, %v2355
        %v2361 = vadd.f32 %v2277, %v2357
        %s2362 = sld [smem:[#allocation7 + $0x106]]
        %v2363 = vstv %s2362
        %v2364 = vmul.f32 %v2363, %v670
        %v2365 = vmul.f32 %v2363, %v673
        %v2366 = vmul.f32 %v2363, %v676
        %v2370 = vrot.slane %v2364, 2
        %v2371 = vrot.slane %v2365, 2
        %v2372 = vsel %vm1153, %v2370, %v2371
        %v2373 = vrot.slane %v2366, 2
        %v2374 = vsel %vm1153, %v2371, %v2373
        %v2377 = vadd.f32 %v2297, %v2372
        %v2378 = vadd.f32 %v2298, %v2374
        %s2379 = sld [smem:[#allocation7 + $0x306]]
        %v2380 = vstv %s2379
        %v2381 = vmul.f32 %v2380, %v670
        %v2382 = vmul.f32 %v2380, %v673
        %v2383 = vmul.f32 %v2380, %v676
        %v2387 = vrot.slane %v2381, 2
        %v2388 = vrot.slane %v2382, 2
        %v2389 = vsel %vm1153, %v2387, %v2388
        %v2390 = vrot.slane %v2383, 2
        %v2391 = vsel %vm1153, %v2388, %v2390
        %v2394 = vadd.f32 %v2318, %v2389
        %v2395 = vadd.f32 %v2319, %v2391
        %s2396 = sld [smem:[#allocation7 + $0x506]]
        %v2397 = vstv %s2396
        %v2398 = vmul.f32 %v2397, %v670
        %v2399 = vmul.f32 %v2397, %v673
        %v2400 = vmul.f32 %v2397, %v676
        %v2404 = vrot.slane %v2398, 2
        %v2405 = vrot.slane %v2399, 2
        %v2406 = vsel %vm1153, %v2404, %v2405
        %v2407 = vrot.slane %v2400, 2
        %v2408 = vsel %vm1153, %v2405, %v2407
        %v2411 = vadd.f32 %v2339, %v2406
        %v2412 = vadd.f32 %v2340, %v2408
        %s2413 = sld [smem:[#allocation7 + $0x706]]
        %v2414 = vstv %s2413
        %v2415 = vmul.f32 %v2414, %v670
        %v2416 = vmul.f32 %v2414, %v673
        %v2417 = vmul.f32 %v2414, %v676
        %v2421 = vrot.slane %v2415, 2
        %v2422 = vrot.slane %v2416, 2
        %v2423 = vsel %vm1153, %v2421, %v2422
        %v2424 = vrot.slane %v2417, 2
        %v2425 = vsel %vm1153, %v2422, %v2424
        %v2428 = vadd.f32 %v2360, %v2423
        %v2429 = vadd.f32 %v2361, %v2425
        %s2430 = sld [smem:[#allocation7 + $0x107]]
        %v2431 = vstv %s2430
        %v2432 = vmul.f32 %v2431, %v670
        %v2433 = vmul.f32 %v2431, %v673
        %v2434 = vmul.f32 %v2431, %v676
        %v2438 = vrot.slane %v2432, 2
        %v2439 = vrot.slane %v2433, 2
        %v2440 = vsel %vm1153, %v2438, %v2439
        %v2441 = vrot.slane %v2434, 2
        %v2442 = vsel %vm1153, %v2439, %v2441
        %2443 = vrot.lane.b32.xlu0 %v2440, 127
        %v2444 = vpop.permute.xlu0 %2443
        %2445 = vrot.lane.b32.xlu0 %v2442, 127
        %v2446 = vpop.permute.xlu0 %2445
        %v2449 = vadd.f32 %v2377, %v2444
        %v2450 = vadd.f32 %v2378, %v2446
        %s2451 = sld [smem:[#allocation7 + $0x307]]
        %v2452 = vstv %s2451
        %v2453 = vmul.f32 %v2452, %v670
        %v2454 = vmul.f32 %v2452, %v673
        %v2455 = vmul.f32 %v2452, %v676
        %v2459 = vrot.slane %v2453, 2
        %v2460 = vrot.slane %v2454, 2
        %v2461 = vsel %vm1153, %v2459, %v2460
        %v2462 = vrot.slane %v2455, 2
        %v2463 = vsel %vm1153, %v2460, %v2462
        %2464 = vrot.lane.b32.xlu0 %v2461, 127
        %v2465 = vpop.permute.xlu0 %2464
        %2466 = vrot.lane.b32.xlu0 %v2463, 127
        %v2467 = vpop.permute.xlu0 %2466
        %v2470 = vadd.f32 %v2394, %v2465
        %v2471 = vadd.f32 %v2395, %v2467
        %s2472 = sld [smem:[#allocation7 + $0x507]]
        %v2473 = vstv %s2472
        %v2474 = vmul.f32 %v2473, %v670
        %v2475 = vmul.f32 %v2473, %v673
        %v2476 = vmul.f32 %v2473, %v676
        %v2480 = vrot.slane %v2474, 2
        %v2481 = vrot.slane %v2475, 2
        %v2482 = vsel %vm1153, %v2480, %v2481
        %v2483 = vrot.slane %v2476, 2
        %v2484 = vsel %vm1153, %v2481, %v2483
        %2485 = vrot.lane.b32.xlu0 %v2482, 127
        %v2486 = vpop.permute.xlu0 %2485
        %2487 = vrot.lane.b32.xlu0 %v2484, 127
        %v2488 = vpop.permute.xlu0 %2487
        %v2491 = vadd.f32 %v2411, %v2486
        %v2492 = vadd.f32 %v2412, %v2488
        %s2493 = sld [smem:[#allocation7 + $0x707]]
        %v2494 = vstv %s2493
        %v2495 = vmul.f32 %v2494, %v670
        %v2496 = vmul.f32 %v2494, %v673
        %v2497 = vmul.f32 %v2494, %v676
        %v2501 = vrot.slane %v2495, 2
        %v2502 = vrot.slane %v2496, 2
        %v2503 = vsel %vm1153, %v2501, %v2502
        %v2504 = vrot.slane %v2497, 2
        %v2505 = vsel %vm1153, %v2502, %v2504
        %2506 = vrot.lane.b32.xlu0 %v2503, 127
        %v2507 = vpop.permute.xlu0 %2506
        %2508 = vrot.lane.b32.xlu0 %v2505, 127
        %v2509 = vpop.permute.xlu0 %2508
        %v2512 = vadd.f32 %v2428, %v2507
        %v2513 = vadd.f32 %v2429, %v2509
        %s2514 = sld [smem:[#allocation7 + $0x108]]
        %v2515 = vstv %s2514
        %v2516 = vmul.f32 %v2515, %v670
        %v2517 = vmul.f32 %v2515, %v673
        %v2518 = vmul.f32 %v2515, %v676
        %v2522 = vrot.slane %v2516, 2
        %v2523 = vrot.slane %v2517, 2
        %v2524 = vsel %vm1153, %v2522, %v2523
        %v2525 = vrot.slane %v2518, 2
        %v2526 = vsel %vm1153, %v2523, %v2525
        %2527 = vrot.lane.b32.xlu0 %v2524, 126
        %v2528 = vpop.permute.xlu0 %2527
        %2529 = vrot.lane.b32.xlu0 %v2526, 126
        %v2530 = vpop.permute.xlu0 %2529
        %v2533 = vadd.f32 %v2449, %v2528
        %v2534 = vadd.f32 %v2450, %v2530
        %s2535 = sld [smem:[#allocation7 + $0x308]]
        %v2536 = vstv %s2535
        %v2537 = vmul.f32 %v2536, %v670
        %v2538 = vmul.f32 %v2536, %v673
        %v2539 = vmul.f32 %v2536, %v676
        %v2543 = vrot.slane %v2537, 2
        %v2544 = vrot.slane %v2538, 2
        %v2545 = vsel %vm1153, %v2543, %v2544
        %v2546 = vrot.slane %v2539, 2
        %v2547 = vsel %vm1153, %v2544, %v2546
        %2548 = vrot.lane.b32.xlu0 %v2545, 126
        %v2549 = vpop.permute.xlu0 %2548
        %2550 = vrot.lane.b32.xlu0 %v2547, 126
        %v2551 = vpop.permute.xlu0 %2550
        %v2554 = vadd.f32 %v2470, %v2549
        %v2555 = vadd.f32 %v2471, %v2551
        %s2556 = sld [smem:[#allocation7 + $0x508]]
        %v2557 = vstv %s2556
        %v2558 = vmul.f32 %v2557, %v670
        %v2559 = vmul.f32 %v2557, %v673
        %v2560 = vmul.f32 %v2557, %v676
        %v2564 = vrot.slane %v2558, 2
        %v2565 = vrot.slane %v2559, 2
        %v2566 = vsel %vm1153, %v2564, %v2565
        %v2567 = vrot.slane %v2560, 2
        %v2568 = vsel %vm1153, %v2565, %v2567
        %2569 = vrot.lane.b32.xlu0 %v2566, 126
        %v2570 = vpop.permute.xlu0 %2569
        %2571 = vrot.lane.b32.xlu0 %v2568, 126
        %v2572 = vpop.permute.xlu0 %2571
        %v2575 = vadd.f32 %v2491, %v2570
        %v2576 = vadd.f32 %v2492, %v2572
        %s2577 = sld [smem:[#allocation7 + $0x708]]
        %v2578 = vstv %s2577
        %v2579 = vmul.f32 %v2578, %v670
        %v2580 = vmul.f32 %v2578, %v673
        %v2581 = vmul.f32 %v2578, %v676
        %v2585 = vrot.slane %v2579, 2
        %v2586 = vrot.slane %v2580, 2
        %v2587 = vsel %vm1153, %v2585, %v2586
        %v2588 = vrot.slane %v2581, 2
        %v2589 = vsel %vm1153, %v2586, %v2588
        %2590 = vrot.lane.b32.xlu0 %v2587, 126
        %v2591 = vpop.permute.xlu0 %2590
        %2592 = vrot.lane.b32.xlu0 %v2589, 126
        %v2593 = vpop.permute.xlu0 %2592
        %v2596 = vadd.f32 %v2512, %v2591
        %v2597 = vadd.f32 %v2513, %v2593
        %s2598 = sld [smem:[#allocation7 + $0x180]]
        %v2599 = vstv %s2598
        %v2600 = vmul.f32 %v2599, %v764
        %v2601 = vmul.f32 %v2599, %v767
        %v2602 = vadd.f32 %v2533, %v2600
        %v2603 = vadd.f32 %v2534, %v2601
        %s2604 = sld [smem:[#allocation7 + $0x380]]
        %v2605 = vstv %s2604
        %v2606 = vmul.f32 %v2605, %v764
        %v2607 = vmul.f32 %v2605, %v767
        %v2608 = vadd.f32 %v2554, %v2606
        %v2609 = vadd.f32 %v2555, %v2607
        %s2610 = sld [smem:[#allocation7 + $0x580]]
        %v2611 = vstv %s2610
        %v2612 = vmul.f32 %v2611, %v764
        %v2613 = vmul.f32 %v2611, %v767
        %v2614 = vadd.f32 %v2575, %v2612
        %v2615 = vadd.f32 %v2576, %v2613
        %s2616 = sld [smem:[#allocation7 + $0x780]]
        %v2617 = vstv %s2616
        %v2618 = vmul.f32 %v2617, %v764
        %v2619 = vmul.f32 %v2617, %v767
        %v2620 = vadd.f32 %v2596, %v2618
        %v2621 = vadd.f32 %v2597, %v2619
        %s2622 = sld [smem:[#allocation7 + $0x181]]
        %v2623 = vstv %s2622
        %v2624 = vmul.f32 %v2623, %v764
        %v2625 = vmul.f32 %v2623, %v767
        %2628 = vrot.lane.b32.xlu0 %v2624, 127
        %v2629 = vpop.permute.xlu0 %2628
        %2630 = vrot.lane.b32.xlu0 %v2625, 127
        %v2631 = vpop.permute.xlu0 %2630
        %v2634 = vadd.f32 %v2602, %v2629
        %v2635 = vadd.f32 %v2603, %v2631
        %s2636 = sld [smem:[#allocation7 + $0x381]]
        %v2637 = vstv %s2636
        %v2638 = vmul.f32 %v2637, %v764
        %v2639 = vmul.f32 %v2637, %v767
        %2642 = vrot.lane.b32.xlu0 %v2638, 127
        %v2643 = vpop.permute.xlu0 %2642
        %2644 = vrot.lane.b32.xlu0 %v2639, 127
        %v2645 = vpop.permute.xlu0 %2644
        %v2648 = vadd.f32 %v2608, %v2643
        %v2649 = vadd.f32 %v2609, %v2645
        %s2650 = sld [smem:[#allocation7 + $0x581]]
        %v2651 = vstv %s2650
        %v2652 = vmul.f32 %v2651, %v764
        %v2653 = vmul.f32 %v2651, %v767
        %2656 = vrot.lane.b32.xlu0 %v2652, 127
        %v2657 = vpop.permute.xlu0 %2656
        %2658 = vrot.lane.b32.xlu0 %v2653, 127
        %v2659 = vpop.permute.xlu0 %2658
        %v2662 = vadd.f32 %v2614, %v2657
        %v2663 = vadd.f32 %v2615, %v2659
        %s2664 = sld [smem:[#allocation7 + $0x781]]
        %v2665 = vstv %s2664
        %v2666 = vmul.f32 %v2665, %v764
        %v2667 = vmul.f32 %v2665, %v767
        %2670 = vrot.lane.b32.xlu0 %v2666, 127
        %v2671 = vpop.permute.xlu0 %2670
        %2672 = vrot.lane.b32.xlu0 %v2667, 127
        %v2673 = vpop.permute.xlu0 %2672
        %v2676 = vadd.f32 %v2620, %v2671
        %v2677 = vadd.f32 %v2621, %v2673
        %s2678 = sld [smem:[#allocation7 + $0x182]]
        %v2679 = vstv %s2678
        %v2680 = vmul.f32 %v2679, %v764
        %v2681 = vmul.f32 %v2679, %v767
        %2684 = vrot.lane.b32.xlu0 %v2680, 126
        %v2685 = vpop.permute.xlu0 %2684
        %2686 = vrot.lane.b32.xlu0 %v2681, 126
        %v2687 = vpop.permute.xlu0 %2686
        %v2690 = vadd.f32 %v2634, %v2685
        %v2691 = vadd.f32 %v2635, %v2687
        %s2692 = sld [smem:[#allocation7 + $0x382]]
        %v2693 = vstv %s2692
        %v2694 = vmul.f32 %v2693, %v764
        %v2695 = vmul.f32 %v2693, %v767
        %2698 = vrot.lane.b32.xlu0 %v2694, 126
        %v2699 = vpop.permute.xlu0 %2698
        %2700 = vrot.lane.b32.xlu0 %v2695, 126
        %v2701 = vpop.permute.xlu0 %2700
        %v2704 = vadd.f32 %v2648, %v2699
        %v2705 = vadd.f32 %v2649, %v2701
        %s2706 = sld [smem:[#allocation7 + $0x582]]
        %v2707 = vstv %s2706
        %v2708 = vmul.f32 %v2707, %v764
        %v2709 = vmul.f32 %v2707, %v767
        %2712 = vrot.lane.b32.xlu0 %v2708, 126
        %v2713 = vpop.permute.xlu0 %2712
        %2714 = vrot.lane.b32.xlu0 %v2709, 126
        %v2715 = vpop.permute.xlu0 %2714
        %v2718 = vadd.f32 %v2662, %v2713
        %v2719 = vadd.f32 %v2663, %v2715
        %s2720 = sld [smem:[#allocation7 + $0x782]]
        %v2721 = vstv %s2720
        %v2722 = vmul.f32 %v2721, %v764
        %v2723 = vmul.f32 %v2721, %v767
        %2726 = vrot.lane.b32.xlu0 %v2722, 126
        %v2727 = vpop.permute.xlu0 %2726
        %2728 = vrot.lane.b32.xlu0 %v2723, 126
        %v2729 = vpop.permute.xlu0 %2728
        %v2732 = vadd.f32 %v2676, %v2727
        %v2733 = vadd.f32 %v2677, %v2729
        %s2734 = sld [smem:[#allocation7 + $0x183]]
        %v2735 = vstv %s2734
        %v2736 = vmul.f32 %v2735, %v764
        %v2737 = vmul.f32 %v2735, %v767
        %v2738 = vmul.f32 %v2735, %v770
        %v2742 = vrot.slane %v2736, 1
        %v2743 = vrot.slane %v2737, 1
        %v2744 = vsel %vm916, %v2742, %v2743
        %v2745 = vrot.slane %v2738, 1
        %v2746 = vsel %vm916, %v2743, %v2745
        %v2749 = vadd.f32 %v2690, %v2744
        %v2750 = vadd.f32 %v2691, %v2746
        %s2751 = sld [smem:[#allocation7 + $0x383]]
        %v2752 = vstv %s2751
        %v2753 = vmul.f32 %v2752, %v764
        %v2754 = vmul.f32 %v2752, %v767
        %v2755 = vmul.f32 %v2752, %v770
        %v2759 = vrot.slane %v2753, 1
        %v2760 = vrot.slane %v2754, 1
        %v2761 = vsel %vm916, %v2759, %v2760
        %v2762 = vrot.slane %v2755, 1
        %v2763 = vsel %vm916, %v2760, %v2762
        %v2766 = vadd.f32 %v2704, %v2761
        %v2767 = vadd.f32 %v2705, %v2763
        %s2768 = sld [smem:[#allocation7 + $0x583]]
        %v2769 = vstv %s2768
        %v2770 = vmul.f32 %v2769, %v764
        %v2771 = vmul.f32 %v2769, %v767
        %v2772 = vmul.f32 %v2769, %v770
        %v2776 = vrot.slane %v2770, 1
        %v2777 = vrot.slane %v2771, 1
        %v2778 = vsel %vm916, %v2776, %v2777
        %v2779 = vrot.slane %v2772, 1
        %v2780 = vsel %vm916, %v2777, %v2779
        %v2783 = vadd.f32 %v2718, %v2778
        %v2784 = vadd.f32 %v2719, %v2780
        %s2785 = sld [smem:[#allocation7 + $0x783]]
        %v2786 = vstv %s2785
        %v2787 = vmul.f32 %v2786, %v764
        %v2788 = vmul.f32 %v2786, %v767
        %v2789 = vmul.f32 %v2786, %v770
        %v2793 = vrot.slane %v2787, 1
        %v2794 = vrot.slane %v2788, 1
        %v2795 = vsel %vm916, %v2793, %v2794
        %v2796 = vrot.slane %v2789, 1
        %v2797 = vsel %vm916, %v2794, %v2796
        %v2800 = vadd.f32 %v2732, %v2795
        %v2801 = vadd.f32 %v2733, %v2797
        %s2802 = sld [smem:[#allocation7 + $0x184]]
        %v2803 = vstv %s2802
        %v2804 = vmul.f32 %v2803, %v764
        %v2805 = vmul.f32 %v2803, %v767
        %v2806 = vmul.f32 %v2803, %v770
        %v2810 = vrot.slane %v2804, 1
        %v2811 = vrot.slane %v2805, 1
        %v2812 = vsel %vm916, %v2810, %v2811
        %v2813 = vrot.slane %v2806, 1
        %v2814 = vsel %vm916, %v2811, %v2813
        %2815 = vrot.lane.b32.xlu0 %v2812, 127
        %v2816 = vpop.permute.xlu0 %2815
        %2817 = vrot.lane.b32.xlu0 %v2814, 127
        %v2818 = vpop.permute.xlu0 %2817
        %v2821 = vadd.f32 %v2749, %v2816
        %v2822 = vadd.f32 %v2750, %v2818
        %s2823 = sld [smem:[#allocation7 + $0x384]]
        %v2824 = vstv %s2823
        %v2825 = vmul.f32 %v2824, %v764
        %v2826 = vmul.f32 %v2824, %v767
        %v2827 = vmul.f32 %v2824, %v770
        %v2831 = vrot.slane %v2825, 1
        %v2832 = vrot.slane %v2826, 1
        %v2833 = vsel %vm916, %v2831, %v2832
        %v2834 = vrot.slane %v2827, 1
        %v2835 = vsel %vm916, %v2832, %v2834
        %2836 = vrot.lane.b32.xlu0 %v2833, 127
        %v2837 = vpop.permute.xlu0 %2836
        %2838 = vrot.lane.b32.xlu0 %v2835, 127
        %v2839 = vpop.permute.xlu0 %2838
        %v2842 = vadd.f32 %v2766, %v2837
        %v2843 = vadd.f32 %v2767, %v2839
        %s2844 = sld [smem:[#allocation7 + $0x584]]
        %v2845 = vstv %s2844
        %v2846 = vmul.f32 %v2845, %v764
        %v2847 = vmul.f32 %v2845, %v767
        %v2848 = vmul.f32 %v2845, %v770
        %v2852 = vrot.slane %v2846, 1
        %v2853 = vrot.slane %v2847, 1
        %v2854 = vsel %vm916, %v2852, %v2853
        %v2855 = vrot.slane %v2848, 1
        %v2856 = vsel %vm916, %v2853, %v2855
        %2857 = vrot.lane.b32.xlu0 %v2854, 127
        %v2858 = vpop.permute.xlu0 %2857
        %2859 = vrot.lane.b32.xlu0 %v2856, 127
        %v2860 = vpop.permute.xlu0 %2859
        %v2863 = vadd.f32 %v2783, %v2858
        %v2864 = vadd.f32 %v2784, %v2860
        %s2865 = sld [smem:[#allocation7 + $0x784]]
        %v2866 = vstv %s2865
        %v2867 = vmul.f32 %v2866, %v764
        %v2868 = vmul.f32 %v2866, %v767
        %v2869 = vmul.f32 %v2866, %v770
        %v2873 = vrot.slane %v2867, 1
        %v2874 = vrot.slane %v2868, 1
        %v2875 = vsel %vm916, %v2873, %v2874
        %v2876 = vrot.slane %v2869, 1
        %v2877 = vsel %vm916, %v2874, %v2876
        %2878 = vrot.lane.b32.xlu0 %v2875, 127
        %v2879 = vpop.permute.xlu0 %2878
        %2880 = vrot.lane.b32.xlu0 %v2877, 127
        %v2881 = vpop.permute.xlu0 %2880
        %v2884 = vadd.f32 %v2800, %v2879
        %v2885 = vadd.f32 %v2801, %v2881
        %s2886 = sld [smem:[#allocation7 + $0x185]]
        %v2887 = vstv %s2886
        %v2888 = vmul.f32 %v2887, %v764
        %v2889 = vmul.f32 %v2887, %v767
        %v2890 = vmul.f32 %v2887, %v770
        %v2894 = vrot.slane %v2888, 1
        %v2895 = vrot.slane %v2889, 1
        %v2896 = vsel %vm916, %v2894, %v2895
        %v2897 = vrot.slane %v2890, 1
        %v2898 = vsel %vm916, %v2895, %v2897
        %2899 = vrot.lane.b32.xlu0 %v2896, 126
        %v2900 = vpop.permute.xlu0 %2899
        %2901 = vrot.lane.b32.xlu0 %v2898, 126
        %v2902 = vpop.permute.xlu0 %2901
        %v2905 = vadd.f32 %v2821, %v2900
        %v2906 = vadd.f32 %v2822, %v2902
        %s2907 = sld [smem:[#allocation7 + $0x385]]
        %v2908 = vstv %s2907
        %v2909 = vmul.f32 %v2908, %v764
        %v2910 = vmul.f32 %v2908, %v767
        %v2911 = vmul.f32 %v2908, %v770
        %v2915 = vrot.slane %v2909, 1
        %v2916 = vrot.slane %v2910, 1
        %v2917 = vsel %vm916, %v2915, %v2916
        %v2918 = vrot.slane %v2911, 1
        %v2919 = vsel %vm916, %v2916, %v2918
        %2920 = vrot.lane.b32.xlu0 %v2917, 126
        %v2921 = vpop.permute.xlu0 %2920
        %2922 = vrot.lane.b32.xlu0 %v2919, 126
        %v2923 = vpop.permute.xlu0 %2922
        %v2926 = vadd.f32 %v2842, %v2921
        %v2927 = vadd.f32 %v2843, %v2923
        %s2928 = sld [smem:[#allocation7 + $0x585]]
        %v2929 = vstv %s2928
        %v2930 = vmul.f32 %v2929, %v764
        %v2931 = vmul.f32 %v2929, %v767
        %v2932 = vmul.f32 %v2929, %v770
        %v2936 = vrot.slane %v2930, 1
        %v2937 = vrot.slane %v2931, 1
        %v2938 = vsel %vm916, %v2936, %v2937
        %v2939 = vrot.slane %v2932, 1
        %v2940 = vsel %vm916, %v2937, %v2939
        %2941 = vrot.lane.b32.xlu0 %v2938, 126
        %v2942 = vpop.permute.xlu0 %2941
        %2943 = vrot.lane.b32.xlu0 %v2940, 126
        %v2944 = vpop.permute.xlu0 %2943
        %v2947 = vadd.f32 %v2863, %v2942
        %v2948 = vadd.f32 %v2864, %v2944
        %s2949 = sld [smem:[#allocation7 + $0x785]]
        %v2950 = vstv %s2949
        %v2951 = vmul.f32 %v2950, %v764
        %v2952 = vmul.f32 %v2950, %v767
        %v2953 = vmul.f32 %v2950, %v770
        %v2957 = vrot.slane %v2951, 1
        %v2958 = vrot.slane %v2952, 1
        %v2959 = vsel %vm916, %v2957, %v2958
        %v2960 = vrot.slane %v2953, 1
        %v2961 = vsel %vm916, %v2958, %v2960
        %2962 = vrot.lane.b32.xlu0 %v2959, 126
        %v2963 = vpop.permute.xlu0 %2962
        %2964 = vrot.lane.b32.xlu0 %v2961, 126
        %v2965 = vpop.permute.xlu0 %2964
        %v2968 = vadd.f32 %v2884, %v2963
        %v2969 = vadd.f32 %v2885, %v2965
        %s2970 = sld [smem:[#allocation7 + $0x186]]
        %v2971 = vstv %s2970
        %v2972 = vmul.f32 %v2971, %v764
        %v2973 = vmul.f32 %v2971, %v767
        %v2974 = vmul.f32 %v2971, %v770
        %v2978 = vrot.slane %v2972, 2
        %v2979 = vrot.slane %v2973, 2
        %v2980 = vsel %vm1153, %v2978, %v2979
        %v2981 = vrot.slane %v2974, 2
        %v2982 = vsel %vm1153, %v2979, %v2981
        %v2985 = vadd.f32 %v2905, %v2980
        %v2986 = vadd.f32 %v2906, %v2982
        %s2987 = sld [smem:[#allocation7 + $0x386]]
        %v2988 = vstv %s2987
        %v2989 = vmul.f32 %v2988, %v764
        %v2990 = vmul.f32 %v2988, %v767
        %v2991 = vmul.f32 %v2988, %v770
        %v2995 = vrot.slane %v2989, 2
        %v2996 = vrot.slane %v2990, 2
        %v2997 = vsel %vm1153, %v2995, %v2996
        %v2998 = vrot.slane %v2991, 2
        %v2999 = vsel %vm1153, %v2996, %v2998
        %v3002 = vadd.f32 %v2926, %v2997
        %v3003 = vadd.f32 %v2927, %v2999
        %s3004 = sld [smem:[#allocation7 + $0x586]]
        %v3005 = vstv %s3004
        %v3006 = vmul.f32 %v3005, %v764
        %v3007 = vmul.f32 %v3005, %v767
        %v3008 = vmul.f32 %v3005, %v770
        %v3012 = vrot.slane %v3006, 2
        %v3013 = vrot.slane %v3007, 2
        %v3014 = vsel %vm1153, %v3012, %v3013
        %v3015 = vrot.slane %v3008, 2
        %v3016 = vsel %vm1153, %v3013, %v3015
        %v3019 = vadd.f32 %v2947, %v3014
        %v3020 = vadd.f32 %v2948, %v3016
        %s3021 = sld [smem:[#allocation7 + $0x786]]
        %v3022 = vstv %s3021
        %v3023 = vmul.f32 %v3022, %v764
        %v3024 = vmul.f32 %v3022, %v767
        %v3025 = vmul.f32 %v3022, %v770
        %v3029 = vrot.slane %v3023, 2
        %v3030 = vrot.slane %v3024, 2
        %v3031 = vsel %vm1153, %v3029, %v3030
        %v3032 = vrot.slane %v3025, 2
        %v3033 = vsel %vm1153, %v3030, %v3032
        %v3036 = vadd.f32 %v2968, %v3031
        %v3037 = vadd.f32 %v2969, %v3033
        %s3038 = sld [smem:[#allocation7 + $0x187]]
        %v3039 = vstv %s3038
        %v3040 = vmul.f32 %v3039, %v764
        %v3041 = vmul.f32 %v3039, %v767
        %v3042 = vmul.f32 %v3039, %v770
        %v3046 = vrot.slane %v3040, 2
        %v3047 = vrot.slane %v3041, 2
        %v3048 = vsel %vm1153, %v3046, %v3047
        %v3049 = vrot.slane %v3042, 2
        %v3050 = vsel %vm1153, %v3047, %v3049
        %3051 = vrot.lane.b32.xlu0 %v3048, 127
        %v3052 = vpop.permute.xlu0 %3051
        %3053 = vrot.lane.b32.xlu0 %v3050, 127
        %v3054 = vpop.permute.xlu0 %3053
        %v3057 = vadd.f32 %v2985, %v3052
        %v3058 = vadd.f32 %v2986, %v3054
        %s3059 = sld [smem:[#allocation7 + $0x387]]
        %v3060 = vstv %s3059
        %v3061 = vmul.f32 %v3060, %v764
        %v3062 = vmul.f32 %v3060, %v767
        %v3063 = vmul.f32 %v3060, %v770
        %v3067 = vrot.slane %v3061, 2
        %v3068 = vrot.slane %v3062, 2
        %v3069 = vsel %vm1153, %v3067, %v3068
        %v3070 = vrot.slane %v3063, 2
        %v3071 = vsel %vm1153, %v3068, %v3070
        %3072 = vrot.lane.b32.xlu0 %v3069, 127
        %v3073 = vpop.permute.xlu0 %3072
        %3074 = vrot.lane.b32.xlu0 %v3071, 127
        %v3075 = vpop.permute.xlu0 %3074
        %v3078 = vadd.f32 %v3002, %v3073
        %v3079 = vadd.f32 %v3003, %v3075
        %s3080 = sld [smem:[#allocation7 + $0x587]]
        %v3081 = vstv %s3080
        %v3082 = vmul.f32 %v3081, %v764
        %v3083 = vmul.f32 %v3081, %v767
        %v3084 = vmul.f32 %v3081, %v770
        %v3088 = vrot.slane %v3082, 2
        %v3089 = vrot.slane %v3083, 2
        %v3090 = vsel %vm1153, %v3088, %v3089
        %v3091 = vrot.slane %v3084, 2
        %v3092 = vsel %vm1153, %v3089, %v3091
        %3093 = vrot.lane.b32.xlu0 %v3090, 127
        %v3094 = vpop.permute.xlu0 %3093
        %3095 = vrot.lane.b32.xlu0 %v3092, 127
        %v3096 = vpop.permute.xlu0 %3095
        %v3099 = vadd.f32 %v3019, %v3094
        %v3100 = vadd.f32 %v3020, %v3096
        %s3101 = sld [smem:[#allocation7 + $0x787]]
        %v3102 = vstv %s3101
        %v3103 = vmul.f32 %v3102, %v764
        %v3104 = vmul.f32 %v3102, %v767
        %v3105 = vmul.f32 %v3102, %v770
        %v3109 = vrot.slane %v3103, 2
        %v3110 = vrot.slane %v3104, 2
        %v3111 = vsel %vm1153, %v3109, %v3110
        %v3112 = vrot.slane %v3105, 2
        %v3113 = vsel %vm1153, %v3110, %v3112
        %3114 = vrot.lane.b32.xlu0 %v3111, 127
        %v3115 = vpop.permute.xlu0 %3114
        %3116 = vrot.lane.b32.xlu0 %v3113, 127
        %v3117 = vpop.permute.xlu0 %3116
        %v3120 = vadd.f32 %v3036, %v3115
        %v3121 = vadd.f32 %v3037, %v3117
        %s3122 = sld [smem:[#allocation7 + $0x188]]
        %v3123 = vstv %s3122
        %v3124 = vmul.f32 %v3123, %v764
        %v3125 = vmul.f32 %v3123, %v767
        %v3126 = vmul.f32 %v3123, %v770
        %v3130 = vrot.slane %v3124, 2
        %v3131 = vrot.slane %v3125, 2
        %v3132 = vsel %vm1153, %v3130, %v3131
        %v3133 = vrot.slane %v3126, 2
        %v3134 = vsel %vm1153, %v3131, %v3133
        %3135 = vrot.lane.b32.xlu0 %v3132, 126
        %v3136 = vpop.permute.xlu0 %3135
        %3137 = vrot.lane.b32.xlu0 %v3134, 126
        %v3138 = vpop.permute.xlu0 %3137
        %v3141 = vadd.f32 %v3057, %v3136
        %v3142 = vadd.f32 %v3058, %v3138
        %s3143 = sld [smem:[#allocation7 + $0x388]]
        %v3144 = vstv %s3143
        %v3145 = vmul.f32 %v3144, %v764
        %v3146 = vmul.f32 %v3144, %v767
        %v3147 = vmul.f32 %v3144, %v770
        %v3151 = vrot.slane %v3145, 2
        %v3152 = vrot.slane %v3146, 2
        %v3153 = vsel %vm1153, %v3151, %v3152
        %v3154 = vrot.slane %v3147, 2
        %v3155 = vsel %vm1153, %v3152, %v3154
        %3156 = vrot.lane.b32.xlu0 %v3153, 126
        %v3157 = vpop.permute.xlu0 %3156
        %3158 = vrot.lane.b32.xlu0 %v3155, 126
        %v3159 = vpop.permute.xlu0 %3158
        %v3162 = vadd.f32 %v3078, %v3157
        %v3163 = vadd.f32 %v3079, %v3159
        %s3164 = sld [smem:[#allocation7 + $0x588]]
        %v3165 = vstv %s3164
        %v3166 = vmul.f32 %v3165, %v764
        %v3167 = vmul.f32 %v3165, %v767
        %v3168 = vmul.f32 %v3165, %v770
        %v3172 = vrot.slane %v3166, 2
        %v3173 = vrot.slane %v3167, 2
        %v3174 = vsel %vm1153, %v3172, %v3173
        %v3175 = vrot.slane %v3168, 2
        %v3176 = vsel %vm1153, %v3173, %v3175
        %3177 = vrot.lane.b32.xlu0 %v3174, 126
        %v3178 = vpop.permute.xlu0 %3177
        %3179 = vrot.lane.b32.xlu0 %v3176, 126
        %v3180 = vpop.permute.xlu0 %3179
        %v3183 = vadd.f32 %v3099, %v3178
        %v3184 = vadd.f32 %v3100, %v3180
        %s3185 = sld [smem:[#allocation7 + $0x788]]
        %v3186 = vstv %s3185
        %v3187 = vmul.f32 %v3186, %v764
        %v3188 = vmul.f32 %v3186, %v767
        %v3189 = vmul.f32 %v3186, %v770
        %v3193 = vrot.slane %v3187, 2
        %v3194 = vrot.slane %v3188, 2
        %v3195 = vsel %vm1153, %v3193, %v3194
        %v3196 = vrot.slane %v3189, 2
        %v3197 = vsel %vm1153, %v3194, %v3196
        %3198 = vrot.lane.b32.xlu0 %v3195, 126
        %v3199 = vpop.permute.xlu0 %3198
        %3200 = vrot.lane.b32.xlu0 %v3197, 126
        %v3201 = vpop.permute.xlu0 %3200
        %v3204 = vadd.f32 %v3120, %v3199
        %v3205 = vadd.f32 %v3121, %v3201
        %s3206 = sld [smem:[#allocation8]]
        %v3207 = vstv %s3206
        %v3208 = vadd.f32 %v3141, %v3207
        %v3209 = vadd.f32 %v3142, %v3207
        %vm3210 = vcmask 261120
        %3211 = vst.msk [vmem:[%s339] sm:$0xff] %vm3210, %v3208
        %3212 = vst.msk [vmem:[%s339 + $0x8] sm:$0xff] %vm3210, %v3209
        %s3213 = sld [smem:[#allocation8 + $0x1]]
        %v3214 = vstv %s3213
        %v3215 = vadd.f32 %v3162, %v3214
        %v3216 = vadd.f32 %v3163, %v3214
        %s3217 = scalar_lea.vmem %s339, 16 [#allocation10]
        %3218 = vst.msk [vmem:[%s3217] sm:$0xff] %vm3210, %v3215
        %3219 = vst.msk [vmem:[%s3217 + $0x8] sm:$0xff] %vm3210, %v3216
        %s3220 = sld [smem:[#allocation8 + $0x2]]
        %v3221 = vstv %s3220
        %v3222 = vadd.f32 %v3183, %v3221
        %v3223 = vadd.f32 %v3184, %v3221
        %s3224 = scalar_lea.vmem %s339, 32 [#allocation10]
        %3225 = vst.msk [vmem:[%s3224] sm:$0xff] %vm3210, %v3222
        %3226 = vst.msk [vmem:[%s3224 + $0x8] sm:$0xff] %vm3210, %v3223
        %s3227 = sld [smem:[#allocation8 + $0x3]]
        %v3228 = vstv %s3227
        %v3229 = vadd.f32 %v3204, %v3228
        %v3230 = vadd.f32 %v3205, %v3228
        %s3231 = scalar_lea.vmem %s339, 48 [#allocation10]
        %3232 = vst.msk [vmem:[%s3231] sm:$0xff] %vm3210, %v3229
        %3233 = vst.msk [vmem:[%s3231 + $0x8] sm:$0xff] %vm3210, %v3230
        %s3234 = sand.u32 %s198, 1
        %s3235 = scalar_lea.sflag [#allocation3], %s3234
        %s3236 = sand.u32 %s198, 1
        %s3237 = smul.addr %s3236, 64
        %s3238 = scalar_lea.vmem [#allocation10], %s3237
        // Predicated region
        $region65: #{tpu_custom_call.1} parent=47 // pred_check
          %p3239 = pneg %p208
        $region66: #{tpu_custom_call.1} parent=47 // pred_check_branch
          %3241 = sbr.rel (%p3239) target = $region68
        $region67: #{tpu_custom_call.1} parent=47 // pred_region
          #allocation12 [shape = 'u32[6]{0}', space=smem, size = 0x18, scoped, tag = 'DMA stride descriptor']
          %s3242 = smul.u32 2, %s29
          %3244 = vsyncadd %s3235, 0
          %s3245 = smul.addr %s28, 16
          %s3246 = sadd.s32 %s3242, %s3245
          %s3247 = smul.addr %s3246, 8
          %s3248 = scalar_lea.hbm %s7, %s3247
          %s3250 = sshll.u32 1, 14
          %s3251 = sxor.u32 4294967295, %s3250
          %s3254 = sshll.u32 7, 18
          %s3255 = sxor.u32 4294967295, %s3254
          %s3256 = sand.u32 0, %s3255
          %s3258 = sor.u32 %s3256, 0
          %s3259 = sshll.u32 %s3238, 4
          %s3260 = int_to_ptr.vmem [resolvable:$true] %s3259
          %s3261 = sshll.u32 %s3248, 4
          %s3262 = int_to_ptr.hbm [resolvable:$true] %s3261
          %3268 = sst [smem:[#allocation12]] 256
          %s3269 = scalar_lea.smem [#allocation12], 1
          %3270 = sst [smem:[%s3269]] 512
          %s3271 = scalar_lea.smem [#allocation12], 2
          %3272 = sst [smem:[%s3271]] 2
          %s3273 = scalar_lea.smem [#allocation12], 3
          %3274 = sst [smem:[%s3273]] 128
          %s3275 = scalar_lea.smem [#allocation12], 4
          %3276 = sst [smem:[%s3275]] 128
          %s3277 = scalar_lea.smem [#allocation12], 5
          %3278 = sst [smem:[%s3277]] 8
          %3280 = dma.general %s3260, 1024, %s3262, %s3235, [#allocation11], [#allocation12], %s3258, 0
        $region68: #{tpu_custom_call.1} parent=47 // pred_fallthru
          _
      $region48: #{tpu_custom_call.1} parent=5 // pred_fallthru
        _
      %p3281 = scmp.le.s32.totalorder 2, %s19
      // Predicated region
      $region69: #{tpu_custom_call.1} parent=5 // pred_check
        %p3282 = pneg %p3281
      $region70: #{tpu_custom_call.1} parent=5 // pred_check_branch
        %3284 = sbr.rel (%p3282) target = $region72
      $region71: #{tpu_custom_call.1} parent=5 // pred_region
        %s3285 = ssub.s32 %s19, 2
        // Predicated region
        $region73: #{tpu_custom_call.1} parent=71 // pred_check
          %p3286 = pneg %p214
        $region74: #{tpu_custom_call.1} parent=71 // pred_check_branch
          %3288 = sbr.rel (%p3286) target = $region76
        $region75: #{tpu_custom_call.1} parent=71 // pred_region
          %s3289 = sand.u32 %s199, 1
          %s3290 = scalar_lea.sflag [#allocation3], %s3289
          %s3291 = sand.u32 %s199, 1
          %s3292 = smul.addr %s3291, 64
          %s3293 = scalar_lea.vmem [#allocation10], %s3292
          %3295 = dma.done %s3290, 1024
        $region76: #{tpu_custom_call.1} parent=71 // pred_fallthru
          _
      $region72: #{tpu_custom_call.1} parent=5 // pred_fallthru
        _
    $region6: #{tpu_custom_call.1} parent=1 // loop_footer
      %s23 = sadd.s32 1, %s19
    $region7: #{tpu_custom_call.1} parent=1 // loop_footer_branch
      %18 = sbr.rel target = $region3
    $region8: #{tpu_custom_call.1} parent=1 // loop_exit
      _
    %3296 = vsyncpa [#allocation3], 1
    %s3297 = scalar_lea.sflag [#allocation3], 1
    %3298 = vsyncpa %s3297, 1
    %3299 = vsyncpa [#allocation4], 1
    %s3300 = scalar_lea.sflag [#allocation4], 1
    %3301 = vsyncpa %s3300, 1
    %3302 = vsyncpa [#allocation6], 1
    %3303 = vsyncpa [#allocation9], 1

</llo_original>
